<compile_context>
chip_gen: v7x
topology: tpu7x:2x2x1
jax: 0.10.0
libtpu: 0.0.40
codegen_flags: <defaults>
</compile_context>

<pallas_src>
import jax
import jax.numpy as jnp
from jax.experimental import pallas as pl
from jax.experimental.pallas import tpu as pltpu


# Per-core working-set target (fits v7x: 64 MiB physical shared-ish budget, and
# is well under v5e/v6e's 128 MiB).  The scoped-VMEM limit is raised separately.
_VMEM_BUDGET = 24 << 20
_VMEM_LIMIT = 48 << 20   # > 16/32 MiB scoped defaults (v5e/v6e), < 64 MiB (v7x)


def _round_up(n, m):
    return ((n + m - 1) // m) * m


def _vmem_bytes(tb, L, c_in, nf, c_out, K, isz, use_conv3):
    """Conservative per-grid-step VMEM working-set estimate (bytes)."""
    BL = tb * L
    # double-buffered input / output tiles
    slabs = 2 * BL * (c_in * isz + c_out * 4)
    # double-buffered weights (compute dtype) + f32 biases
    w = 2 * (isz * (K * nf * c_in + K * c_out * nf
                    + (c_out * c_in if use_conv3 else 0))
             + 4 * (nf + 2 * c_out))
    # in-kernel live values: x (mm dtype + f32), rolled/masked tap (f32) + its
    # mm-dtype cast, h1 (f32), accumulator / y (f32), residual (f32)
    c_max = max(c_in, nf)
    tmp = BL * (c_in * (isz + 4) + c_max * (8 + isz) + nf * 4 + 2 * c_out * 4)
    return slabs + w + tmp


def _pick_batch_tile(B, L, c_in, nf, c_out, K, isz, use_conv3, vmem_budget):
    """Pick TB (divisor of B) maximising lane density within the VMEM budget."""
    cands = [tb for tb in range(1, B + 1)
             if B % tb == 0
             and _vmem_bytes(tb, L, c_in, nf, c_out, K, isz, use_conv3) <= vmem_budget]
    if not cands:
        cands = [1]

    def score(tb):
        bl = tb * L
        lane_align = (bl % 128 == 0) + (bl % 256 == 0)   # unmasked vst / MXU-N fill
        two_steps = int(B // tb >= 2 and bl >= 512)      # keep v7x's 2nd TC busy
        return (lane_align, two_steps, bl)

    return max(cands, key=score)


def _make_kernel(K, dilation, L, TB, apply_relu2, use_conv3, mm_dtype, mm_precision):
    BL = TB * L

    def kernel(*refs):
        if use_conv3:
            x_ref, w1_ref, b1_ref, w2_ref, b2_ref, w3_ref, b3_ref, o_ref = refs
        else:
            x_ref, w1_ref, b1_ref, w2_ref, b2_ref, o_ref = refs

        # Within-sequence time index for every lane column of the (C, TB*L) slab.
        t = jax.lax.broadcasted_iota(jnp.int32, (1, BL), 1) % L

        def causal_conv(slab_f32, w_ref):
            # slab_f32: (C, TB*L) f32 value.  w_ref: (K, C_out, C) tap-indexed.
            # Tap k has causal lag s = (K-1-k)*dilation; its contribution at lane
            # column i reads slab[:, i - s].  The lag is an XLU lane rotation
            # (pltpu.roll); the mask zeroes reads that would cross a sequence
            # start (including the roll's wrap-around), so no left-padding or
            # scratch staging is needed.  Per-tap matmuls accumulate in f32.
            acc = None
            for k in range(K):
                s = (K - 1 - k) * dilation
                v = slab_f32
                if s > 0:
                    v = pltpu.roll(slab_f32, s, 1)          # XLU lane rotation
                    v = jnp.where(t >= s, v, 0.0)           # causal / wrap mask
                p = jnp.dot(w_ref[k], v.astype(mm_dtype),
                            precision=mm_precision,
                            preferred_element_type=jnp.float32)
                acc = p if acc is None else acc + p
            return acc

        x_in = x_ref[...]                        # (C_in_p, BL) compute dtype
        x32 = x_in.astype(jnp.float32)

        # ---- conv1 (dilated, causal) + ReLU ---------------------------------
        # TODO(synk): dropout_fn treated as identity here.
        h1 = jnp.maximum(causal_conv(x32, w1_ref) + b1_ref[...], 0.0)

        # ---- conv2 (dilated, causal) (+ ReLU except on the last block) ------
        y = causal_conv(h1, w2_ref) + b2_ref[...]
        if apply_relu2:
            y = jnp.maximum(y, 0.0)

        # ---- residual path (optional 1x1 conv) ------------------------------
        if use_conv3:
            res = jnp.dot(w3_ref[...], x_in, precision=mm_precision,
                          preferred_element_type=jnp.float32) + b3_ref[...]
        else:
            res = x32
        o_ref[...] = (y + res).astype(o_ref.dtype)

    return kernel


def residual_block_forward(x, params, cfg, compute_dtype=jnp.bfloat16,
                           vmem_budget_bytes=_VMEM_BUDGET):
    B, C_in, L = x.shape
    K = cfg["kernel_size"]
    dilation = cfg["dilation_base"] ** cfg["nr_blocks_below"]
    nf = cfg["num_filters"]
    out_dim = params["w2"].shape[0]
    use_conv3 = (C_in != out_dim)
    apply_relu2 = cfg["nr_blocks_below"] < cfg["num_layers"] - 1

    mm_precision = (jax.lax.Precision.HIGHEST
                    if compute_dtype == jnp.float32 else None)
    isz = jnp.dtype(compute_dtype).itemsize

    # Pad channel dims to sublane multiples so operands / stores are unmasked.
    sub = 16 if isz == 2 else 8
    c_in_p = _round_up(C_in, sub)
    nf_p = _round_up(nf, sub)
    out_p = _round_up(out_dim, sub)

    TB = _pick_batch_tile(B, L, c_in_p, nf_p, out_p, K, isz, use_conv3,
                          vmem_budget_bytes)
    n_tiles = B // TB
    BL = TB * L

    # ---- lane-dense slab: (B, C, L) -> (n_tiles, C_pad, TB*L) ----------------
    # NOTE: for stacked TCN blocks, keep data in this slab layout between blocks
    # and do this pack / the final unpack once for the whole network.
    x_slab = x.transpose(1, 0, 2).reshape(C_in, n_tiles, BL).transpose(1, 0, 2)
    x_slab = jnp.pad(x_slab, ((0, 0), (0, c_in_p - C_in), (0, 0)))
    x_slab = x_slab.astype(compute_dtype)

    # Conv weights (C_out, C_in, K) -> tap-indexed (K, C_out_pad, C_in_pad).
    def prep_w(w, co, ci):
        w = jnp.transpose(w, (2, 0, 1))
        w = jnp.pad(w, ((0, 0), (0, co - w.shape[1]), (0, ci - w.shape[2])))
        return w.astype(compute_dtype)

    def prep_b(b, co):
        return jnp.pad(b, (0, co - b.shape[0])).reshape(co, 1).astype(jnp.float32)

    w1 = prep_w(params["w1"], nf_p, c_in_p)
    w2 = prep_w(params["w2"], out_p, nf_p)
    b1 = prep_b(params["b1"], nf_p)
    b2 = prep_b(params["b2"], out_p)

    operands = [x_slab, w1, b1, w2, b2]
    in_specs = [
        pl.BlockSpec((pl.Squeezed(), c_in_p, BL), lambda i: (i, 0, 0)),
        pl.BlockSpec((K, nf_p, c_in_p), lambda i: (0, 0, 0)),
        pl.BlockSpec((nf_p, 1), lambda i: (0, 0)),
        pl.BlockSpec((K, out_p, nf_p), lambda i: (0, 0, 0)),
        pl.BlockSpec((out_p, 1), lambda i: (0, 0)),
    ]
    if use_conv3:
        w3 = jnp.pad(params["w3"][:, :, 0],
                     ((0, out_p - out_dim), (0, c_in_p - C_in))).astype(compute_dtype)
        operands += [w3, prep_b(params["b3"], out_p)]
        in_specs += [pl.BlockSpec((out_p, c_in_p), lambda i: (0, 0)),
                     pl.BlockSpec((out_p, 1), lambda i: (0, 0))]

    flops = 2 * B * L * (K * c_in_p * nf_p + K * nf_p * out_p
                         + (c_in_p * out_p if use_conv3 else 0))
    bytes_accessed = (isz * B * c_in_p * L + 4 * B * out_p * L
                      + isz * (K * nf_p * c_in_p + K * out_p * nf_p
                               + (out_p * c_in_p if use_conv3 else 0))
                      + 4 * (nf_p + 2 * out_p))

    kernel = _make_kernel(K, dilation, L, TB, apply_relu2, use_conv3,
                          compute_dtype, mm_precision)

    out = pl.pallas_call(
        kernel,
        out_shape=jax.ShapeDtypeStruct((n_tiles, out_p, BL), jnp.float32),
        grid_spec=pltpu.PrefetchScalarGridSpec(
            num_scalar_prefetch=0,
            grid=(n_tiles,),
            in_specs=in_specs,
            out_specs=pl.BlockSpec((pl.Squeezed(), out_p, BL),
                                   lambda i: (i, 0, 0)),
        ),
        compiler_params=pltpu.CompilerParams(
            dimension_semantics=("parallel",),
            vmem_limit_bytes=_VMEM_LIMIT),
        cost_estimate=pl.CostEstimate(flops=flops, transcendentals=0,
                                      bytes_accessed=bytes_accessed),
    )(*operands)

    # (n_tiles, out_pad, TB*L) -> (B, out_dim, L)
    return (out[:, :out_dim, :]
            .reshape(n_tiles, out_dim, TB, L)
            .transpose(0, 2, 1, 3)
            .reshape(B, out_dim, L))


def _ref_forward(x, params, cfg):
    """Pure-JAX reference mirroring the PyTorch forward (f32, HIGHEST)."""
    dilation = cfg["dilation_base"] ** cfg["nr_blocks_below"]
    K = cfg["kernel_size"]
    lp = dilation * (K - 1)

    def conv1d(inp, w, b, dil):
        out = jax.lax.conv_general_dilated(
            inp, w, window_strides=(1,), padding=[(0, 0)],
            rhs_dilation=(dil,), dimension_numbers=("NCH", "OIH", "NCH"),
            precision=jax.lax.Precision.HIGHEST)
        return out + b[None, :, None]

    residual = x
    h = jnp.pad(x, ((0, 0), (0, 0), (lp, 0)))
    h = jax.nn.relu(conv1d(h, params["w1"], params["b1"], dilation))
    h = jnp.pad(h, ((0, 0), (0, 0), (lp, 0)))
    h = conv1d(h, params["w2"], params["b2"], dilation)
    if cfg["nr_blocks_below"] < cfg["num_layers"] - 1:
        h = jax.nn.relu(h)
    out_dim = params["w2"].shape[0]
    if x.shape[1] != out_dim:
        residual = conv1d(x, params["w3"], params["b3"], 1)
    return h + residual


if __name__ == "__main__":
    B, L = 8, 16   # 8 * 16 = 128 lanes per tile -> lane-dense, unmasked stores

    def make_case(cfg, key):
        input_dim = (cfg["input_size"] if cfg["nr_blocks_below"] == 0
                     else cfg["num_filters"])
        output_dim = (cfg["target_size"]
                      if cfg["nr_blocks_below"] == cfg["num_layers"] - 1
                      else cfg["num_filters"])
        K, nf = cfg["kernel_size"], cfg["num_filters"]
        ks = jax.random.split(key, 7)
        params = {
            "w1": 0.1 * jax.random.normal(ks[0], (nf, input_dim, K), jnp.float32),
            "b1": 0.1 * jax.random.normal(ks[1], (nf,), jnp.float32),
            "w2": 0.1 * jax.random.normal(ks[2], (output_dim, nf, K), jnp.float32),
            "b2": 0.1 * jax.random.normal(ks[3], (output_dim,), jnp.float32),
            "w3": 0.1 * jax.random.normal(ks[4], (output_dim, input_dim, 1), jnp.float32),
            "b3": 0.1 * jax.random.normal(ks[5], (output_dim,), jnp.float32),
        }
        x = jax.random.normal(ks[6], (B, input_dim, L), jnp.float32)
        return x, params, output_dim

    key = jax.random.PRNGKey(0)
    k_a, k_b = jax.random.split(key)

    # Case A: last block of a 2-layer TCN (1x1 residual conv, no second ReLU).
    cfg_a = dict(num_filters=8, kernel_size=3, dilation_base=2,
                 nr_blocks_below=1, num_layers=2, input_size=5, target_size=3)
    # Case B: middle block of a 3-layer TCN (identity residual, second ReLU on).
    cfg_b = dict(num_filters=8, kernel_size=3, dilation_base=2,
                 nr_blocks_below=1, num_layers=3, input_size=5, target_size=3)

    for cfg, k in ((cfg_a, k_a), (cfg_b, k_b)):
        x, params, output_dim = make_case(cfg, k)
        ref = _ref_forward(x, params, cfg)

        # f32 validation path (HIGHEST-precision matmuls): tight tolerance.
        out32 = jax.block_until_ready(
            residual_block_forward(x, params, cfg, compute_dtype=jnp.float32))
        assert out32.shape == (B, output_dim, L), out32.shape
        err32 = float(jnp.max(jnp.abs(out32 - ref)))
        assert err32 < 1e-4, err32

        # Default perf path: bf16 matmul operands, f32 accumulation.
        # Tolerance reflects ~2^-8 bf16 input/weight rounding through two convs
        # plus the residual add.
        out16 = jax.block_until_ready(residual_block_forward(x, params, cfg))
        assert out16.shape == (B, output_dim, L), out16.shape
        err16 = float(jnp.max(jnp.abs(out16 - ref)))
        assert err16 < 8e-2, err16

    print("KERNEL_OK")
</pallas_src>

<mosaic_0001>
module attributes {stable_mosaic.version = 11 : i64} {
  func.func @kernel(%arg0: i32, %arg1: memref<1x8x128xf32, #tpu.memory_space<vmem>>, %arg2: memref<3x8x8xf32, #tpu.memory_space<vmem>>, %arg3: memref<8x1xf32, #tpu.memory_space<vmem>>, %arg4: memref<3x8x8xf32, #tpu.memory_space<vmem>>, %arg5: memref<8x1xf32, #tpu.memory_space<vmem>>, %arg6: memref<8x8xf32, #tpu.memory_space<vmem>>, %arg7: memref<8x1xf32, #tpu.memory_space<vmem>>, %arg8: memref<1x8x128xf32, #tpu.memory_space<vmem>>) attributes {dimension_semantics = [#tpu.dimension_semantics<parallel>], iteration_bounds = array<i64: 1>, scalar_prefetch = 0 : i64, scratch_operands = 0 : i64, tpu.core_type = #tpu.core_type<tc>, window_params = [{transform_indices = @transform_0, window_bounds = array<i64: 1, 8, 128>}, {pipeline_mode = #tpu.pipeline_mode<synchronous>, transform_indices = @transform_1, window_bounds = array<i64: 3, 8, 8>}, {pipeline_mode = #tpu.pipeline_mode<synchronous>, transform_indices = @transform_2, window_bounds = array<i64: 8, 1>}, {pipeline_mode = #tpu.pipeline_mode<synchronous>, transform_indices = @transform_3, window_bounds = array<i64: 3, 8, 8>}, {pipeline_mode = #tpu.pipeline_mode<synchronous>, transform_indices = @transform_4, window_bounds = array<i64: 8, 1>}, {pipeline_mode = #tpu.pipeline_mode<synchronous>, transform_indices = @transform_5, window_bounds = array<i64: 8, 8>}, {pipeline_mode = #tpu.pipeline_mode<synchronous>, transform_indices = @transform_6, window_bounds = array<i64: 8, 1>}, {transform_indices = @transform_7, window_bounds = array<i64: 1, 8, 128>}]} {
    %0 = tpu.iota {dimensions = array<i32: 1>} : vector<1x128xi32>
    %c16_i32 = arith.constant 16 : i32
    %c0_i32 = arith.constant 0 : i32
    %1 = arith.cmpi eq, %c16_i32, %c0_i32 : i32
    %c1_i32 = arith.constant 1 : i32
    %2 = arith.select %1, %c1_i32, %c16_i32 : i32
    %3 = vector.broadcast %2 : i32 to vector<1x128xi32>
    %4 = arith.remsi %0, %3 : vector<1x128xi32>
    %c0_i32_0 = arith.constant 0 : i32
    %5 = vector.broadcast %c0_i32_0 : i32 to vector<1x128xi32>
    %6 = arith.cmpi ne, %4, %5 : vector<1x128xi32>
    %c0_i32_1 = arith.constant 0 : i32
    %7 = vector.broadcast %c0_i32_1 : i32 to vector<1x128xi32>
    %8 = arith.cmpi slt, %4, %7 : vector<1x128xi32>
    %c0_i32_2 = arith.constant 0 : i32
    %9 = arith.cmpi slt, %2, %c0_i32_2 : i32
    %10 = vector.broadcast %9 : i1 to vector<1x128xi1>
    %11 = vector.broadcast %10 : vector<1x128xi1> to vector<1x128xi1>
    %12 = arith.xori %8, %11 : vector<1x128xi1>
    %13 = arith.andi %12, %6 : vector<1x128xi1>
    %14 = vector.broadcast %2 : i32 to vector<1x128xi32>
    %15 = arith.addi %4, %14 : vector<1x128xi32>
    %16 = arith.select %13, %15, %4 : vector<1x128xi1>, vector<1x128xi32>
    %c0 = arith.constant 0 : index
    %c0_3 = arith.constant 0 : index
    %c0_4 = arith.constant 0 : index
    %17 = vector.load %arg1[%c0, %c0_3, %c0_4] : memref<1x8x128xf32, #tpu.memory_space<vmem>>, vector<1x8x128xf32>
    %18 = vector.shape_cast %17 : vector<1x8x128xf32> to vector<8x128xf32>
    %c4_i32 = arith.constant 4 : i32
    %19 = tpu.dynamic_rotate %18 by %c4_i32 dim 1 : vector<8x128xf32>, i32 -> vector<8x128xf32>
    %c4_i32_5 = arith.constant 4 : i32
    %20 = vector.broadcast %c4_i32_5 : i32 to vector<1x128xi32>
    %21 = arith.cmpi sge, %16, %20 : vector<1x128xi32>
    %cst = arith.constant 0.000000e+00 : f32
    %22 = vector.shape_cast %21 : vector<1x128xi1> to vector<1x128xi1>
    %23 = vector.broadcast %22 : vector<1x128xi1> to vector<8x128xi1>
    %24 = vector.broadcast %cst : f32 to vector<8x128xf32>
    %25 = arith.select %23, %19, %24 : vector<8x128xi1>, vector<8x128xf32>
    %c0_6 = arith.constant 0 : index
    %c0_7 = arith.constant 0 : index
    %c0_8 = arith.constant 0 : index
    %26 = vector.load %arg2[%c0_6, %c0_7, %c0_8] : memref<3x8x8xf32, #tpu.memory_space<vmem>>, vector<1x8x8xf32>
    %27 = vector.shape_cast %26 : vector<1x8x8xf32> to vector<8x8xf32>
    %cst_9 = arith.constant dense<0.000000e+00> : vector<8x128xf32>
    %28 = tpu.matmul %27, %25, %cst_9 {dimension_numbers = #tpu.dot_dimension_numbers<[1], [0], [0], [1], [0, 0, 1, 1], [], []>, precision = #tpu.contract_precision<fp32>} : vector<8x8xf32>, vector<8x128xf32>, vector<8x128xf32> -> vector<8x128xf32>
    %c2_i32 = arith.constant 2 : i32
    %29 = tpu.dynamic_rotate %18 by %c2_i32 dim 1 : vector<8x128xf32>, i32 -> vector<8x128xf32>
    %c2_i32_10 = arith.constant 2 : i32
    %30 = vector.broadcast %c2_i32_10 : i32 to vector<1x128xi32>
    %31 = arith.cmpi sge, %16, %30 : vector<1x128xi32>
    %cst_11 = arith.constant 0.000000e+00 : f32
    %32 = vector.shape_cast %31 : vector<1x128xi1> to vector<1x128xi1>
    %33 = vector.broadcast %32 : vector<1x128xi1> to vector<8x128xi1>
    %34 = vector.broadcast %cst_11 : f32 to vector<8x128xf32>
    %35 = arith.select %33, %29, %34 : vector<8x128xi1>, vector<8x128xf32>
    %c1 = arith.constant 1 : index
    %c0_12 = arith.constant 0 : index
    %c0_13 = arith.constant 0 : index
    %36 = vector.load %arg2[%c1, %c0_12, %c0_13] : memref<3x8x8xf32, #tpu.memory_space<vmem>>, vector<1x8x8xf32>
    %37 = vector.shape_cast %36 : vector<1x8x8xf32> to vector<8x8xf32>
    %cst_14 = arith.constant dense<0.000000e+00> : vector<8x128xf32>
    %38 = tpu.matmul %37, %35, %cst_14 {dimension_numbers = #tpu.dot_dimension_numbers<[1], [0], [0], [1], [0, 0, 1, 1], [], []>, precision = #tpu.contract_precision<fp32>} : vector<8x8xf32>, vector<8x128xf32>, vector<8x128xf32> -> vector<8x128xf32>
    %39 = arith.addf %28, %38 : vector<8x128xf32>
    %c2 = arith.constant 2 : index
    %c0_15 = arith.constant 0 : index
    %c0_16 = arith.constant 0 : index
    %40 = vector.load %arg2[%c2, %c0_15, %c0_16] : memref<3x8x8xf32, #tpu.memory_space<vmem>>, vector<1x8x8xf32>
    %41 = vector.shape_cast %40 : vector<1x8x8xf32> to vector<8x8xf32>
    %cst_17 = arith.constant dense<0.000000e+00> : vector<8x128xf32>
    %42 = tpu.matmul %41, %18, %cst_17 {dimension_numbers = #tpu.dot_dimension_numbers<[1], [0], [0], [1], [0, 0, 1, 1], [], []>, precision = #tpu.contract_precision<fp32>} : vector<8x8xf32>, vector<8x128xf32>, vector<8x128xf32> -> vector<8x128xf32>
    %43 = arith.addf %39, %42 : vector<8x128xf32>
    %c0_18 = arith.constant 0 : index
    %c0_19 = arith.constant 0 : index
    %44 = vector.load %arg3[%c0_18, %c0_19] : memref<8x1xf32, #tpu.memory_space<vmem>>, vector<8x1xf32>
    %45 = vector.broadcast %44 : vector<8x1xf32> to vector<8x128xf32>
    %46 = arith.addf %43, %45 : vector<8x128xf32>
    %cst_20 = arith.constant 0.000000e+00 : f32
    %47 = vector.broadcast %cst_20 : f32 to vector<8x128xf32>
    %48 = arith.maximumf %46, %47 : vector<8x128xf32>
    %c4_i32_21 = arith.constant 4 : i32
    %49 = tpu.dynamic_rotate %48 by %c4_i32_21 dim 1 : vector<8x128xf32>, i32 -> vector<8x128xf32>
    %c4_i32_22 = arith.constant 4 : i32
    %50 = vector.broadcast %c4_i32_22 : i32 to vector<1x128xi32>
    %51 = arith.cmpi sge, %16, %50 : vector<1x128xi32>
    %cst_23 = arith.constant 0.000000e+00 : f32
    %52 = vector.shape_cast %51 : vector<1x128xi1> to vector<1x128xi1>
    %53 = vector.broadcast %52 : vector<1x128xi1> to vector<8x128xi1>
    %54 = vector.broadcast %cst_23 : f32 to vector<8x128xf32>
    %55 = arith.select %53, %49, %54 : vector<8x128xi1>, vector<8x128xf32>
    %c0_24 = arith.constant 0 : index
    %c0_25 = arith.constant 0 : index
    %c0_26 = arith.constant 0 : index
    %56 = vector.load %arg4[%c0_24, %c0_25, %c0_26] : memref<3x8x8xf32, #tpu.memory_space<vmem>>, vector<1x8x8xf32>
    %57 = vector.shape_cast %56 : vector<1x8x8xf32> to vector<8x8xf32>
    %cst_27 = arith.constant dense<0.000000e+00> : vector<8x128xf32>
    %58 = tpu.matmul %57, %55, %cst_27 {dimension_numbers = #tpu.dot_dimension_numbers<[1], [0], [0], [1], [0, 0, 1, 1], [], []>, precision = #tpu.contract_precision<fp32>} : vector<8x8xf32>, vector<8x128xf32>, vector<8x128xf32> -> vector<8x128xf32>
    %c2_i32_28 = arith.constant 2 : i32
    %59 = tpu.dynamic_rotate %48 by %c2_i32_28 dim 1 : vector<8x128xf32>, i32 -> vector<8x128xf32>
    %c2_i32_29 = arith.constant 2 : i32
    %60 = vector.broadcast %c2_i32_29 : i32 to vector<1x128xi32>
    %61 = arith.cmpi sge, %16, %60 : vector<1x128xi32>
    %cst_30 = arith.constant 0.000000e+00 : f32
    %62 = vector.shape_cast %61 : vector<1x128xi1> to vector<1x128xi1>
    %63 = vector.broadcast %62 : vector<1x128xi1> to vector<8x128xi1>
    %64 = vector.broadcast %cst_30 : f32 to vector<8x128xf32>
    %65 = arith.select %63, %59, %64 : vector<8x128xi1>, vector<8x128xf32>
    %c1_31 = arith.constant 1 : index
    %c0_32 = arith.constant 0 : index
    %c0_33 = arith.constant 0 : index
    %66 = vector.load %arg4[%c1_31, %c0_32, %c0_33] : memref<3x8x8xf32, #tpu.memory_space<vmem>>, vector<1x8x8xf32>
    %67 = vector.shape_cast %66 : vector<1x8x8xf32> to vector<8x8xf32>
    %cst_34 = arith.constant dense<0.000000e+00> : vector<8x128xf32>
    %68 = tpu.matmul %67, %65, %cst_34 {dimension_numbers = #tpu.dot_dimension_numbers<[1], [0], [0], [1], [0, 0, 1, 1], [], []>, precision = #tpu.contract_precision<fp32>} : vector<8x8xf32>, vector<8x128xf32>, vector<8x128xf32> -> vector<8x128xf32>
    %69 = arith.addf %58, %68 : vector<8x128xf32>
    %c2_35 = arith.constant 2 : index
    %c0_36 = arith.constant 0 : index
    %c0_37 = arith.constant 0 : index
    %70 = vector.load %arg4[%c2_35, %c0_36, %c0_37] : memref<3x8x8xf32, #tpu.memory_space<vmem>>, vector<1x8x8xf32>
    %71 = vector.shape_cast %70 : vector<1x8x8xf32> to vector<8x8xf32>
    %cst_38 = arith.constant dense<0.000000e+00> : vector<8x128xf32>
    %72 = tpu.matmul %71, %48, %cst_38 {dimension_numbers = #tpu.dot_dimension_numbers<[1], [0], [0], [1], [0, 0, 1, 1], [], []>, precision = #tpu.contract_precision<fp32>} : vector<8x8xf32>, vector<8x128xf32>, vector<8x128xf32> -> vector<8x128xf32>
    %73 = arith.addf %69, %72 : vector<8x128xf32>
    %c0_39 = arith.constant 0 : index
    %c0_40 = arith.constant 0 : index
    %74 = vector.load %arg5[%c0_39, %c0_40] : memref<8x1xf32, #tpu.memory_space<vmem>>, vector<8x1xf32>
    %75 = vector.broadcast %74 : vector<8x1xf32> to vector<8x128xf32>
    %76 = arith.addf %73, %75 : vector<8x128xf32>
    %c0_41 = arith.constant 0 : index
    %c0_42 = arith.constant 0 : index
    %77 = vector.load %arg6[%c0_41, %c0_42] : memref<8x8xf32, #tpu.memory_space<vmem>>, vector<8x8xf32>
    %cst_43 = arith.constant dense<0.000000e+00> : vector<8x128xf32>
    %78 = tpu.matmul %77, %18, %cst_43 {dimension_numbers = #tpu.dot_dimension_numbers<[1], [0], [0], [1], [0, 0, 1, 1], [], []>, precision = #tpu.contract_precision<fp32>} : vector<8x8xf32>, vector<8x128xf32>, vector<8x128xf32> -> vector<8x128xf32>
    %c0_44 = arith.constant 0 : index
    %c0_45 = arith.constant 0 : index
    %79 = vector.load %arg7[%c0_44, %c0_45] : memref<8x1xf32, #tpu.memory_space<vmem>>, vector<8x1xf32>
    %80 = vector.broadcast %79 : vector<8x1xf32> to vector<8x128xf32>
    %81 = arith.addf %78, %80 : vector<8x128xf32>
    %82 = arith.addf %76, %81 : vector<8x128xf32>
    %c0_46 = arith.constant 0 : index
    %c0_47 = arith.constant 0 : index
    %c0_48 = arith.constant 0 : index
    %83 = vector.load %arg8[%c0_46, %c0_47, %c0_48] : memref<1x8x128xf32, #tpu.memory_space<vmem>>, vector<1x8x128xf32>
    %84 = vector.shape_cast %83 : vector<1x8x128xf32> to vector<8x128xf32>
    %85 = vector.shape_cast %82 : vector<8x128xf32> to vector<1x8x128xf32>
    tpu.vector_store %arg8[%c0_46, %c0_47, %c0_48], %85 {strides = array<i32>} : memref<1x8x128xf32, #tpu.memory_space<vmem>>, vector<1x8x128xf32>,
    return
  }
  func.func @transform_0(%arg0: i32) -> (i32, i32, i32) {
    %c0_i32 = arith.constant 0 : i32
    %c0_i32_0 = arith.constant 0 : i32
    %c0_i32_1 = arith.constant 0 : i32
    return %arg0, %c0_i32, %c0_i32_0 : i32, i32, i32
  }
  func.func @transform_1(%arg0: i32) -> (i32, i32, i32) {
    %c0_i32 = arith.constant 0 : i32
    %c0_i32_0 = arith.constant 0 : i32
    %c0_i32_1 = arith.constant 0 : i32
    %c0_i32_2 = arith.constant 0 : i32
    return %c0_i32, %c0_i32_0, %c0_i32_1 : i32, i32, i32
  }
  func.func @transform_2(%arg0: i32) -> (i32, i32) {
    %c0_i32 = arith.constant 0 : i32
    %c0_i32_0 = arith.constant 0 : i32
    %c0_i32_1 = arith.constant 0 : i32
    return %c0_i32, %c0_i32_0 : i32, i32
  }
  func.func @transform_3(%arg0: i32) -> (i32, i32, i32) {
    %c0_i32 = arith.constant 0 : i32
    %c0_i32_0 = arith.constant 0 : i32
    %c0_i32_1 = arith.constant 0 : i32
    %c0_i32_2 = arith.constant 0 : i32
    return %c0_i32, %c0_i32_0, %c0_i32_1 : i32, i32, i32
  }
  func.func @transform_4(%arg0: i32) -> (i32, i32) {
    %c0_i32 = arith.constant 0 : i32
    %c0_i32_0 = arith.constant 0 : i32
    %c0_i32_1 = arith.constant 0 : i32
    return %c0_i32, %c0_i32_0 : i32, i32
  }
  func.func @transform_5(%arg0: i32) -> (i32, i32) {
    %c0_i32 = arith.constant 0 : i32
    %c0_i32_0 = arith.constant 0 : i32
    %c0_i32_1 = arith.constant 0 : i32
    return %c0_i32, %c0_i32_0 : i32, i32
  }
  func.func @transform_6(%arg0: i32) -> (i32, i32) {
    %c0_i32 = arith.constant 0 : i32
    %c0_i32_0 = arith.constant 0 : i32
    %c0_i32_1 = arith.constant 0 : i32
    return %c0_i32, %c0_i32_0 : i32, i32
  }
  func.func @transform_7(%arg0: i32) -> (i32, i32, i32) {
    %c0_i32 = arith.constant 0 : i32
    %c0_i32_0 = arith.constant 0 : i32
    %c0_i32_1 = arith.constant 0 : i32
    return %arg0, %c0_i32, %c0_i32_0 : i32, i32, i32
  }
}

</mosaic_0001>

<llo_original>
// kernel: tpu_custom_call.1
$region0: #{tpu_custom_call.1}
  #allocation0 [shape = 'u32[]', space=smem, size = 0x4, offset = 0x4, fixed_abs, tag = 'smem constant byte address 0x4 - core index']
  #allocation1 [shape = 'u32[144,128]{1,0:T(1,128)}', space=vmem, size = 0x12000, scoped, tag = 'internal scratch']
  %s0 = inlined_call_operand.hbm [shape: f32[1,8,128], index: 0, kind: input, shape index: {}]
  %s1 = inlined_call_operand.vmem [shape: f32[3,8,8], index: 1, kind: input, shape index: {}]
  %s2 = inlined_call_operand.vmem [shape: f32[8,1], index: 2, kind: input, shape index: {}]
  %s3 = inlined_call_operand.hbm [shape: f32[3,8,8], index: 3, kind: input, shape index: {}]
  %s4 = inlined_call_operand.vmem [shape: f32[8,1], index: 4, kind: input, shape index: {}]
  %s5 = inlined_call_operand.vmem [shape: f32[8,8], index: 5, kind: input, shape index: {}]
  %s6 = inlined_call_operand.vmem [shape: f32[8,1], index: 6, kind: input, shape index: {}]
  %s7 = inlined_call_operand.hbm [shape: f32[1,8,128], index: 7, kind: output, shape index: {}]
  %s8 = sld [smem:[#allocation0]]
  $region46: #{tpu_custom_call.1} parent=0
    _
  %s10 = ssub.s32 1, %s8
  %s11 = scalar_select 0, %s10, %s8
  $region1: #{tpu_custom_call.1} parent=0
    #allocation2 [shape = 'u8[4096]{0}', space=vmem, size = 0x1000, scoped, tag = 'input window, operand 0, single buffered']
    #allocation3 [shape = 's32[1]{0}', space=sflag, size = 0x4, scoped, tag = 'scoped memory for tpu_custom_call.1']
    #allocation4 [shape = 's32[1]{0}', space=sflag, size = 0x4, scoped, tag = 'scoped memory for tpu_custom_call.1']
    #allocation5 [shape = 'u8[12288]{0}', space=vmem, size = 0x3000, scoped, tag = 'input window, operand 3, single buffered']
    #allocation6 [shape = 's32[1]{0}', space=sflag, size = 0x4, scoped, tag = 'scoped memory for tpu_custom_call.1']
    #allocation7 [shape = 'u8[4096]{0}', space=vmem, size = 0x1000, scoped, tag = 'output window, operand 0, single buffered']
    %12 = vsyncpa [#allocation3], 0
    %13 = vsyncpa [#allocation6], 0
    %14 = vsyncpa [#allocation4], 0
    // Predicated region
    $region2: #{tpu_custom_call.1} parent=1 // pred_check
      _
    $region3: #{tpu_custom_call.1} parent=1 // pred_check_branch
      %16 = sbr.rel (0) target = $region5
    $region4: #{tpu_custom_call.1} parent=1 // pred_region
      %s18 = ssub.s32 128, 128
      %19 = vsyncadd [#allocation3], %s18
      %s21 = sshll.u32 [#allocation2], 4
      %s22 = int_to_ptr.vmem [resolvable:$true] %s21
      %24 = dma.hbm_to_vmem [thread:$0]  %s0, 128, %s22, [#allocation3]
    $region5: #{tpu_custom_call.1} parent=1 // pred_fallthru
      _
    // Predicated region
    $region6: #{tpu_custom_call.1} parent=1 // pred_check
      _
    $region7: #{tpu_custom_call.1} parent=1 // pred_check_branch
      %26 = sbr.rel (0) target = $region9
    $region8: #{tpu_custom_call.1} parent=1 // pred_region
      _
    $region9: #{tpu_custom_call.1} parent=1 // pred_fallthru
      _
    // Predicated region
    $region10: #{tpu_custom_call.1} parent=1 // pred_check
      _
    $region11: #{tpu_custom_call.1} parent=1 // pred_check_branch
      %28 = sbr.rel (0) target = $region13
    $region12: #{tpu_custom_call.1} parent=1 // pred_region
      _
    $region13: #{tpu_custom_call.1} parent=1 // pred_fallthru
      _
    // Predicated region
    $region14: #{tpu_custom_call.1} parent=1 // pred_check
      _
    $region15: #{tpu_custom_call.1} parent=1 // pred_check_branch
      %30 = sbr.rel (0) target = $region17
    $region16: #{tpu_custom_call.1} parent=1 // pred_region
      %s32 = ssub.s32 384, 384
      %33 = vsyncadd [#allocation6], %s32
      %s34 = sshll.u32 [#allocation5], 4
      %s35 = int_to_ptr.vmem [resolvable:$true] %s34
      %40 = dma.hbm_to_vmem [thread:$0]  %s3, 384, %s35, [#allocation6], 128, 128, 8
    $region17: #{tpu_custom_call.1} parent=1 // pred_fallthru
      _
    // Predicated region
    $region18: #{tpu_custom_call.1} parent=1 // pred_check
      _
    $region19: #{tpu_custom_call.1} parent=1 // pred_check_branch
      %42 = sbr.rel (0) target = $region21
    $region20: #{tpu_custom_call.1} parent=1 // pred_region
      _
    $region21: #{tpu_custom_call.1} parent=1 // pred_fallthru
      _
    // Predicated region
    $region22: #{tpu_custom_call.1} parent=1 // pred_check
      _
    $region23: #{tpu_custom_call.1} parent=1 // pred_check_branch
      %44 = sbr.rel (0) target = $region25
    $region24: #{tpu_custom_call.1} parent=1 // pred_region
      _
    $region25: #{tpu_custom_call.1} parent=1 // pred_fallthru
      _
    // Predicated region
    $region26: #{tpu_custom_call.1} parent=1 // pred_check
      _
    $region27: #{tpu_custom_call.1} parent=1 // pred_check_branch
      %46 = sbr.rel (0) target = $region29
    $region28: #{tpu_custom_call.1} parent=1 // pred_region
      _
    $region29: #{tpu_custom_call.1} parent=1 // pred_fallthru
      _
    // Predicated region
    $region30: #{tpu_custom_call.1} parent=1 // pred_check
      _
    $region31: #{tpu_custom_call.1} parent=1 // pred_check_branch
      %48 = sbr.rel (0) target = $region33
    $region32: #{tpu_custom_call.1} parent=1 // pred_region
      %49 = dma.done [#allocation3], 128
    $region33: #{tpu_custom_call.1} parent=1 // pred_fallthru
      _
    // Predicated region
    $region34: #{tpu_custom_call.1} parent=1 // pred_check
      _
    $region35: #{tpu_custom_call.1} parent=1 // pred_check_branch
      %51 = sbr.rel (0) target = $region37
    $region36: #{tpu_custom_call.1} parent=1 // pred_region
      %52 = dma.done [#allocation6], 384
    $region37: #{tpu_custom_call.1} parent=1 // pred_fallthru
      _
    %v53 = vlaneseq
    %v54 = vand.u32 %v53, 127
    %vm55 = vcmp.lt.s32.totalorder %v54, 0
    %v56 = vsub.s32 0, %v54
    %v57 = vsel %vm55, %v56, %v54
    %v58 = vshrl.u32 %v57, 4
    %v59 = vand.u32 %v57, 15
    %v60 = vsub.s32 0, %v59
    %v61 = vsel %vm55, %v60, %v59
    %vm62 = vcmp.ne.s32.totalorder %v61, 0
    %vm63 = vcmp.lt.s32.totalorder %v61, 0
    %vm64 = vmand %vm63, %vm62
    %v65 = vadd.s32 %v61, 16
    %v66 = vsel %vm64, %v65, %v61
    %v67 = vld [vmem:[#allocation2] sm:$0xff]
    %68 = vrot.lane.b32.xlu0 %v67, 4
    %v69 = vpop.permute.xlu0 %68
    %vm70 = vcmp.ge.s32.totalorder %v66, 4
    %v71 = vsel %vm70, 1, 0
    %vm72 = vcmp.eq.s32.totalorder %v71, 1
    %v73 = vsel %vm72, %v69, 0.0
    %v74 = vld [vmem:[%s1] sm:$0xff]
    %75 = vrot.lane.b32.xlu0 %v67, 2
    %v76 = vpop.permute.xlu0 %75
    %vm77 = vcmp.ge.s32.totalorder %v66, 2
    %v78 = vsel %vm77, 1, 0
    %vm79 = vcmp.eq.s32.totalorder %v78, 1
    %v80 = vsel %vm79, %v76, 0.0
    %s81 = scalar_lea.vmem %s1, 8
    %v82 = vld [vmem:[%s81] sm:$0xff]
    %vm83 = vcmask 64512
    %v85 = vsel %vm83, %v82, 0
    %87 = vmatprep.subr.mxu0 0.0
    %v88 = vand.u32 %v80, 4294901760
    %89 = vmatpush1.msra.mxu0 %v88
    %90 = vmatprep.subr.mxu0 0.0
    %91 = vmatpush1.msra.mxu0 0.0
    %92 = vmatprep.subr.mxu0 0.0
    %93 = vmatpush1.msra.mxu0 0.0
    %94 = vmatprep.subr.mxu0 0.0
    %95 = vmatpush1.msra.mxu0 0.0
    %96 = vmatprep.subr.mxu0 0.0
    %97 = vmatpush1.msra.mxu0 0.0
    %98 = vmatprep.subr.mxu0 0.0
    %99 = vmatpush1.msra.mxu0 0.0
    %100 = vmatprep.subr.mxu0 0.0
    %101 = vmatpush1.msra.mxu0 0.0
    %102 = vmatprep.subr.mxu0 0.0
    %103 = vmatpush1.msra.mxu0 0.0
    %104 = vmatprep.subr.mxu0 0.0
    %105 = vmatpush1.msra.mxu0 0.0
    %106 = vmatprep.subr.mxu0 0.0
    %107 = vmatpush1.msra.mxu0 0.0
    %108 = vmatprep.subr.mxu0 0.0
    %109 = vmatpush1.msra.mxu0 0.0
    %110 = vmatprep.subr.mxu0 0.0
    %111 = vmatpush1.msra.mxu0 0.0
    %112 = vmatprep.subr.mxu0 0.0
    %113 = vmatpush1.msra.mxu0 0.0
    %114 = vmatprep.subr.mxu0 0.0
    %115 = vmatpush1.msra.mxu0 0.0
    %116 = vmatprep.subr.mxu0 0.0
    %117 = vmatpush1.msra.mxu0 0.0
    %118 = vmatprep.subr.mxu0 0.0
    %119 = vmatpush1.msra.mxu0 0.0
    %120 = vmatprep.subr.mxu0 0.0
    %121 = vmatpush1.msra.mxu0 0.0
    %122 = vmatprep.subr.mxu0 0.0
    %123 = vmatpush1.msra.mxu0 0.0
    %124 = vmatprep.subr.mxu0 0.0
    %125 = vmatpush1.msra.mxu0 0.0
    %126 = vmatprep.subr.mxu0 0.0
    %127 = vmatpush1.msra.mxu0 0.0
    %128 = vmatprep.subr.mxu0 0.0
    %129 = vmatpush1.msra.mxu0 0.0
    %130 = vmatprep.subr.mxu0 0.0
    %131 = vmatpush1.msra.mxu0 0.0
    %132 = vmatprep.subr.mxu0 0.0
    %133 = vmatpush1.msra.mxu0 0.0
    %134 = vmatprep.subr.mxu0 0.0
    %135 = vmatpush1.msra.mxu0 0.0
    %136 = vmatprep.subr.mxu0 0.0
    %137 = vmatpush1.msra.mxu0 0.0
    %138 = vmatprep.subr.mxu0 0.0
    %139 = vmatpush1.msra.mxu0 0.0
    %140 = vmatprep.subr.mxu0 0.0
    %141 = vmatpush1.msra.mxu0 0.0
    %142 = vmatprep.subr.mxu0 0.0
    %143 = vmatpush1.msra.mxu0 0.0
    %144 = vmatprep.subr.mxu0 0.0
    %145 = vmatpush1.msra.mxu0 0.0
    %146 = vmatprep.subr.mxu0 0.0
    %147 = vmatpush1.msra.mxu0 0.0
    %148 = vmatprep.subr.mxu0 0.0
    %149 = vmatpush1.msra.mxu0 0.0
    %150 = vmatprep.subr.mxu0 0.0
    %151 = vmatpush1.msra.mxu0 0.0
    %152 = vmatprep.mubr.f32.mxu0 0.0
    %v153 = vand.u32 %v85, 4294901760
    %v154 = vsub.f32 %v85, %v153
    %v155 = vand.u32 %v154, 4294901760
    %v156 = vsub.f32 %v154, %v155
    %v157 = vand.u32 %v156, 4294901760
    %158 = vmatmul.mubr.f32.gmra.mrb[0].mxu0 %v157
    %v159 = vpop.f32.mrb[0].mxu0
    %v160 = vadd.f32 0.0, %v159
    %v161 = vpop.f32.mrb[0].mxu0
    %162 = vdwg.mxu0
    %163 = vmatprep.subr.mxu0 0.0
    %v164 = vand.u32 %v80, 4294901760
    %v165 = vsub.f32 %v80, %v164
    %v166 = vand.u32 %v165, 4294901760
    %v167 = vsub.f32 %v165, %v166
    %v168 = vand.u32 %v167, 4294901760
    %169 = vmatpush1.msra.mxu0 %v168
    %170 = vmatprep.subr.mxu0 0.0
    %171 = vmatpush1.msra.mxu0 0.0
    %172 = vmatprep.subr.mxu0 0.0
    %173 = vmatpush1.msra.mxu0 0.0
    %174 = vmatprep.subr.mxu0 0.0
    %175 = vmatpush1.msra.mxu0 0.0
    %176 = vmatprep.subr.mxu0 0.0
    %177 = vmatpush1.msra.mxu0 0.0
    %178 = vmatprep.subr.mxu0 0.0
    %179 = vmatpush1.msra.mxu0 0.0
    %180 = vmatprep.subr.mxu0 0.0
    %181 = vmatpush1.msra.mxu0 0.0
    %182 = vmatprep.subr.mxu0 0.0
    %183 = vmatpush1.msra.mxu0 0.0
    %184 = vmatprep.subr.mxu0 0.0
    %185 = vmatpush1.msra.mxu0 0.0
    %186 = vmatprep.subr.mxu0 0.0
    %187 = vmatpush1.msra.mxu0 0.0
    %188 = vmatprep.subr.mxu0 0.0
    %189 = vmatpush1.msra.mxu0 0.0
    %190 = vmatprep.subr.mxu0 0.0
    %191 = vmatpush1.msra.mxu0 0.0
    %192 = vmatprep.subr.mxu0 0.0
    %193 = vmatpush1.msra.mxu0 0.0
    %194 = vmatprep.subr.mxu0 0.0
    %195 = vmatpush1.msra.mxu0 0.0
    %196 = vmatprep.subr.mxu0 0.0
    %197 = vmatpush1.msra.mxu0 0.0
    %198 = vmatprep.subr.mxu0 0.0
    %199 = vmatpush1.msra.mxu0 0.0
    %200 = vmatprep.subr.mxu0 0.0
    %201 = vmatpush1.msra.mxu0 0.0
    %202 = vmatprep.subr.mxu0 0.0
    %203 = vmatpush1.msra.mxu0 0.0
    %204 = vmatprep.subr.mxu0 0.0
    %205 = vmatpush1.msra.mxu0 0.0
    %206 = vmatprep.subr.mxu0 0.0
    %207 = vmatpush1.msra.mxu0 0.0
    %208 = vmatprep.subr.mxu0 0.0
    %209 = vmatpush1.msra.mxu0 0.0
    %210 = vmatprep.subr.mxu0 0.0
    %211 = vmatpush1.msra.mxu0 0.0
    %212 = vmatprep.subr.mxu0 0.0
    %213 = vmatpush1.msra.mxu0 0.0
    %214 = vmatprep.subr.mxu0 0.0
    %215 = vmatpush1.msra.mxu0 0.0
    %216 = vmatprep.subr.mxu0 0.0
    %217 = vmatpush1.msra.mxu0 0.0
    %218 = vmatprep.subr.mxu0 0.0
    %219 = vmatpush1.msra.mxu0 0.0
    %220 = vmatprep.subr.mxu0 0.0
    %221 = vmatpush1.msra.mxu0 0.0
    %222 = vmatprep.subr.mxu0 0.0
    %223 = vmatpush1.msra.mxu0 0.0
    %224 = vmatprep.subr.mxu0 0.0
    %225 = vmatpush1.msra.mxu0 0.0
    %226 = vmatprep.subr.mxu0 0.0
    %227 = vmatpush1.msra.mxu0 0.0
    %228 = vmatprep.subr.mxu0 0.0
    %229 = vmatpush1.msra.mxu0 0.0
    %230 = vmatprep.subr.mxu0 0.0
    %231 = vmatpush1.msra.mxu0 0.0
    %232 = vmatprep.mubr.f32.mxu0 0.0
    %v233 = vand.u32 %v85, 4294901760
    %234 = vmatmul.mubr.f32.gmra.mrb[0].mxu0 %v233
    %v235 = vpop.f32.mrb[0].mxu0
    %v236 = vadd.f32 %v160, %v235
    %v237 = vpop.f32.mrb[0].mxu0
    %238 = vdwg.mxu0
    %239 = vmatprep.subr.mxu0 0.0
    %v240 = vand.u32 %v80, 4294901760
    %v241 = vsub.f32 %v80, %v240
    %242 = vmatpush1.msra.mxu0 %v241
    %243 = vmatprep.subr.mxu0 0.0
    %244 = vmatpush1.msra.mxu0 0.0
    %245 = vmatprep.subr.mxu0 0.0
    %246 = vmatpush1.msra.mxu0 0.0
    %247 = vmatprep.subr.mxu0 0.0
    %248 = vmatpush1.msra.mxu0 0.0
    %249 = vmatprep.subr.mxu0 0.0
    %250 = vmatpush1.msra.mxu0 0.0
    %251 = vmatprep.subr.mxu0 0.0
    %252 = vmatpush1.msra.mxu0 0.0
    %253 = vmatprep.subr.mxu0 0.0
    %254 = vmatpush1.msra.mxu0 0.0
    %255 = vmatprep.subr.mxu0 0.0
    %256 = vmatpush1.msra.mxu0 0.0
    %257 = vmatprep.subr.mxu0 0.0
    %258 = vmatpush1.msra.mxu0 0.0
    %259 = vmatprep.subr.mxu0 0.0
    %260 = vmatpush1.msra.mxu0 0.0
    %261 = vmatprep.subr.mxu0 0.0
    %262 = vmatpush1.msra.mxu0 0.0
    %263 = vmatprep.subr.mxu0 0.0
    %264 = vmatpush1.msra.mxu0 0.0
    %265 = vmatprep.subr.mxu0 0.0
    %266 = vmatpush1.msra.mxu0 0.0
    %267 = vmatprep.subr.mxu0 0.0
    %268 = vmatpush1.msra.mxu0 0.0
    %269 = vmatprep.subr.mxu0 0.0
    %270 = vmatpush1.msra.mxu0 0.0
    %271 = vmatprep.subr.mxu0 0.0
    %272 = vmatpush1.msra.mxu0 0.0
    %273 = vmatprep.subr.mxu0 0.0
    %274 = vmatpush1.msra.mxu0 0.0
    %275 = vmatprep.subr.mxu0 0.0
    %276 = vmatpush1.msra.mxu0 0.0
    %277 = vmatprep.subr.mxu0 0.0
    %278 = vmatpush1.msra.mxu0 0.0
    %279 = vmatprep.subr.mxu0 0.0
    %280 = vmatpush1.msra.mxu0 0.0
    %281 = vmatprep.subr.mxu0 0.0
    %282 = vmatpush1.msra.mxu0 0.0
    %283 = vmatprep.subr.mxu0 0.0
    %284 = vmatpush1.msra.mxu0 0.0
    %285 = vmatprep.subr.mxu0 0.0
    %286 = vmatpush1.msra.mxu0 0.0
    %287 = vmatprep.subr.mxu0 0.0
    %288 = vmatpush1.msra.mxu0 0.0
    %289 = vmatprep.subr.mxu0 0.0
    %290 = vmatpush1.msra.mxu0 0.0
    %291 = vmatprep.subr.mxu0 0.0
    %292 = vmatpush1.msra.mxu0 0.0
    %293 = vmatprep.subr.mxu0 0.0
    %294 = vmatpush1.msra.mxu0 0.0
    %295 = vmatprep.subr.mxu0 0.0
    %296 = vmatpush1.msra.mxu0 0.0
    %297 = vmatprep.subr.mxu0 0.0
    %298 = vmatpush1.msra.mxu0 0.0
    %299 = vmatprep.subr.mxu0 0.0
    %300 = vmatpush1.msra.mxu0 0.0
    %301 = vmatprep.subr.mxu0 0.0
    %302 = vmatpush1.msra.mxu0 0.0
    %303 = vmatprep.subr.mxu0 0.0
    %304 = vmatpush1.msra.mxu0 0.0
    %305 = vmatprep.mubr.f32.mxu0 0.0
    %v306 = vand.u32 %v85, 4294901760
    %v307 = vsub.f32 %v85, %v306
    %308 = vmatmul.mubr.f32.gmra.mrb[0].mxu0 %v307
    %v309 = vpop.f32.mrb[0].mxu0
    %v310 = vadd.f32 %v236, %v309
    %v311 = vpop.f32.mrb[0].mxu0
    %312 = vdwg.mxu0
    %313 = vmatprep.subr.mxu0 0.0
    %v314 = vand.u32 %v80, 4294901760
    %315 = vmatpush1.msra.mxu0 %v314
    %316 = vmatprep.subr.mxu0 0.0
    %317 = vmatpush1.msra.mxu0 0.0
    %318 = vmatprep.subr.mxu0 0.0
    %319 = vmatpush1.msra.mxu0 0.0
    %320 = vmatprep.subr.mxu0 0.0
    %321 = vmatpush1.msra.mxu0 0.0
    %322 = vmatprep.subr.mxu0 0.0
    %323 = vmatpush1.msra.mxu0 0.0
    %324 = vmatprep.subr.mxu0 0.0
    %325 = vmatpush1.msra.mxu0 0.0
    %326 = vmatprep.subr.mxu0 0.0
    %327 = vmatpush1.msra.mxu0 0.0
    %328 = vmatprep.subr.mxu0 0.0
    %329 = vmatpush1.msra.mxu0 0.0
    %330 = vmatprep.subr.mxu0 0.0
    %331 = vmatpush1.msra.mxu0 0.0
    %332 = vmatprep.subr.mxu0 0.0
    %333 = vmatpush1.msra.mxu0 0.0
    %334 = vmatprep.subr.mxu0 0.0
    %335 = vmatpush1.msra.mxu0 0.0
    %336 = vmatprep.subr.mxu0 0.0
    %337 = vmatpush1.msra.mxu0 0.0
    %338 = vmatprep.subr.mxu0 0.0
    %339 = vmatpush1.msra.mxu0 0.0
    %340 = vmatprep.subr.mxu0 0.0
    %341 = vmatpush1.msra.mxu0 0.0
    %342 = vmatprep.subr.mxu0 0.0
    %343 = vmatpush1.msra.mxu0 0.0
    %344 = vmatprep.subr.mxu0 0.0
    %345 = vmatpush1.msra.mxu0 0.0
    %346 = vmatprep.subr.mxu0 0.0
    %347 = vmatpush1.msra.mxu0 0.0
    %348 = vmatprep.subr.mxu0 0.0
    %349 = vmatpush1.msra.mxu0 0.0
    %350 = vmatprep.subr.mxu0 0.0
    %351 = vmatpush1.msra.mxu0 0.0
    %352 = vmatprep.subr.mxu0 0.0
    %353 = vmatpush1.msra.mxu0 0.0
    %354 = vmatprep.subr.mxu0 0.0
    %355 = vmatpush1.msra.mxu0 0.0
    %356 = vmatprep.subr.mxu0 0.0
    %357 = vmatpush1.msra.mxu0 0.0
    %358 = vmatprep.subr.mxu0 0.0
    %359 = vmatpush1.msra.mxu0 0.0
    %360 = vmatprep.subr.mxu0 0.0
    %361 = vmatpush1.msra.mxu0 0.0
    %362 = vmatprep.subr.mxu0 0.0
    %363 = vmatpush1.msra.mxu0 0.0
    %364 = vmatprep.subr.mxu0 0.0
    %365 = vmatpush1.msra.mxu0 0.0
    %366 = vmatprep.subr.mxu0 0.0
    %367 = vmatpush1.msra.mxu0 0.0
    %368 = vmatprep.subr.mxu0 0.0
    %369 = vmatpush1.msra.mxu0 0.0
    %370 = vmatprep.subr.mxu0 0.0
    %371 = vmatpush1.msra.mxu0 0.0
    %372 = vmatprep.subr.mxu0 0.0
    %373 = vmatpush1.msra.mxu0 0.0
    %374 = vmatprep.subr.mxu0 0.0
    %375 = vmatpush1.msra.mxu0 0.0
    %376 = vmatprep.subr.mxu0 0.0
    %377 = vmatpush1.msra.mxu0 0.0
    %378 = vmatprep.mubr.f32.mxu0 0.0
    %v379 = vand.u32 %v85, 4294901760
    %v380 = vsub.f32 %v85, %v379
    %v381 = vand.u32 %v380, 4294901760
    %382 = vmatmul.mubr.f32.gmra.mrb[0].mxu0 %v381
    %v383 = vpop.f32.mrb[0].mxu0
    %v384 = vadd.f32 %v310, %v383
    %v385 = vpop.f32.mrb[0].mxu0
    %386 = vdwg.mxu0
    %387 = vmatprep.subr.mxu0 0.0
    %v388 = vand.u32 %v80, 4294901760
    %v389 = vsub.f32 %v80, %v388
    %v390 = vand.u32 %v389, 4294901760
    %391 = vmatpush1.msra.mxu0 %v390
    %392 = vmatprep.subr.mxu0 0.0
    %393 = vmatpush1.msra.mxu0 0.0
    %394 = vmatprep.subr.mxu0 0.0
    %395 = vmatpush1.msra.mxu0 0.0
    %396 = vmatprep.subr.mxu0 0.0
    %397 = vmatpush1.msra.mxu0 0.0
    %398 = vmatprep.subr.mxu0 0.0
    %399 = vmatpush1.msra.mxu0 0.0
    %400 = vmatprep.subr.mxu0 0.0
    %401 = vmatpush1.msra.mxu0 0.0
    %402 = vmatprep.subr.mxu0 0.0
    %403 = vmatpush1.msra.mxu0 0.0
    %404 = vmatprep.subr.mxu0 0.0
    %405 = vmatpush1.msra.mxu0 0.0
    %406 = vmatprep.subr.mxu0 0.0
    %407 = vmatpush1.msra.mxu0 0.0
    %408 = vmatprep.subr.mxu0 0.0
    %409 = vmatpush1.msra.mxu0 0.0
    %410 = vmatprep.subr.mxu0 0.0
    %411 = vmatpush1.msra.mxu0 0.0
    %412 = vmatprep.subr.mxu0 0.0
    %413 = vmatpush1.msra.mxu0 0.0
    %414 = vmatprep.subr.mxu0 0.0
    %415 = vmatpush1.msra.mxu0 0.0
    %416 = vmatprep.subr.mxu0 0.0
    %417 = vmatpush1.msra.mxu0 0.0
    %418 = vmatprep.subr.mxu0 0.0
    %419 = vmatpush1.msra.mxu0 0.0
    %420 = vmatprep.subr.mxu0 0.0
    %421 = vmatpush1.msra.mxu0 0.0
    %422 = vmatprep.subr.mxu0 0.0
    %423 = vmatpush1.msra.mxu0 0.0
    %424 = vmatprep.subr.mxu0 0.0
    %425 = vmatpush1.msra.mxu0 0.0
    %426 = vmatprep.subr.mxu0 0.0
    %427 = vmatpush1.msra.mxu0 0.0
    %428 = vmatprep.subr.mxu0 0.0
    %429 = vmatpush1.msra.mxu0 0.0
    %430 = vmatprep.subr.mxu0 0.0
    %431 = vmatpush1.msra.mxu0 0.0
    %432 = vmatprep.subr.mxu0 0.0
    %433 = vmatpush1.msra.mxu0 0.0
    %434 = vmatprep.subr.mxu0 0.0
    %435 = vmatpush1.msra.mxu0 0.0
    %436 = vmatprep.subr.mxu0 0.0
    %437 = vmatpush1.msra.mxu0 0.0
    %438 = vmatprep.subr.mxu0 0.0
    %439 = vmatpush1.msra.mxu0 0.0
    %440 = vmatprep.subr.mxu0 0.0
    %441 = vmatpush1.msra.mxu0 0.0
    %442 = vmatprep.subr.mxu0 0.0
    %443 = vmatpush1.msra.mxu0 0.0
    %444 = vmatprep.subr.mxu0 0.0
    %445 = vmatpush1.msra.mxu0 0.0
    %446 = vmatprep.subr.mxu0 0.0
    %447 = vmatpush1.msra.mxu0 0.0
    %448 = vmatprep.subr.mxu0 0.0
    %449 = vmatpush1.msra.mxu0 0.0
    %450 = vmatprep.subr.mxu0 0.0
    %451 = vmatpush1.msra.mxu0 0.0
    %452 = vmatprep.subr.mxu0 0.0
    %453 = vmatpush1.msra.mxu0 0.0
    %454 = vmatprep.mubr.f32.mxu0 0.0
    %v455 = vand.u32 %v85, 4294901760
    %456 = vmatmul.mubr.f32.gmra.mrb[0].mxu0 %v455
    %v457 = vpop.f32.mrb[0].mxu0
    %v458 = vadd.f32 %v384, %v457
    %v459 = vpop.f32.mrb[0].mxu0
    %460 = vdwg.mxu0
    %461 = vmatprep.subr.mxu0 0.0
    %v462 = vand.u32 %v80, 4294901760
    %463 = vmatpush1.msra.mxu0 %v462
    %464 = vmatprep.subr.mxu0 0.0
    %465 = vmatpush1.msra.mxu0 0.0
    %466 = vmatprep.subr.mxu0 0.0
    %467 = vmatpush1.msra.mxu0 0.0
    %468 = vmatprep.subr.mxu0 0.0
    %469 = vmatpush1.msra.mxu0 0.0
    %470 = vmatprep.subr.mxu0 0.0
    %471 = vmatpush1.msra.mxu0 0.0
    %472 = vmatprep.subr.mxu0 0.0
    %473 = vmatpush1.msra.mxu0 0.0
    %474 = vmatprep.subr.mxu0 0.0
    %475 = vmatpush1.msra.mxu0 0.0
    %476 = vmatprep.subr.mxu0 0.0
    %477 = vmatpush1.msra.mxu0 0.0
    %478 = vmatprep.subr.mxu0 0.0
    %479 = vmatpush1.msra.mxu0 0.0
    %480 = vmatprep.subr.mxu0 0.0
    %481 = vmatpush1.msra.mxu0 0.0
    %482 = vmatprep.subr.mxu0 0.0
    %483 = vmatpush1.msra.mxu0 0.0
    %484 = vmatprep.subr.mxu0 0.0
    %485 = vmatpush1.msra.mxu0 0.0
    %486 = vmatprep.subr.mxu0 0.0
    %487 = vmatpush1.msra.mxu0 0.0
    %488 = vmatprep.subr.mxu0 0.0
    %489 = vmatpush1.msra.mxu0 0.0
    %490 = vmatprep.subr.mxu0 0.0
    %491 = vmatpush1.msra.mxu0 0.0
    %492 = vmatprep.subr.mxu0 0.0
    %493 = vmatpush1.msra.mxu0 0.0
    %494 = vmatprep.subr.mxu0 0.0
    %495 = vmatpush1.msra.mxu0 0.0
    %496 = vmatprep.subr.mxu0 0.0
    %497 = vmatpush1.msra.mxu0 0.0
    %498 = vmatprep.subr.mxu0 0.0
    %499 = vmatpush1.msra.mxu0 0.0
    %500 = vmatprep.subr.mxu0 0.0
    %501 = vmatpush1.msra.mxu0 0.0
    %502 = vmatprep.subr.mxu0 0.0
    %503 = vmatpush1.msra.mxu0 0.0
    %504 = vmatprep.subr.mxu0 0.0
    %505 = vmatpush1.msra.mxu0 0.0
    %506 = vmatprep.subr.mxu0 0.0
    %507 = vmatpush1.msra.mxu0 0.0
    %508 = vmatprep.subr.mxu0 0.0
    %509 = vmatpush1.msra.mxu0 0.0
    %510 = vmatprep.subr.mxu0 0.0
    %511 = vmatpush1.msra.mxu0 0.0
    %512 = vmatprep.subr.mxu0 0.0
    %513 = vmatpush1.msra.mxu0 0.0
    %514 = vmatprep.subr.mxu0 0.0
    %515 = vmatpush1.msra.mxu0 0.0
    %516 = vmatprep.subr.mxu0 0.0
    %517 = vmatpush1.msra.mxu0 0.0
    %518 = vmatprep.subr.mxu0 0.0
    %519 = vmatpush1.msra.mxu0 0.0
    %520 = vmatprep.subr.mxu0 0.0
    %521 = vmatpush1.msra.mxu0 0.0
    %522 = vmatprep.subr.mxu0 0.0
    %523 = vmatpush1.msra.mxu0 0.0
    %524 = vmatprep.subr.mxu0 0.0
    %525 = vmatpush1.msra.mxu0 0.0
    %526 = vmatprep.mubr.f32.mxu0 0.0
    %v527 = vand.u32 %v85, 4294901760
    %528 = vmatmul.mubr.f32.gmra.mrb[0].mxu0 %v527
    %v529 = vpop.f32.mrb[0].mxu0
    %v530 = vadd.f32 %v458, %v529
    %v531 = vpop.f32.mrb[0].mxu0
    %532 = vdwg.mxu0
    %v534 = vsel %vm83, %v74, 0
    %536 = vmatprep.subr.mxu0 0.0
    %v537 = vand.u32 %v73, 4294901760
    %538 = vmatpush1.msra.mxu0 %v537
    %539 = vmatprep.subr.mxu0 0.0
    %540 = vmatpush1.msra.mxu0 0.0
    %541 = vmatprep.subr.mxu0 0.0
    %542 = vmatpush1.msra.mxu0 0.0
    %543 = vmatprep.subr.mxu0 0.0
    %544 = vmatpush1.msra.mxu0 0.0
    %545 = vmatprep.subr.mxu0 0.0
    %546 = vmatpush1.msra.mxu0 0.0
    %547 = vmatprep.subr.mxu0 0.0
    %548 = vmatpush1.msra.mxu0 0.0
    %549 = vmatprep.subr.mxu0 0.0
    %550 = vmatpush1.msra.mxu0 0.0
    %551 = vmatprep.subr.mxu0 0.0
    %552 = vmatpush1.msra.mxu0 0.0
    %553 = vmatprep.subr.mxu0 0.0
    %554 = vmatpush1.msra.mxu0 0.0
    %555 = vmatprep.subr.mxu0 0.0
    %556 = vmatpush1.msra.mxu0 0.0
    %557 = vmatprep.subr.mxu0 0.0
    %558 = vmatpush1.msra.mxu0 0.0
    %559 = vmatprep.subr.mxu0 0.0
    %560 = vmatpush1.msra.mxu0 0.0
    %561 = vmatprep.subr.mxu0 0.0
    %562 = vmatpush1.msra.mxu0 0.0
    %563 = vmatprep.subr.mxu0 0.0
    %564 = vmatpush1.msra.mxu0 0.0
    %565 = vmatprep.subr.mxu0 0.0
    %566 = vmatpush1.msra.mxu0 0.0
    %567 = vmatprep.subr.mxu0 0.0
    %568 = vmatpush1.msra.mxu0 0.0
    %569 = vmatprep.subr.mxu0 0.0
    %570 = vmatpush1.msra.mxu0 0.0
    %571 = vmatprep.subr.mxu0 0.0
    %572 = vmatpush1.msra.mxu0 0.0
    %573 = vmatprep.subr.mxu0 0.0
    %574 = vmatpush1.msra.mxu0 0.0
    %575 = vmatprep.subr.mxu0 0.0
    %576 = vmatpush1.msra.mxu0 0.0
    %577 = vmatprep.subr.mxu0 0.0
    %578 = vmatpush1.msra.mxu0 0.0
    %579 = vmatprep.subr.mxu0 0.0
    %580 = vmatpush1.msra.mxu0 0.0
    %581 = vmatprep.subr.mxu0 0.0
    %582 = vmatpush1.msra.mxu0 0.0
    %583 = vmatprep.subr.mxu0 0.0
    %584 = vmatpush1.msra.mxu0 0.0
    %585 = vmatprep.subr.mxu0 0.0
    %586 = vmatpush1.msra.mxu0 0.0
    %587 = vmatprep.subr.mxu0 0.0
    %588 = vmatpush1.msra.mxu0 0.0
    %589 = vmatprep.subr.mxu0 0.0
    %590 = vmatpush1.msra.mxu0 0.0
    %591 = vmatprep.subr.mxu0 0.0
    %592 = vmatpush1.msra.mxu0 0.0
    %593 = vmatprep.subr.mxu0 0.0
    %594 = vmatpush1.msra.mxu0 0.0
    %595 = vmatprep.subr.mxu0 0.0
    %596 = vmatpush1.msra.mxu0 0.0
    %597 = vmatprep.subr.mxu0 0.0
    %598 = vmatpush1.msra.mxu0 0.0
    %599 = vmatprep.subr.mxu0 0.0
    %600 = vmatpush1.msra.mxu0 0.0
    %601 = vmatprep.mubr.f32.mxu0 0.0
    %v602 = vand.u32 %v534, 4294901760
    %v603 = vsub.f32 %v534, %v602
    %v604 = vand.u32 %v603, 4294901760
    %v605 = vsub.f32 %v603, %v604
    %v606 = vand.u32 %v605, 4294901760
    %607 = vmatmul.mubr.f32.gmra.mrb[0].mxu0 %v606
    %v608 = vpop.f32.mrb[0].mxu0
    %v609 = vadd.f32 %v530, %v608
    %v610 = vpop.f32.mrb[0].mxu0
    %611 = vdwg.mxu0
    %612 = vmatprep.subr.mxu0 0.0
    %v613 = vand.u32 %v73, 4294901760
    %v614 = vsub.f32 %v73, %v613
    %v615 = vand.u32 %v614, 4294901760
    %v616 = vsub.f32 %v614, %v615
    %v617 = vand.u32 %v616, 4294901760
    %618 = vmatpush1.msra.mxu0 %v617
    %619 = vmatprep.subr.mxu0 0.0
    %620 = vmatpush1.msra.mxu0 0.0
    %621 = vmatprep.subr.mxu0 0.0
    %622 = vmatpush1.msra.mxu0 0.0
    %623 = vmatprep.subr.mxu0 0.0
    %624 = vmatpush1.msra.mxu0 0.0
    %625 = vmatprep.subr.mxu0 0.0
    %626 = vmatpush1.msra.mxu0 0.0
    %627 = vmatprep.subr.mxu0 0.0
    %628 = vmatpush1.msra.mxu0 0.0
    %629 = vmatprep.subr.mxu0 0.0
    %630 = vmatpush1.msra.mxu0 0.0
    %631 = vmatprep.subr.mxu0 0.0
    %632 = vmatpush1.msra.mxu0 0.0
    %633 = vmatprep.subr.mxu0 0.0
    %634 = vmatpush1.msra.mxu0 0.0
    %635 = vmatprep.subr.mxu0 0.0
    %636 = vmatpush1.msra.mxu0 0.0
    %637 = vmatprep.subr.mxu0 0.0
    %638 = vmatpush1.msra.mxu0 0.0
    %639 = vmatprep.subr.mxu0 0.0
    %640 = vmatpush1.msra.mxu0 0.0
    %641 = vmatprep.subr.mxu0 0.0
    %642 = vmatpush1.msra.mxu0 0.0
    %643 = vmatprep.subr.mxu0 0.0
    %644 = vmatpush1.msra.mxu0 0.0
    %645 = vmatprep.subr.mxu0 0.0
    %646 = vmatpush1.msra.mxu0 0.0
    %647 = vmatprep.subr.mxu0 0.0
    %648 = vmatpush1.msra.mxu0 0.0
    %649 = vmatprep.subr.mxu0 0.0
    %650 = vmatpush1.msra.mxu0 0.0
    %651 = vmatprep.subr.mxu0 0.0
    %652 = vmatpush1.msra.mxu0 0.0
    %653 = vmatprep.subr.mxu0 0.0
    %654 = vmatpush1.msra.mxu0 0.0
    %655 = vmatprep.subr.mxu0 0.0
    %656 = vmatpush1.msra.mxu0 0.0
    %657 = vmatprep.subr.mxu0 0.0
    %658 = vmatpush1.msra.mxu0 0.0
    %659 = vmatprep.subr.mxu0 0.0
    %660 = vmatpush1.msra.mxu0 0.0
    %661 = vmatprep.subr.mxu0 0.0
    %662 = vmatpush1.msra.mxu0 0.0
    %663 = vmatprep.subr.mxu0 0.0
    %664 = vmatpush1.msra.mxu0 0.0
    %665 = vmatprep.subr.mxu0 0.0
    %666 = vmatpush1.msra.mxu0 0.0
    %667 = vmatprep.subr.mxu0 0.0
    %668 = vmatpush1.msra.mxu0 0.0
    %669 = vmatprep.subr.mxu0 0.0
    %670 = vmatpush1.msra.mxu0 0.0
    %671 = vmatprep.subr.mxu0 0.0
    %672 = vmatpush1.msra.mxu0 0.0
    %673 = vmatprep.subr.mxu0 0.0
    %674 = vmatpush1.msra.mxu0 0.0
    %675 = vmatprep.subr.mxu0 0.0
    %676 = vmatpush1.msra.mxu0 0.0
    %677 = vmatprep.subr.mxu0 0.0
    %678 = vmatpush1.msra.mxu0 0.0
    %679 = vmatprep.subr.mxu0 0.0
    %680 = vmatpush1.msra.mxu0 0.0
    %681 = vmatprep.mubr.f32.mxu0 0.0
    %v682 = vand.u32 %v534, 4294901760
    %683 = vmatmul.mubr.f32.gmra.mrb[0].mxu0 %v682
    %v684 = vpop.f32.mrb[0].mxu0
    %v685 = vadd.f32 %v609, %v684
    %v686 = vpop.f32.mrb[0].mxu0
    %687 = vdwg.mxu0
    %688 = vmatprep.subr.mxu0 0.0
    %v689 = vand.u32 %v73, 4294901760
    %v690 = vsub.f32 %v73, %v689
    %691 = vmatpush1.msra.mxu0 %v690
    %692 = vmatprep.subr.mxu0 0.0
    %693 = vmatpush1.msra.mxu0 0.0
    %694 = vmatprep.subr.mxu0 0.0
    %695 = vmatpush1.msra.mxu0 0.0
    %696 = vmatprep.subr.mxu0 0.0
    %697 = vmatpush1.msra.mxu0 0.0
    %698 = vmatprep.subr.mxu0 0.0
    %699 = vmatpush1.msra.mxu0 0.0
    %700 = vmatprep.subr.mxu0 0.0
    %701 = vmatpush1.msra.mxu0 0.0
    %702 = vmatprep.subr.mxu0 0.0
    %703 = vmatpush1.msra.mxu0 0.0
    %704 = vmatprep.subr.mxu0 0.0
    %705 = vmatpush1.msra.mxu0 0.0
    %706 = vmatprep.subr.mxu0 0.0
    %707 = vmatpush1.msra.mxu0 0.0
    %708 = vmatprep.subr.mxu0 0.0
    %709 = vmatpush1.msra.mxu0 0.0
    %710 = vmatprep.subr.mxu0 0.0
    %711 = vmatpush1.msra.mxu0 0.0
    %712 = vmatprep.subr.mxu0 0.0
    %713 = vmatpush1.msra.mxu0 0.0
    %714 = vmatprep.subr.mxu0 0.0
    %715 = vmatpush1.msra.mxu0 0.0
    %716 = vmatprep.subr.mxu0 0.0
    %717 = vmatpush1.msra.mxu0 0.0
    %718 = vmatprep.subr.mxu0 0.0
    %719 = vmatpush1.msra.mxu0 0.0
    %720 = vmatprep.subr.mxu0 0.0
    %721 = vmatpush1.msra.mxu0 0.0
    %722 = vmatprep.subr.mxu0 0.0
    %723 = vmatpush1.msra.mxu0 0.0
    %724 = vmatprep.subr.mxu0 0.0
    %725 = vmatpush1.msra.mxu0 0.0
    %726 = vmatprep.subr.mxu0 0.0
    %727 = vmatpush1.msra.mxu0 0.0
    %728 = vmatprep.subr.mxu0 0.0
    %729 = vmatpush1.msra.mxu0 0.0
    %730 = vmatprep.subr.mxu0 0.0
    %731 = vmatpush1.msra.mxu0 0.0
    %732 = vmatprep.subr.mxu0 0.0
    %733 = vmatpush1.msra.mxu0 0.0
    %734 = vmatprep.subr.mxu0 0.0
    %735 = vmatpush1.msra.mxu0 0.0
    %736 = vmatprep.subr.mxu0 0.0
    %737 = vmatpush1.msra.mxu0 0.0
    %738 = vmatprep.subr.mxu0 0.0
    %739 = vmatpush1.msra.mxu0 0.0
    %740 = vmatprep.subr.mxu0 0.0
    %741 = vmatpush1.msra.mxu0 0.0
    %742 = vmatprep.subr.mxu0 0.0
    %743 = vmatpush1.msra.mxu0 0.0
    %744 = vmatprep.subr.mxu0 0.0
    %745 = vmatpush1.msra.mxu0 0.0
    %746 = vmatprep.subr.mxu0 0.0
    %747 = vmatpush1.msra.mxu0 0.0
    %748 = vmatprep.subr.mxu0 0.0
    %749 = vmatpush1.msra.mxu0 0.0
    %750 = vmatprep.subr.mxu0 0.0
    %751 = vmatpush1.msra.mxu0 0.0
    %752 = vmatprep.subr.mxu0 0.0
    %753 = vmatpush1.msra.mxu0 0.0
    %754 = vmatprep.mubr.f32.mxu0 0.0
    %v755 = vand.u32 %v534, 4294901760
    %v756 = vsub.f32 %v534, %v755
    %757 = vmatmul.mubr.f32.gmra.mrb[0].mxu0 %v756
    %v758 = vpop.f32.mrb[0].mxu0
    %v759 = vadd.f32 %v685, %v758
    %v760 = vpop.f32.mrb[0].mxu0
    %761 = vdwg.mxu0
    %762 = vmatprep.subr.mxu0 0.0
    %v763 = vand.u32 %v73, 4294901760
    %764 = vmatpush1.msra.mxu0 %v763
    %765 = vmatprep.subr.mxu0 0.0
    %766 = vmatpush1.msra.mxu0 0.0
    %767 = vmatprep.subr.mxu0 0.0
    %768 = vmatpush1.msra.mxu0 0.0
    %769 = vmatprep.subr.mxu0 0.0
    %770 = vmatpush1.msra.mxu0 0.0
    %771 = vmatprep.subr.mxu0 0.0
    %772 = vmatpush1.msra.mxu0 0.0
    %773 = vmatprep.subr.mxu0 0.0
    %774 = vmatpush1.msra.mxu0 0.0
    %775 = vmatprep.subr.mxu0 0.0
    %776 = vmatpush1.msra.mxu0 0.0
    %777 = vmatprep.subr.mxu0 0.0
    %778 = vmatpush1.msra.mxu0 0.0
    %779 = vmatprep.subr.mxu0 0.0
    %780 = vmatpush1.msra.mxu0 0.0
    %781 = vmatprep.subr.mxu0 0.0
    %782 = vmatpush1.msra.mxu0 0.0
    %783 = vmatprep.subr.mxu0 0.0
    %784 = vmatpush1.msra.mxu0 0.0
    %785 = vmatprep.subr.mxu0 0.0
    %786 = vmatpush1.msra.mxu0 0.0
    %787 = vmatprep.subr.mxu0 0.0
    %788 = vmatpush1.msra.mxu0 0.0
    %789 = vmatprep.subr.mxu0 0.0
    %790 = vmatpush1.msra.mxu0 0.0
    %791 = vmatprep.subr.mxu0 0.0
    %792 = vmatpush1.msra.mxu0 0.0
    %793 = vmatprep.subr.mxu0 0.0
    %794 = vmatpush1.msra.mxu0 0.0
    %795 = vmatprep.subr.mxu0 0.0
    %796 = vmatpush1.msra.mxu0 0.0
    %797 = vmatprep.subr.mxu0 0.0
    %798 = vmatpush1.msra.mxu0 0.0
    %799 = vmatprep.subr.mxu0 0.0
    %800 = vmatpush1.msra.mxu0 0.0
    %801 = vmatprep.subr.mxu0 0.0
    %802 = vmatpush1.msra.mxu0 0.0
    %803 = vmatprep.subr.mxu0 0.0
    %804 = vmatpush1.msra.mxu0 0.0
    %805 = vmatprep.subr.mxu0 0.0
    %806 = vmatpush1.msra.mxu0 0.0
    %807 = vmatprep.subr.mxu0 0.0
    %808 = vmatpush1.msra.mxu0 0.0
    %809 = vmatprep.subr.mxu0 0.0
    %810 = vmatpush1.msra.mxu0 0.0
    %811 = vmatprep.subr.mxu0 0.0
    %812 = vmatpush1.msra.mxu0 0.0
    %813 = vmatprep.subr.mxu0 0.0
    %814 = vmatpush1.msra.mxu0 0.0
    %815 = vmatprep.subr.mxu0 0.0
    %816 = vmatpush1.msra.mxu0 0.0
    %817 = vmatprep.subr.mxu0 0.0
    %818 = vmatpush1.msra.mxu0 0.0
    %819 = vmatprep.subr.mxu0 0.0
    %820 = vmatpush1.msra.mxu0 0.0
    %821 = vmatprep.subr.mxu0 0.0
    %822 = vmatpush1.msra.mxu0 0.0
    %823 = vmatprep.subr.mxu0 0.0
    %824 = vmatpush1.msra.mxu0 0.0
    %825 = vmatprep.subr.mxu0 0.0
    %826 = vmatpush1.msra.mxu0 0.0
    %827 = vmatprep.mubr.f32.mxu0 0.0
    %v828 = vand.u32 %v534, 4294901760
    %v829 = vsub.f32 %v534, %v828
    %v830 = vand.u32 %v829, 4294901760
    %831 = vmatmul.mubr.f32.gmra.mrb[0].mxu0 %v830
    %v832 = vpop.f32.mrb[0].mxu0
    %v833 = vadd.f32 %v759, %v832
    %v834 = vpop.f32.mrb[0].mxu0
    %835 = vdwg.mxu0
    %836 = vmatprep.subr.mxu0 0.0
    %v837 = vand.u32 %v73, 4294901760
    %v838 = vsub.f32 %v73, %v837
    %v839 = vand.u32 %v838, 4294901760
    %840 = vmatpush1.msra.mxu0 %v839
    %841 = vmatprep.subr.mxu0 0.0
    %842 = vmatpush1.msra.mxu0 0.0
    %843 = vmatprep.subr.mxu0 0.0
    %844 = vmatpush1.msra.mxu0 0.0
    %845 = vmatprep.subr.mxu0 0.0
    %846 = vmatpush1.msra.mxu0 0.0
    %847 = vmatprep.subr.mxu0 0.0
    %848 = vmatpush1.msra.mxu0 0.0
    %849 = vmatprep.subr.mxu0 0.0
    %850 = vmatpush1.msra.mxu0 0.0
    %851 = vmatprep.subr.mxu0 0.0
    %852 = vmatpush1.msra.mxu0 0.0
    %853 = vmatprep.subr.mxu0 0.0
    %854 = vmatpush1.msra.mxu0 0.0
    %855 = vmatprep.subr.mxu0 0.0
    %856 = vmatpush1.msra.mxu0 0.0
    %857 = vmatprep.subr.mxu0 0.0
    %858 = vmatpush1.msra.mxu0 0.0
    %859 = vmatprep.subr.mxu0 0.0
    %860 = vmatpush1.msra.mxu0 0.0
    %861 = vmatprep.subr.mxu0 0.0
    %862 = vmatpush1.msra.mxu0 0.0
    %863 = vmatprep.subr.mxu0 0.0
    %864 = vmatpush1.msra.mxu0 0.0
    %865 = vmatprep.subr.mxu0 0.0
    %866 = vmatpush1.msra.mxu0 0.0
    %867 = vmatprep.subr.mxu0 0.0
    %868 = vmatpush1.msra.mxu0 0.0
    %869 = vmatprep.subr.mxu0 0.0
    %870 = vmatpush1.msra.mxu0 0.0
    %871 = vmatprep.subr.mxu0 0.0
    %872 = vmatpush1.msra.mxu0 0.0
    %873 = vmatprep.subr.mxu0 0.0
    %874 = vmatpush1.msra.mxu0 0.0
    %875 = vmatprep.subr.mxu0 0.0
    %876 = vmatpush1.msra.mxu0 0.0
    %877 = vmatprep.subr.mxu0 0.0
    %878 = vmatpush1.msra.mxu0 0.0
    %879 = vmatprep.subr.mxu0 0.0
    %880 = vmatpush1.msra.mxu0 0.0
    %881 = vmatprep.subr.mxu0 0.0
    %882 = vmatpush1.msra.mxu0 0.0
    %883 = vmatprep.subr.mxu0 0.0
    %884 = vmatpush1.msra.mxu0 0.0
    %885 = vmatprep.subr.mxu0 0.0
    %886 = vmatpush1.msra.mxu0 0.0
    %887 = vmatprep.subr.mxu0 0.0
    %888 = vmatpush1.msra.mxu0 0.0
    %889 = vmatprep.subr.mxu0 0.0
    %890 = vmatpush1.msra.mxu0 0.0
    %891 = vmatprep.subr.mxu0 0.0
    %892 = vmatpush1.msra.mxu0 0.0
    %893 = vmatprep.subr.mxu0 0.0
    %894 = vmatpush1.msra.mxu0 0.0
    %895 = vmatprep.subr.mxu0 0.0
    %896 = vmatpush1.msra.mxu0 0.0
    %897 = vmatprep.subr.mxu0 0.0
    %898 = vmatpush1.msra.mxu0 0.0
    %899 = vmatprep.subr.mxu0 0.0
    %900 = vmatpush1.msra.mxu0 0.0
    %901 = vmatprep.subr.mxu0 0.0
    %902 = vmatpush1.msra.mxu0 0.0
    %903 = vmatprep.mubr.f32.mxu0 0.0
    %v904 = vand.u32 %v534, 4294901760
    %905 = vmatmul.mubr.f32.gmra.mrb[0].mxu0 %v904
    %v906 = vpop.f32.mrb[0].mxu0
    %v907 = vadd.f32 %v833, %v906
    %v908 = vpop.f32.mrb[0].mxu0
    %909 = vdwg.mxu0
    %910 = vmatprep.subr.mxu0 0.0
    %v911 = vand.u32 %v73, 4294901760
    %912 = vmatpush1.msra.mxu0 %v911
    %913 = vmatprep.subr.mxu0 0.0
    %914 = vmatpush1.msra.mxu0 0.0
    %915 = vmatprep.subr.mxu0 0.0
    %916 = vmatpush1.msra.mxu0 0.0
    %917 = vmatprep.subr.mxu0 0.0
    %918 = vmatpush1.msra.mxu0 0.0
    %919 = vmatprep.subr.mxu0 0.0
    %920 = vmatpush1.msra.mxu0 0.0
    %921 = vmatprep.subr.mxu0 0.0
    %922 = vmatpush1.msra.mxu0 0.0
    %923 = vmatprep.subr.mxu0 0.0
    %924 = vmatpush1.msra.mxu0 0.0
    %925 = vmatprep.subr.mxu0 0.0
    %926 = vmatpush1.msra.mxu0 0.0
    %927 = vmatprep.subr.mxu0 0.0
    %928 = vmatpush1.msra.mxu0 0.0
    %929 = vmatprep.subr.mxu0 0.0
    %930 = vmatpush1.msra.mxu0 0.0
    %931 = vmatprep.subr.mxu0 0.0
    %932 = vmatpush1.msra.mxu0 0.0
    %933 = vmatprep.subr.mxu0 0.0
    %934 = vmatpush1.msra.mxu0 0.0
    %935 = vmatprep.subr.mxu0 0.0
    %936 = vmatpush1.msra.mxu0 0.0
    %937 = vmatprep.subr.mxu0 0.0
    %938 = vmatpush1.msra.mxu0 0.0
    %939 = vmatprep.subr.mxu0 0.0
    %940 = vmatpush1.msra.mxu0 0.0
    %941 = vmatprep.subr.mxu0 0.0
    %942 = vmatpush1.msra.mxu0 0.0
    %943 = vmatprep.subr.mxu0 0.0
    %944 = vmatpush1.msra.mxu0 0.0
    %945 = vmatprep.subr.mxu0 0.0
    %946 = vmatpush1.msra.mxu0 0.0
    %947 = vmatprep.subr.mxu0 0.0
    %948 = vmatpush1.msra.mxu0 0.0
    %949 = vmatprep.subr.mxu0 0.0
    %950 = vmatpush1.msra.mxu0 0.0
    %951 = vmatprep.subr.mxu0 0.0
    %952 = vmatpush1.msra.mxu0 0.0
    %953 = vmatprep.subr.mxu0 0.0
    %954 = vmatpush1.msra.mxu0 0.0
    %955 = vmatprep.subr.mxu0 0.0
    %956 = vmatpush1.msra.mxu0 0.0
    %957 = vmatprep.subr.mxu0 0.0
    %958 = vmatpush1.msra.mxu0 0.0
    %959 = vmatprep.subr.mxu0 0.0
    %960 = vmatpush1.msra.mxu0 0.0
    %961 = vmatprep.subr.mxu0 0.0
    %962 = vmatpush1.msra.mxu0 0.0
    %963 = vmatprep.subr.mxu0 0.0
    %964 = vmatpush1.msra.mxu0 0.0
    %965 = vmatprep.subr.mxu0 0.0
    %966 = vmatpush1.msra.mxu0 0.0
    %967 = vmatprep.subr.mxu0 0.0
    %968 = vmatpush1.msra.mxu0 0.0
    %969 = vmatprep.subr.mxu0 0.0
    %970 = vmatpush1.msra.mxu0 0.0
    %971 = vmatprep.subr.mxu0 0.0
    %972 = vmatpush1.msra.mxu0 0.0
    %973 = vmatprep.subr.mxu0 0.0
    %974 = vmatpush1.msra.mxu0 0.0
    %975 = vmatprep.mubr.f32.mxu0 0.0
    %v976 = vand.u32 %v534, 4294901760
    %977 = vmatmul.mubr.f32.gmra.mrb[0].mxu0 %v976
    %v978 = vpop.f32.mrb[0].mxu0
    %v979 = vadd.f32 %v907, %v978
    %v980 = vpop.f32.mrb[0].mxu0
    %981 = vdwg.mxu0
    %s982 = scalar_lea.vmem %s1, 16
    %v983 = vld [vmem:[%s982] sm:$0xff]
    %v985 = vsel %vm83, %v983, 0
    %987 = vmatprep.subr.mxu0 0.0
    %v988 = vand.u32 %v67, 4294901760
    %989 = vmatpush1.msra.mxu0 %v988
    %990 = vmatprep.subr.mxu0 0.0
    %991 = vmatpush1.msra.mxu0 0.0
    %992 = vmatprep.subr.mxu0 0.0
    %993 = vmatpush1.msra.mxu0 0.0
    %994 = vmatprep.subr.mxu0 0.0
    %995 = vmatpush1.msra.mxu0 0.0
    %996 = vmatprep.subr.mxu0 0.0
    %997 = vmatpush1.msra.mxu0 0.0
    %998 = vmatprep.subr.mxu0 0.0
    %999 = vmatpush1.msra.mxu0 0.0
    %1000 = vmatprep.subr.mxu0 0.0
    %1001 = vmatpush1.msra.mxu0 0.0
    %1002 = vmatprep.subr.mxu0 0.0
    %1003 = vmatpush1.msra.mxu0 0.0
    %1004 = vmatprep.subr.mxu0 0.0
    %1005 = vmatpush1.msra.mxu0 0.0
    %1006 = vmatprep.subr.mxu0 0.0
    %1007 = vmatpush1.msra.mxu0 0.0
    %1008 = vmatprep.subr.mxu0 0.0
    %1009 = vmatpush1.msra.mxu0 0.0
    %1010 = vmatprep.subr.mxu0 0.0
    %1011 = vmatpush1.msra.mxu0 0.0
    %1012 = vmatprep.subr.mxu0 0.0
    %1013 = vmatpush1.msra.mxu0 0.0
    %1014 = vmatprep.subr.mxu0 0.0
    %1015 = vmatpush1.msra.mxu0 0.0
    %1016 = vmatprep.subr.mxu0 0.0
    %1017 = vmatpush1.msra.mxu0 0.0
    %1018 = vmatprep.subr.mxu0 0.0
    %1019 = vmatpush1.msra.mxu0 0.0
    %1020 = vmatprep.subr.mxu0 0.0
    %1021 = vmatpush1.msra.mxu0 0.0
    %1022 = vmatprep.subr.mxu0 0.0
    %1023 = vmatpush1.msra.mxu0 0.0
    %1024 = vmatprep.subr.mxu0 0.0
    %1025 = vmatpush1.msra.mxu0 0.0
    %1026 = vmatprep.subr.mxu0 0.0
    %1027 = vmatpush1.msra.mxu0 0.0
    %1028 = vmatprep.subr.mxu0 0.0
    %1029 = vmatpush1.msra.mxu0 0.0
    %1030 = vmatprep.subr.mxu0 0.0
    %1031 = vmatpush1.msra.mxu0 0.0
    %1032 = vmatprep.subr.mxu0 0.0
    %1033 = vmatpush1.msra.mxu0 0.0
    %1034 = vmatprep.subr.mxu0 0.0
    %1035 = vmatpush1.msra.mxu0 0.0
    %1036 = vmatprep.subr.mxu0 0.0
    %1037 = vmatpush1.msra.mxu0 0.0
    %1038 = vmatprep.subr.mxu0 0.0
    %1039 = vmatpush1.msra.mxu0 0.0
    %1040 = vmatprep.subr.mxu0 0.0
    %1041 = vmatpush1.msra.mxu0 0.0
    %1042 = vmatprep.subr.mxu0 0.0
    %1043 = vmatpush1.msra.mxu0 0.0
    %1044 = vmatprep.subr.mxu0 0.0
    %1045 = vmatpush1.msra.mxu0 0.0
    %1046 = vmatprep.subr.mxu0 0.0
    %1047 = vmatpush1.msra.mxu0 0.0
    %1048 = vmatprep.subr.mxu0 0.0
    %1049 = vmatpush1.msra.mxu0 0.0
    %1050 = vmatprep.subr.mxu0 0.0
    %1051 = vmatpush1.msra.mxu0 0.0
    %1052 = vmatprep.mubr.f32.mxu0 0.0
    %v1053 = vand.u32 %v985, 4294901760
    %v1054 = vsub.f32 %v985, %v1053
    %v1055 = vand.u32 %v1054, 4294901760
    %v1056 = vsub.f32 %v1054, %v1055
    %v1057 = vand.u32 %v1056, 4294901760
    %1058 = vmatmul.mubr.f32.gmra.mrb[0].mxu0 %v1057
    %v1059 = vpop.f32.mrb[0].mxu0
    %v1060 = vadd.f32 0.0, %v1059
    %v1061 = vpop.f32.mrb[0].mxu0
    %1062 = vdwg.mxu0
    %1063 = vmatprep.subr.mxu0 0.0
    %v1064 = vand.u32 %v67, 4294901760
    %v1065 = vsub.f32 %v67, %v1064
    %v1066 = vand.u32 %v1065, 4294901760
    %v1067 = vsub.f32 %v1065, %v1066
    %v1068 = vand.u32 %v1067, 4294901760
    %1069 = vmatpush1.msra.mxu0 %v1068
    %1070 = vmatprep.subr.mxu0 0.0
    %1071 = vmatpush1.msra.mxu0 0.0
    %1072 = vmatprep.subr.mxu0 0.0
    %1073 = vmatpush1.msra.mxu0 0.0
    %1074 = vmatprep.subr.mxu0 0.0
    %1075 = vmatpush1.msra.mxu0 0.0
    %1076 = vmatprep.subr.mxu0 0.0
    %1077 = vmatpush1.msra.mxu0 0.0
    %1078 = vmatprep.subr.mxu0 0.0
    %1079 = vmatpush1.msra.mxu0 0.0
    %1080 = vmatprep.subr.mxu0 0.0
    %1081 = vmatpush1.msra.mxu0 0.0
    %1082 = vmatprep.subr.mxu0 0.0
    %1083 = vmatpush1.msra.mxu0 0.0
    %1084 = vmatprep.subr.mxu0 0.0
    %1085 = vmatpush1.msra.mxu0 0.0
    %1086 = vmatprep.subr.mxu0 0.0
    %1087 = vmatpush1.msra.mxu0 0.0
    %1088 = vmatprep.subr.mxu0 0.0
    %1089 = vmatpush1.msra.mxu0 0.0
    %1090 = vmatprep.subr.mxu0 0.0
    %1091 = vmatpush1.msra.mxu0 0.0
    %1092 = vmatprep.subr.mxu0 0.0
    %1093 = vmatpush1.msra.mxu0 0.0
    %1094 = vmatprep.subr.mxu0 0.0
    %1095 = vmatpush1.msra.mxu0 0.0
    %1096 = vmatprep.subr.mxu0 0.0
    %1097 = vmatpush1.msra.mxu0 0.0
    %1098 = vmatprep.subr.mxu0 0.0
    %1099 = vmatpush1.msra.mxu0 0.0
    %1100 = vmatprep.subr.mxu0 0.0
    %1101 = vmatpush1.msra.mxu0 0.0
    %1102 = vmatprep.subr.mxu0 0.0
    %1103 = vmatpush1.msra.mxu0 0.0
    %1104 = vmatprep.subr.mxu0 0.0
    %1105 = vmatpush1.msra.mxu0 0.0
    %1106 = vmatprep.subr.mxu0 0.0
    %1107 = vmatpush1.msra.mxu0 0.0
    %1108 = vmatprep.subr.mxu0 0.0
    %1109 = vmatpush1.msra.mxu0 0.0
    %1110 = vmatprep.subr.mxu0 0.0
    %1111 = vmatpush1.msra.mxu0 0.0
    %1112 = vmatprep.subr.mxu0 0.0
    %1113 = vmatpush1.msra.mxu0 0.0
    %1114 = vmatprep.subr.mxu0 0.0
    %1115 = vmatpush1.msra.mxu0 0.0
    %1116 = vmatprep.subr.mxu0 0.0
    %1117 = vmatpush1.msra.mxu0 0.0
    %1118 = vmatprep.subr.mxu0 0.0
    %1119 = vmatpush1.msra.mxu0 0.0
    %1120 = vmatprep.subr.mxu0 0.0
    %1121 = vmatpush1.msra.mxu0 0.0
    %1122 = vmatprep.subr.mxu0 0.0
    %1123 = vmatpush1.msra.mxu0 0.0
    %1124 = vmatprep.subr.mxu0 0.0
    %1125 = vmatpush1.msra.mxu0 0.0
    %1126 = vmatprep.subr.mxu0 0.0
    %1127 = vmatpush1.msra.mxu0 0.0
    %1128 = vmatprep.subr.mxu0 0.0
    %1129 = vmatpush1.msra.mxu0 0.0
    %1130 = vmatprep.subr.mxu0 0.0
    %1131 = vmatpush1.msra.mxu0 0.0
    %1132 = vmatprep.mubr.f32.mxu0 0.0
    %v1133 = vand.u32 %v985, 4294901760
    %1134 = vmatmul.mubr.f32.gmra.mrb[0].mxu0 %v1133
    %v1135 = vpop.f32.mrb[0].mxu0
    %v1136 = vadd.f32 %v1060, %v1135
    %v1137 = vpop.f32.mrb[0].mxu0
    %1138 = vdwg.mxu0
    %1139 = vmatprep.subr.mxu0 0.0
    %v1140 = vand.u32 %v67, 4294901760
    %v1141 = vsub.f32 %v67, %v1140
    %1142 = vmatpush1.msra.mxu0 %v1141
    %1143 = vmatprep.subr.mxu0 0.0
    %1144 = vmatpush1.msra.mxu0 0.0
    %1145 = vmatprep.subr.mxu0 0.0
    %1146 = vmatpush1.msra.mxu0 0.0
    %1147 = vmatprep.subr.mxu0 0.0
    %1148 = vmatpush1.msra.mxu0 0.0
    %1149 = vmatprep.subr.mxu0 0.0
    %1150 = vmatpush1.msra.mxu0 0.0
    %1151 = vmatprep.subr.mxu0 0.0
    %1152 = vmatpush1.msra.mxu0 0.0
    %1153 = vmatprep.subr.mxu0 0.0
    %1154 = vmatpush1.msra.mxu0 0.0
    %1155 = vmatprep.subr.mxu0 0.0
    %1156 = vmatpush1.msra.mxu0 0.0
    %1157 = vmatprep.subr.mxu0 0.0
    %1158 = vmatpush1.msra.mxu0 0.0
    %1159 = vmatprep.subr.mxu0 0.0
    %1160 = vmatpush1.msra.mxu0 0.0
    %1161 = vmatprep.subr.mxu0 0.0
    %1162 = vmatpush1.msra.mxu0 0.0
    %1163 = vmatprep.subr.mxu0 0.0
    %1164 = vmatpush1.msra.mxu0 0.0
    %1165 = vmatprep.subr.mxu0 0.0
    %1166 = vmatpush1.msra.mxu0 0.0
    %1167 = vmatprep.subr.mxu0 0.0
    %1168 = vmatpush1.msra.mxu0 0.0
    %1169 = vmatprep.subr.mxu0 0.0
    %1170 = vmatpush1.msra.mxu0 0.0
    %1171 = vmatprep.subr.mxu0 0.0
    %1172 = vmatpush1.msra.mxu0 0.0
    %1173 = vmatprep.subr.mxu0 0.0
    %1174 = vmatpush1.msra.mxu0 0.0
    %1175 = vmatprep.subr.mxu0 0.0
    %1176 = vmatpush1.msra.mxu0 0.0
    %1177 = vmatprep.subr.mxu0 0.0
    %1178 = vmatpush1.msra.mxu0 0.0
    %1179 = vmatprep.subr.mxu0 0.0
    %1180 = vmatpush1.msra.mxu0 0.0
    %1181 = vmatprep.subr.mxu0 0.0
    %1182 = vmatpush1.msra.mxu0 0.0
    %1183 = vmatprep.subr.mxu0 0.0
    %1184 = vmatpush1.msra.mxu0 0.0
    %1185 = vmatprep.subr.mxu0 0.0
    %1186 = vmatpush1.msra.mxu0 0.0
    %1187 = vmatprep.subr.mxu0 0.0
    %1188 = vmatpush1.msra.mxu0 0.0
    %1189 = vmatprep.subr.mxu0 0.0
    %1190 = vmatpush1.msra.mxu0 0.0
    %1191 = vmatprep.subr.mxu0 0.0
    %1192 = vmatpush1.msra.mxu0 0.0
    %1193 = vmatprep.subr.mxu0 0.0
    %1194 = vmatpush1.msra.mxu0 0.0
    %1195 = vmatprep.subr.mxu0 0.0
    %1196 = vmatpush1.msra.mxu0 0.0
    %1197 = vmatprep.subr.mxu0 0.0
    %1198 = vmatpush1.msra.mxu0 0.0
    %1199 = vmatprep.subr.mxu0 0.0
    %1200 = vmatpush1.msra.mxu0 0.0
    %1201 = vmatprep.subr.mxu0 0.0
    %1202 = vmatpush1.msra.mxu0 0.0
    %1203 = vmatprep.subr.mxu0 0.0
    %1204 = vmatpush1.msra.mxu0 0.0
    %1205 = vmatprep.mubr.f32.mxu0 0.0
    %v1206 = vand.u32 %v985, 4294901760
    %v1207 = vsub.f32 %v985, %v1206
    %1208 = vmatmul.mubr.f32.gmra.mrb[0].mxu0 %v1207
    %v1209 = vpop.f32.mrb[0].mxu0
    %v1210 = vadd.f32 %v1136, %v1209
    %v1211 = vpop.f32.mrb[0].mxu0
    %1212 = vdwg.mxu0
    %1213 = vmatprep.subr.mxu0 0.0
    %v1214 = vand.u32 %v67, 4294901760
    %1215 = vmatpush1.msra.mxu0 %v1214
    %1216 = vmatprep.subr.mxu0 0.0
    %1217 = vmatpush1.msra.mxu0 0.0
    %1218 = vmatprep.subr.mxu0 0.0
    %1219 = vmatpush1.msra.mxu0 0.0
    %1220 = vmatprep.subr.mxu0 0.0
    %1221 = vmatpush1.msra.mxu0 0.0
    %1222 = vmatprep.subr.mxu0 0.0
    %1223 = vmatpush1.msra.mxu0 0.0
    %1224 = vmatprep.subr.mxu0 0.0
    %1225 = vmatpush1.msra.mxu0 0.0
    %1226 = vmatprep.subr.mxu0 0.0
    %1227 = vmatpush1.msra.mxu0 0.0
    %1228 = vmatprep.subr.mxu0 0.0
    %1229 = vmatpush1.msra.mxu0 0.0
    %1230 = vmatprep.subr.mxu0 0.0
    %1231 = vmatpush1.msra.mxu0 0.0
    %1232 = vmatprep.subr.mxu0 0.0
    %1233 = vmatpush1.msra.mxu0 0.0
    %1234 = vmatprep.subr.mxu0 0.0
    %1235 = vmatpush1.msra.mxu0 0.0
    %1236 = vmatprep.subr.mxu0 0.0
    %1237 = vmatpush1.msra.mxu0 0.0
    %1238 = vmatprep.subr.mxu0 0.0
    %1239 = vmatpush1.msra.mxu0 0.0
    %1240 = vmatprep.subr.mxu0 0.0
    %1241 = vmatpush1.msra.mxu0 0.0
    %1242 = vmatprep.subr.mxu0 0.0
    %1243 = vmatpush1.msra.mxu0 0.0
    %1244 = vmatprep.subr.mxu0 0.0
    %1245 = vmatpush1.msra.mxu0 0.0
    %1246 = vmatprep.subr.mxu0 0.0
    %1247 = vmatpush1.msra.mxu0 0.0
    %1248 = vmatprep.subr.mxu0 0.0
    %1249 = vmatpush1.msra.mxu0 0.0
    %1250 = vmatprep.subr.mxu0 0.0
    %1251 = vmatpush1.msra.mxu0 0.0
    %1252 = vmatprep.subr.mxu0 0.0
    %1253 = vmatpush1.msra.mxu0 0.0
    %1254 = vmatprep.subr.mxu0 0.0
    %1255 = vmatpush1.msra.mxu0 0.0
    %1256 = vmatprep.subr.mxu0 0.0
    %1257 = vmatpush1.msra.mxu0 0.0
    %1258 = vmatprep.subr.mxu0 0.0
    %1259 = vmatpush1.msra.mxu0 0.0
    %1260 = vmatprep.subr.mxu0 0.0
    %1261 = vmatpush1.msra.mxu0 0.0
    %1262 = vmatprep.subr.mxu0 0.0
    %1263 = vmatpush1.msra.mxu0 0.0
    %1264 = vmatprep.subr.mxu0 0.0
    %1265 = vmatpush1.msra.mxu0 0.0
    %1266 = vmatprep.subr.mxu0 0.0
    %1267 = vmatpush1.msra.mxu0 0.0
    %1268 = vmatprep.subr.mxu0 0.0
    %1269 = vmatpush1.msra.mxu0 0.0
    %1270 = vmatprep.subr.mxu0 0.0
    %1271 = vmatpush1.msra.mxu0 0.0
    %1272 = vmatprep.subr.mxu0 0.0
    %1273 = vmatpush1.msra.mxu0 0.0
    %1274 = vmatprep.subr.mxu0 0.0
    %1275 = vmatpush1.msra.mxu0 0.0
    %1276 = vmatprep.subr.mxu0 0.0
    %1277 = vmatpush1.msra.mxu0 0.0
    %1278 = vmatprep.mubr.f32.mxu0 0.0
    %v1279 = vand.u32 %v985, 4294901760
    %v1280 = vsub.f32 %v985, %v1279
    %v1281 = vand.u32 %v1280, 4294901760
    %1282 = vmatmul.mubr.f32.gmra.mrb[0].mxu0 %v1281
    %v1283 = vpop.f32.mrb[0].mxu0
    %v1284 = vadd.f32 %v1210, %v1283
    %v1285 = vpop.f32.mrb[0].mxu0
    %1286 = vdwg.mxu0
    %1287 = vmatprep.subr.mxu0 0.0
    %v1288 = vand.u32 %v67, 4294901760
    %v1289 = vsub.f32 %v67, %v1288
    %v1290 = vand.u32 %v1289, 4294901760
    %1291 = vmatpush1.msra.mxu0 %v1290
    %1292 = vmatprep.subr.mxu0 0.0
    %1293 = vmatpush1.msra.mxu0 0.0
    %1294 = vmatprep.subr.mxu0 0.0
    %1295 = vmatpush1.msra.mxu0 0.0
    %1296 = vmatprep.subr.mxu0 0.0
    %1297 = vmatpush1.msra.mxu0 0.0
    %1298 = vmatprep.subr.mxu0 0.0
    %1299 = vmatpush1.msra.mxu0 0.0
    %1300 = vmatprep.subr.mxu0 0.0
    %1301 = vmatpush1.msra.mxu0 0.0
    %1302 = vmatprep.subr.mxu0 0.0
    %1303 = vmatpush1.msra.mxu0 0.0
    %1304 = vmatprep.subr.mxu0 0.0
    %1305 = vmatpush1.msra.mxu0 0.0
    %1306 = vmatprep.subr.mxu0 0.0
    %1307 = vmatpush1.msra.mxu0 0.0
    %1308 = vmatprep.subr.mxu0 0.0
    %1309 = vmatpush1.msra.mxu0 0.0
    %1310 = vmatprep.subr.mxu0 0.0
    %1311 = vmatpush1.msra.mxu0 0.0
    %1312 = vmatprep.subr.mxu0 0.0
    %1313 = vmatpush1.msra.mxu0 0.0
    %1314 = vmatprep.subr.mxu0 0.0
    %1315 = vmatpush1.msra.mxu0 0.0
    %1316 = vmatprep.subr.mxu0 0.0
    %1317 = vmatpush1.msra.mxu0 0.0
    %1318 = vmatprep.subr.mxu0 0.0
    %1319 = vmatpush1.msra.mxu0 0.0
    %1320 = vmatprep.subr.mxu0 0.0
    %1321 = vmatpush1.msra.mxu0 0.0
    %1322 = vmatprep.subr.mxu0 0.0
    %1323 = vmatpush1.msra.mxu0 0.0
    %1324 = vmatprep.subr.mxu0 0.0
    %1325 = vmatpush1.msra.mxu0 0.0
    %1326 = vmatprep.subr.mxu0 0.0
    %1327 = vmatpush1.msra.mxu0 0.0
    %1328 = vmatprep.subr.mxu0 0.0
    %1329 = vmatpush1.msra.mxu0 0.0
    %1330 = vmatprep.subr.mxu0 0.0
    %1331 = vmatpush1.msra.mxu0 0.0
    %1332 = vmatprep.subr.mxu0 0.0
    %1333 = vmatpush1.msra.mxu0 0.0
    %1334 = vmatprep.subr.mxu0 0.0
    %1335 = vmatpush1.msra.mxu0 0.0
    %1336 = vmatprep.subr.mxu0 0.0
    %1337 = vmatpush1.msra.mxu0 0.0
    %1338 = vmatprep.subr.mxu0 0.0
    %1339 = vmatpush1.msra.mxu0 0.0
    %1340 = vmatprep.subr.mxu0 0.0
    %1341 = vmatpush1.msra.mxu0 0.0
    %1342 = vmatprep.subr.mxu0 0.0
    %1343 = vmatpush1.msra.mxu0 0.0
    %1344 = vmatprep.subr.mxu0 0.0
    %1345 = vmatpush1.msra.mxu0 0.0
    %1346 = vmatprep.subr.mxu0 0.0
    %1347 = vmatpush1.msra.mxu0 0.0
    %1348 = vmatprep.subr.mxu0 0.0
    %1349 = vmatpush1.msra.mxu0 0.0
    %1350 = vmatprep.subr.mxu0 0.0
    %1351 = vmatpush1.msra.mxu0 0.0
    %1352 = vmatprep.subr.mxu0 0.0
    %1353 = vmatpush1.msra.mxu0 0.0
    %1354 = vmatprep.mubr.f32.mxu0 0.0
    %v1355 = vand.u32 %v985, 4294901760
    %1356 = vmatmul.mubr.f32.gmra.mrb[0].mxu0 %v1355
    %v1357 = vpop.f32.mrb[0].mxu0
    %v1358 = vadd.f32 %v1284, %v1357
    %v1359 = vpop.f32.mrb[0].mxu0
    %1360 = vdwg.mxu0
    %1361 = vmatprep.subr.mxu0 0.0
    %v1362 = vand.u32 %v67, 4294901760
    %1363 = vmatpush1.msra.mxu0 %v1362
    %1364 = vmatprep.subr.mxu0 0.0
    %1365 = vmatpush1.msra.mxu0 0.0
    %1366 = vmatprep.subr.mxu0 0.0
    %1367 = vmatpush1.msra.mxu0 0.0
    %1368 = vmatprep.subr.mxu0 0.0
    %1369 = vmatpush1.msra.mxu0 0.0
    %1370 = vmatprep.subr.mxu0 0.0
    %1371 = vmatpush1.msra.mxu0 0.0
    %1372 = vmatprep.subr.mxu0 0.0
    %1373 = vmatpush1.msra.mxu0 0.0
    %1374 = vmatprep.subr.mxu0 0.0
    %1375 = vmatpush1.msra.mxu0 0.0
    %1376 = vmatprep.subr.mxu0 0.0
    %1377 = vmatpush1.msra.mxu0 0.0
    %1378 = vmatprep.subr.mxu0 0.0
    %1379 = vmatpush1.msra.mxu0 0.0
    %1380 = vmatprep.subr.mxu0 0.0
    %1381 = vmatpush1.msra.mxu0 0.0
    %1382 = vmatprep.subr.mxu0 0.0
    %1383 = vmatpush1.msra.mxu0 0.0
    %1384 = vmatprep.subr.mxu0 0.0
    %1385 = vmatpush1.msra.mxu0 0.0
    %1386 = vmatprep.subr.mxu0 0.0
    %1387 = vmatpush1.msra.mxu0 0.0
    %1388 = vmatprep.subr.mxu0 0.0
    %1389 = vmatpush1.msra.mxu0 0.0
    %1390 = vmatprep.subr.mxu0 0.0
    %1391 = vmatpush1.msra.mxu0 0.0
    %1392 = vmatprep.subr.mxu0 0.0
    %1393 = vmatpush1.msra.mxu0 0.0
    %1394 = vmatprep.subr.mxu0 0.0
    %1395 = vmatpush1.msra.mxu0 0.0
    %1396 = vmatprep.subr.mxu0 0.0
    %1397 = vmatpush1.msra.mxu0 0.0
    %1398 = vmatprep.subr.mxu0 0.0
    %1399 = vmatpush1.msra.mxu0 0.0
    %1400 = vmatprep.subr.mxu0 0.0
    %1401 = vmatpush1.msra.mxu0 0.0
    %1402 = vmatprep.subr.mxu0 0.0
    %1403 = vmatpush1.msra.mxu0 0.0
    %1404 = vmatprep.subr.mxu0 0.0
    %1405 = vmatpush1.msra.mxu0 0.0
    %1406 = vmatprep.subr.mxu0 0.0
    %1407 = vmatpush1.msra.mxu0 0.0
    %1408 = vmatprep.subr.mxu0 0.0
    %1409 = vmatpush1.msra.mxu0 0.0
    %1410 = vmatprep.subr.mxu0 0.0
    %1411 = vmatpush1.msra.mxu0 0.0
    %1412 = vmatprep.subr.mxu0 0.0
    %1413 = vmatpush1.msra.mxu0 0.0
    %1414 = vmatprep.subr.mxu0 0.0
    %1415 = vmatpush1.msra.mxu0 0.0
    %1416 = vmatprep.subr.mxu0 0.0
    %1417 = vmatpush1.msra.mxu0 0.0
    %1418 = vmatprep.subr.mxu0 0.0
    %1419 = vmatpush1.msra.mxu0 0.0
    %1420 = vmatprep.subr.mxu0 0.0
    %1421 = vmatpush1.msra.mxu0 0.0
    %1422 = vmatprep.subr.mxu0 0.0
    %1423 = vmatpush1.msra.mxu0 0.0
    %1424 = vmatprep.subr.mxu0 0.0
    %1425 = vmatpush1.msra.mxu0 0.0
    %1426 = vmatprep.mubr.f32.mxu0 0.0
    %v1427 = vand.u32 %v985, 4294901760
    %1428 = vmatmul.mubr.f32.gmra.mrb[0].mxu0 %v1427
    %v1429 = vpop.f32.mrb[0].mxu0
    %v1430 = vadd.f32 %v1358, %v1429
    %v1431 = vpop.f32.mrb[0].mxu0
    %1432 = vdwg.mxu0
    %v1433 = vadd.f32 %v979, %v1430
    %v1434 = vld [vmem:[%s2] sm:$0xff]
    %1436 = vset.pattern.permute.xlu0 0
    %1437 = vperm.xlu0 %1436, %v1434
    %v1438 = vpop.permute.xlu0 %1437
    %v1440 = vadd.f32 %v1433, %v1438
    %v1441 = vmax.f32 %v1440, 0.0
    %1442 = vrot.lane.b32.xlu0 %v1441, 4
    %v1443 = vpop.permute.xlu0 %1442
    %v1444 = vsel %vm72, %v1443, 0.0
    %v1445 = vld [vmem:[#allocation5] sm:$0xff]
    %1446 = vrot.lane.b32.xlu0 %v1441, 2
    %v1447 = vpop.permute.xlu0 %1446
    %v1448 = vsel %vm79, %v1447, 0.0
    %s1449 = scalar_lea.vmem [#allocation5], 8
    %v1450 = vld [vmem:[%s1449] sm:$0xff]
    %v1452 = vsel %vm83, %v1450, 0
    %1454 = vmatprep.subr.mxu0 0.0
    %v1455 = vand.u32 %v1448, 4294901760
    %1456 = vmatpush1.msra.mxu0 %v1455
    %1457 = vmatprep.subr.mxu0 0.0
    %1458 = vmatpush1.msra.mxu0 0.0
    %1459 = vmatprep.subr.mxu0 0.0
    %1460 = vmatpush1.msra.mxu0 0.0
    %1461 = vmatprep.subr.mxu0 0.0
    %1462 = vmatpush1.msra.mxu0 0.0
    %1463 = vmatprep.subr.mxu0 0.0
    %1464 = vmatpush1.msra.mxu0 0.0
    %1465 = vmatprep.subr.mxu0 0.0
    %1466 = vmatpush1.msra.mxu0 0.0
    %1467 = vmatprep.subr.mxu0 0.0
    %1468 = vmatpush1.msra.mxu0 0.0
    %1469 = vmatprep.subr.mxu0 0.0
    %1470 = vmatpush1.msra.mxu0 0.0
    %1471 = vmatprep.subr.mxu0 0.0
    %1472 = vmatpush1.msra.mxu0 0.0
    %1473 = vmatprep.subr.mxu0 0.0
    %1474 = vmatpush1.msra.mxu0 0.0
    %1475 = vmatprep.subr.mxu0 0.0
    %1476 = vmatpush1.msra.mxu0 0.0
    %1477 = vmatprep.subr.mxu0 0.0
    %1478 = vmatpush1.msra.mxu0 0.0
    %1479 = vmatprep.subr.mxu0 0.0
    %1480 = vmatpush1.msra.mxu0 0.0
    %1481 = vmatprep.subr.mxu0 0.0
    %1482 = vmatpush1.msra.mxu0 0.0
    %1483 = vmatprep.subr.mxu0 0.0
    %1484 = vmatpush1.msra.mxu0 0.0
    %1485 = vmatprep.subr.mxu0 0.0
    %1486 = vmatpush1.msra.mxu0 0.0
    %1487 = vmatprep.subr.mxu0 0.0
    %1488 = vmatpush1.msra.mxu0 0.0
    %1489 = vmatprep.subr.mxu0 0.0
    %1490 = vmatpush1.msra.mxu0 0.0
    %1491 = vmatprep.subr.mxu0 0.0
    %1492 = vmatpush1.msra.mxu0 0.0
    %1493 = vmatprep.subr.mxu0 0.0
    %1494 = vmatpush1.msra.mxu0 0.0
    %1495 = vmatprep.subr.mxu0 0.0
    %1496 = vmatpush1.msra.mxu0 0.0
    %1497 = vmatprep.subr.mxu0 0.0
    %1498 = vmatpush1.msra.mxu0 0.0
    %1499 = vmatprep.subr.mxu0 0.0
    %1500 = vmatpush1.msra.mxu0 0.0
    %1501 = vmatprep.subr.mxu0 0.0
    %1502 = vmatpush1.msra.mxu0 0.0
    %1503 = vmatprep.subr.mxu0 0.0
    %1504 = vmatpush1.msra.mxu0 0.0
    %1505 = vmatprep.subr.mxu0 0.0
    %1506 = vmatpush1.msra.mxu0 0.0
    %1507 = vmatprep.subr.mxu0 0.0
    %1508 = vmatpush1.msra.mxu0 0.0
    %1509 = vmatprep.subr.mxu0 0.0
    %1510 = vmatpush1.msra.mxu0 0.0
    %1511 = vmatprep.subr.mxu0 0.0
    %1512 = vmatpush1.msra.mxu0 0.0
    %1513 = vmatprep.subr.mxu0 0.0
    %1514 = vmatpush1.msra.mxu0 0.0
    %1515 = vmatprep.subr.mxu0 0.0
    %1516 = vmatpush1.msra.mxu0 0.0
    %1517 = vmatprep.subr.mxu0 0.0
    %1518 = vmatpush1.msra.mxu0 0.0
    %1519 = vmatprep.mubr.f32.mxu0 0.0
    %v1520 = vand.u32 %v1452, 4294901760
    %v1521 = vsub.f32 %v1452, %v1520
    %v1522 = vand.u32 %v1521, 4294901760
    %v1523 = vsub.f32 %v1521, %v1522
    %v1524 = vand.u32 %v1523, 4294901760
    %1525 = vmatmul.mubr.f32.gmra.mrb[0].mxu0 %v1524
    %v1526 = vpop.f32.mrb[0].mxu0
    %v1527 = vadd.f32 0.0, %v1526
    %v1528 = vpop.f32.mrb[0].mxu0
    %1529 = vdwg.mxu0
    %1530 = vmatprep.subr.mxu0 0.0
    %v1531 = vand.u32 %v1448, 4294901760
    %v1532 = vsub.f32 %v1448, %v1531
    %v1533 = vand.u32 %v1532, 4294901760
    %v1534 = vsub.f32 %v1532, %v1533
    %v1535 = vand.u32 %v1534, 4294901760
    %1536 = vmatpush1.msra.mxu0 %v1535
    %1537 = vmatprep.subr.mxu0 0.0
    %1538 = vmatpush1.msra.mxu0 0.0
    %1539 = vmatprep.subr.mxu0 0.0
    %1540 = vmatpush1.msra.mxu0 0.0
    %1541 = vmatprep.subr.mxu0 0.0
    %1542 = vmatpush1.msra.mxu0 0.0
    %1543 = vmatprep.subr.mxu0 0.0
    %1544 = vmatpush1.msra.mxu0 0.0
    %1545 = vmatprep.subr.mxu0 0.0
    %1546 = vmatpush1.msra.mxu0 0.0
    %1547 = vmatprep.subr.mxu0 0.0
    %1548 = vmatpush1.msra.mxu0 0.0
    %1549 = vmatprep.subr.mxu0 0.0
    %1550 = vmatpush1.msra.mxu0 0.0
    %1551 = vmatprep.subr.mxu0 0.0
    %1552 = vmatpush1.msra.mxu0 0.0
    %1553 = vmatprep.subr.mxu0 0.0
    %1554 = vmatpush1.msra.mxu0 0.0
    %1555 = vmatprep.subr.mxu0 0.0
    %1556 = vmatpush1.msra.mxu0 0.0
    %1557 = vmatprep.subr.mxu0 0.0
    %1558 = vmatpush1.msra.mxu0 0.0
    %1559 = vmatprep.subr.mxu0 0.0
    %1560 = vmatpush1.msra.mxu0 0.0
    %1561 = vmatprep.subr.mxu0 0.0
    %1562 = vmatpush1.msra.mxu0 0.0
    %1563 = vmatprep.subr.mxu0 0.0
    %1564 = vmatpush1.msra.mxu0 0.0
    %1565 = vmatprep.subr.mxu0 0.0
    %1566 = vmatpush1.msra.mxu0 0.0
    %1567 = vmatprep.subr.mxu0 0.0
    %1568 = vmatpush1.msra.mxu0 0.0
    %1569 = vmatprep.subr.mxu0 0.0
    %1570 = vmatpush1.msra.mxu0 0.0
    %1571 = vmatprep.subr.mxu0 0.0
    %1572 = vmatpush1.msra.mxu0 0.0
    %1573 = vmatprep.subr.mxu0 0.0
    %1574 = vmatpush1.msra.mxu0 0.0
    %1575 = vmatprep.subr.mxu0 0.0
    %1576 = vmatpush1.msra.mxu0 0.0
    %1577 = vmatprep.subr.mxu0 0.0
    %1578 = vmatpush1.msra.mxu0 0.0
    %1579 = vmatprep.subr.mxu0 0.0
    %1580 = vmatpush1.msra.mxu0 0.0
    %1581 = vmatprep.subr.mxu0 0.0
    %1582 = vmatpush1.msra.mxu0 0.0
    %1583 = vmatprep.subr.mxu0 0.0
    %1584 = vmatpush1.msra.mxu0 0.0
    %1585 = vmatprep.subr.mxu0 0.0
    %1586 = vmatpush1.msra.mxu0 0.0
    %1587 = vmatprep.subr.mxu0 0.0
    %1588 = vmatpush1.msra.mxu0 0.0
    %1589 = vmatprep.subr.mxu0 0.0
    %1590 = vmatpush1.msra.mxu0 0.0
    %1591 = vmatprep.subr.mxu0 0.0
    %1592 = vmatpush1.msra.mxu0 0.0
    %1593 = vmatprep.subr.mxu0 0.0
    %1594 = vmatpush1.msra.mxu0 0.0
    %1595 = vmatprep.subr.mxu0 0.0
    %1596 = vmatpush1.msra.mxu0 0.0
    %1597 = vmatprep.subr.mxu0 0.0
    %1598 = vmatpush1.msra.mxu0 0.0
    %1599 = vmatprep.mubr.f32.mxu0 0.0
    %v1600 = vand.u32 %v1452, 4294901760
    %1601 = vmatmul.mubr.f32.gmra.mrb[0].mxu0 %v1600
    %v1602 = vpop.f32.mrb[0].mxu0
    %v1603 = vadd.f32 %v1527, %v1602
    %v1604 = vpop.f32.mrb[0].mxu0
    %1605 = vdwg.mxu0
    %1606 = vmatprep.subr.mxu0 0.0
    %v1607 = vand.u32 %v1448, 4294901760
    %v1608 = vsub.f32 %v1448, %v1607
    %1609 = vmatpush1.msra.mxu0 %v1608
    %1610 = vmatprep.subr.mxu0 0.0
    %1611 = vmatpush1.msra.mxu0 0.0
    %1612 = vmatprep.subr.mxu0 0.0
    %1613 = vmatpush1.msra.mxu0 0.0
    %1614 = vmatprep.subr.mxu0 0.0
    %1615 = vmatpush1.msra.mxu0 0.0
    %1616 = vmatprep.subr.mxu0 0.0
    %1617 = vmatpush1.msra.mxu0 0.0
    %1618 = vmatprep.subr.mxu0 0.0
    %1619 = vmatpush1.msra.mxu0 0.0
    %1620 = vmatprep.subr.mxu0 0.0
    %1621 = vmatpush1.msra.mxu0 0.0
    %1622 = vmatprep.subr.mxu0 0.0
    %1623 = vmatpush1.msra.mxu0 0.0
    %1624 = vmatprep.subr.mxu0 0.0
    %1625 = vmatpush1.msra.mxu0 0.0
    %1626 = vmatprep.subr.mxu0 0.0
    %1627 = vmatpush1.msra.mxu0 0.0
    %1628 = vmatprep.subr.mxu0 0.0
    %1629 = vmatpush1.msra.mxu0 0.0
    %1630 = vmatprep.subr.mxu0 0.0
    %1631 = vmatpush1.msra.mxu0 0.0
    %1632 = vmatprep.subr.mxu0 0.0
    %1633 = vmatpush1.msra.mxu0 0.0
    %1634 = vmatprep.subr.mxu0 0.0
    %1635 = vmatpush1.msra.mxu0 0.0
    %1636 = vmatprep.subr.mxu0 0.0
    %1637 = vmatpush1.msra.mxu0 0.0
    %1638 = vmatprep.subr.mxu0 0.0
    %1639 = vmatpush1.msra.mxu0 0.0
    %1640 = vmatprep.subr.mxu0 0.0
    %1641 = vmatpush1.msra.mxu0 0.0
    %1642 = vmatprep.subr.mxu0 0.0
    %1643 = vmatpush1.msra.mxu0 0.0
    %1644 = vmatprep.subr.mxu0 0.0
    %1645 = vmatpush1.msra.mxu0 0.0
    %1646 = vmatprep.subr.mxu0 0.0
    %1647 = vmatpush1.msra.mxu0 0.0
    %1648 = vmatprep.subr.mxu0 0.0
    %1649 = vmatpush1.msra.mxu0 0.0
    %1650 = vmatprep.subr.mxu0 0.0
    %1651 = vmatpush1.msra.mxu0 0.0
    %1652 = vmatprep.subr.mxu0 0.0
    %1653 = vmatpush1.msra.mxu0 0.0
    %1654 = vmatprep.subr.mxu0 0.0
    %1655 = vmatpush1.msra.mxu0 0.0
    %1656 = vmatprep.subr.mxu0 0.0
    %1657 = vmatpush1.msra.mxu0 0.0
    %1658 = vmatprep.subr.mxu0 0.0
    %1659 = vmatpush1.msra.mxu0 0.0
    %1660 = vmatprep.subr.mxu0 0.0
    %1661 = vmatpush1.msra.mxu0 0.0
    %1662 = vmatprep.subr.mxu0 0.0
    %1663 = vmatpush1.msra.mxu0 0.0
    %1664 = vmatprep.subr.mxu0 0.0
    %1665 = vmatpush1.msra.mxu0 0.0
    %1666 = vmatprep.subr.mxu0 0.0
    %1667 = vmatpush1.msra.mxu0 0.0
    %1668 = vmatprep.subr.mxu0 0.0
    %1669 = vmatpush1.msra.mxu0 0.0
    %1670 = vmatprep.subr.mxu0 0.0
    %1671 = vmatpush1.msra.mxu0 0.0
    %1672 = vmatprep.mubr.f32.mxu0 0.0
    %v1673 = vand.u32 %v1452, 4294901760
    %v1674 = vsub.f32 %v1452, %v1673
    %1675 = vmatmul.mubr.f32.gmra.mrb[0].mxu0 %v1674
    %v1676 = vpop.f32.mrb[0].mxu0
    %v1677 = vadd.f32 %v1603, %v1676
    %v1678 = vpop.f32.mrb[0].mxu0
    %1679 = vdwg.mxu0
    %1680 = vmatprep.subr.mxu0 0.0
    %v1681 = vand.u32 %v1448, 4294901760
    %1682 = vmatpush1.msra.mxu0 %v1681
    %1683 = vmatprep.subr.mxu0 0.0
    %1684 = vmatpush1.msra.mxu0 0.0
    %1685 = vmatprep.subr.mxu0 0.0
    %1686 = vmatpush1.msra.mxu0 0.0
    %1687 = vmatprep.subr.mxu0 0.0
    %1688 = vmatpush1.msra.mxu0 0.0
    %1689 = vmatprep.subr.mxu0 0.0
    %1690 = vmatpush1.msra.mxu0 0.0
    %1691 = vmatprep.subr.mxu0 0.0
    %1692 = vmatpush1.msra.mxu0 0.0
    %1693 = vmatprep.subr.mxu0 0.0
    %1694 = vmatpush1.msra.mxu0 0.0
    %1695 = vmatprep.subr.mxu0 0.0
    %1696 = vmatpush1.msra.mxu0 0.0
    %1697 = vmatprep.subr.mxu0 0.0
    %1698 = vmatpush1.msra.mxu0 0.0
    %1699 = vmatprep.subr.mxu0 0.0
    %1700 = vmatpush1.msra.mxu0 0.0
    %1701 = vmatprep.subr.mxu0 0.0
    %1702 = vmatpush1.msra.mxu0 0.0
    %1703 = vmatprep.subr.mxu0 0.0
    %1704 = vmatpush1.msra.mxu0 0.0
    %1705 = vmatprep.subr.mxu0 0.0
    %1706 = vmatpush1.msra.mxu0 0.0
    %1707 = vmatprep.subr.mxu0 0.0
    %1708 = vmatpush1.msra.mxu0 0.0
    %1709 = vmatprep.subr.mxu0 0.0
    %1710 = vmatpush1.msra.mxu0 0.0
    %1711 = vmatprep.subr.mxu0 0.0
    %1712 = vmatpush1.msra.mxu0 0.0
    %1713 = vmatprep.subr.mxu0 0.0
    %1714 = vmatpush1.msra.mxu0 0.0
    %1715 = vmatprep.subr.mxu0 0.0
    %1716 = vmatpush1.msra.mxu0 0.0
    %1717 = vmatprep.subr.mxu0 0.0
    %1718 = vmatpush1.msra.mxu0 0.0
    %1719 = vmatprep.subr.mxu0 0.0
    %1720 = vmatpush1.msra.mxu0 0.0
    %1721 = vmatprep.subr.mxu0 0.0
    %1722 = vmatpush1.msra.mxu0 0.0
    %1723 = vmatprep.subr.mxu0 0.0
    %1724 = vmatpush1.msra.mxu0 0.0
    %1725 = vmatprep.subr.mxu0 0.0
    %1726 = vmatpush1.msra.mxu0 0.0
    %1727 = vmatprep.subr.mxu0 0.0
    %1728 = vmatpush1.msra.mxu0 0.0
    %1729 = vmatprep.subr.mxu0 0.0
    %1730 = vmatpush1.msra.mxu0 0.0
    %1731 = vmatprep.subr.mxu0 0.0
    %1732 = vmatpush1.msra.mxu0 0.0
    %1733 = vmatprep.subr.mxu0 0.0
    %1734 = vmatpush1.msra.mxu0 0.0
    %1735 = vmatprep.subr.mxu0 0.0
    %1736 = vmatpush1.msra.mxu0 0.0
    %1737 = vmatprep.subr.mxu0 0.0
    %1738 = vmatpush1.msra.mxu0 0.0
    %1739 = vmatprep.subr.mxu0 0.0
    %1740 = vmatpush1.msra.mxu0 0.0
    %1741 = vmatprep.subr.mxu0 0.0
    %1742 = vmatpush1.msra.mxu0 0.0
    %1743 = vmatprep.subr.mxu0 0.0
    %1744 = vmatpush1.msra.mxu0 0.0
    %1745 = vmatprep.mubr.f32.mxu0 0.0
    %v1746 = vand.u32 %v1452, 4294901760
    %v1747 = vsub.f32 %v1452, %v1746
    %v1748 = vand.u32 %v1747, 4294901760
    %1749 = vmatmul.mubr.f32.gmra.mrb[0].mxu0 %v1748
    %v1750 = vpop.f32.mrb[0].mxu0
    %v1751 = vadd.f32 %v1677, %v1750
    %v1752 = vpop.f32.mrb[0].mxu0
    %1753 = vdwg.mxu0
    %1754 = vmatprep.subr.mxu0 0.0
    %v1755 = vand.u32 %v1448, 4294901760
    %v1756 = vsub.f32 %v1448, %v1755
    %v1757 = vand.u32 %v1756, 4294901760
    %1758 = vmatpush1.msra.mxu0 %v1757
    %1759 = vmatprep.subr.mxu0 0.0
    %1760 = vmatpush1.msra.mxu0 0.0
    %1761 = vmatprep.subr.mxu0 0.0
    %1762 = vmatpush1.msra.mxu0 0.0
    %1763 = vmatprep.subr.mxu0 0.0
    %1764 = vmatpush1.msra.mxu0 0.0
    %1765 = vmatprep.subr.mxu0 0.0
    %1766 = vmatpush1.msra.mxu0 0.0
    %1767 = vmatprep.subr.mxu0 0.0
    %1768 = vmatpush1.msra.mxu0 0.0
    %1769 = vmatprep.subr.mxu0 0.0
    %1770 = vmatpush1.msra.mxu0 0.0
    %1771 = vmatprep.subr.mxu0 0.0
    %1772 = vmatpush1.msra.mxu0 0.0
    %1773 = vmatprep.subr.mxu0 0.0
    %1774 = vmatpush1.msra.mxu0 0.0
    %1775 = vmatprep.subr.mxu0 0.0
    %1776 = vmatpush1.msra.mxu0 0.0
    %1777 = vmatprep.subr.mxu0 0.0
    %1778 = vmatpush1.msra.mxu0 0.0
    %1779 = vmatprep.subr.mxu0 0.0
    %1780 = vmatpush1.msra.mxu0 0.0
    %1781 = vmatprep.subr.mxu0 0.0
    %1782 = vmatpush1.msra.mxu0 0.0
    %1783 = vmatprep.subr.mxu0 0.0
    %1784 = vmatpush1.msra.mxu0 0.0
    %1785 = vmatprep.subr.mxu0 0.0
    %1786 = vmatpush1.msra.mxu0 0.0
    %1787 = vmatprep.subr.mxu0 0.0
    %1788 = vmatpush1.msra.mxu0 0.0
    %1789 = vmatprep.subr.mxu0 0.0
    %1790 = vmatpush1.msra.mxu0 0.0
    %1791 = vmatprep.subr.mxu0 0.0
    %1792 = vmatpush1.msra.mxu0 0.0
    %1793 = vmatprep.subr.mxu0 0.0
    %1794 = vmatpush1.msra.mxu0 0.0
    %1795 = vmatprep.subr.mxu0 0.0
    %1796 = vmatpush1.msra.mxu0 0.0
    %1797 = vmatprep.subr.mxu0 0.0
    %1798 = vmatpush1.msra.mxu0 0.0
    %1799 = vmatprep.subr.mxu0 0.0
    %1800 = vmatpush1.msra.mxu0 0.0
    %1801 = vmatprep.subr.mxu0 0.0
    %1802 = vmatpush1.msra.mxu0 0.0
    %1803 = vmatprep.subr.mxu0 0.0
    %1804 = vmatpush1.msra.mxu0 0.0
    %1805 = vmatprep.subr.mxu0 0.0
    %1806 = vmatpush1.msra.mxu0 0.0
    %1807 = vmatprep.subr.mxu0 0.0
    %1808 = vmatpush1.msra.mxu0 0.0
    %1809 = vmatprep.subr.mxu0 0.0
    %1810 = vmatpush1.msra.mxu0 0.0
    %1811 = vmatprep.subr.mxu0 0.0
    %1812 = vmatpush1.msra.mxu0 0.0
    %1813 = vmatprep.subr.mxu0 0.0
    %1814 = vmatpush1.msra.mxu0 0.0
    %1815 = vmatprep.subr.mxu0 0.0
    %1816 = vmatpush1.msra.mxu0 0.0
    %1817 = vmatprep.subr.mxu0 0.0
    %1818 = vmatpush1.msra.mxu0 0.0
    %1819 = vmatprep.subr.mxu0 0.0
    %1820 = vmatpush1.msra.mxu0 0.0
    %1821 = vmatprep.mubr.f32.mxu0 0.0
    %v1822 = vand.u32 %v1452, 4294901760
    %1823 = vmatmul.mubr.f32.gmra.mrb[0].mxu0 %v1822
    %v1824 = vpop.f32.mrb[0].mxu0
    %v1825 = vadd.f32 %v1751, %v1824
    %v1826 = vpop.f32.mrb[0].mxu0
    %1827 = vdwg.mxu0
    %1828 = vmatprep.subr.mxu0 0.0
    %v1829 = vand.u32 %v1448, 4294901760
    %1830 = vmatpush1.msra.mxu0 %v1829
    %1831 = vmatprep.subr.mxu0 0.0
    %1832 = vmatpush1.msra.mxu0 0.0
    %1833 = vmatprep.subr.mxu0 0.0
    %1834 = vmatpush1.msra.mxu0 0.0
    %1835 = vmatprep.subr.mxu0 0.0
    %1836 = vmatpush1.msra.mxu0 0.0
    %1837 = vmatprep.subr.mxu0 0.0
    %1838 = vmatpush1.msra.mxu0 0.0
    %1839 = vmatprep.subr.mxu0 0.0
    %1840 = vmatpush1.msra.mxu0 0.0
    %1841 = vmatprep.subr.mxu0 0.0
    %1842 = vmatpush1.msra.mxu0 0.0
    %1843 = vmatprep.subr.mxu0 0.0
    %1844 = vmatpush1.msra.mxu0 0.0
    %1845 = vmatprep.subr.mxu0 0.0
    %1846 = vmatpush1.msra.mxu0 0.0
    %1847 = vmatprep.subr.mxu0 0.0
    %1848 = vmatpush1.msra.mxu0 0.0
    %1849 = vmatprep.subr.mxu0 0.0
    %1850 = vmatpush1.msra.mxu0 0.0
    %1851 = vmatprep.subr.mxu0 0.0
    %1852 = vmatpush1.msra.mxu0 0.0
    %1853 = vmatprep.subr.mxu0 0.0
    %1854 = vmatpush1.msra.mxu0 0.0
    %1855 = vmatprep.subr.mxu0 0.0
    %1856 = vmatpush1.msra.mxu0 0.0
    %1857 = vmatprep.subr.mxu0 0.0
    %1858 = vmatpush1.msra.mxu0 0.0
    %1859 = vmatprep.subr.mxu0 0.0
    %1860 = vmatpush1.msra.mxu0 0.0
    %1861 = vmatprep.subr.mxu0 0.0
    %1862 = vmatpush1.msra.mxu0 0.0
    %1863 = vmatprep.subr.mxu0 0.0
    %1864 = vmatpush1.msra.mxu0 0.0
    %1865 = vmatprep.subr.mxu0 0.0
    %1866 = vmatpush1.msra.mxu0 0.0
    %1867 = vmatprep.subr.mxu0 0.0
    %1868 = vmatpush1.msra.mxu0 0.0
    %1869 = vmatprep.subr.mxu0 0.0
    %1870 = vmatpush1.msra.mxu0 0.0
    %1871 = vmatprep.subr.mxu0 0.0
    %1872 = vmatpush1.msra.mxu0 0.0
    %1873 = vmatprep.subr.mxu0 0.0
    %1874 = vmatpush1.msra.mxu0 0.0
    %1875 = vmatprep.subr.mxu0 0.0
    %1876 = vmatpush1.msra.mxu0 0.0
    %1877 = vmatprep.subr.mxu0 0.0
    %1878 = vmatpush1.msra.mxu0 0.0
    %1879 = vmatprep.subr.mxu0 0.0
    %1880 = vmatpush1.msra.mxu0 0.0
    %1881 = vmatprep.subr.mxu0 0.0
    %1882 = vmatpush1.msra.mxu0 0.0
    %1883 = vmatprep.subr.mxu0 0.0
    %1884 = vmatpush1.msra.mxu0 0.0
    %1885 = vmatprep.subr.mxu0 0.0
    %1886 = vmatpush1.msra.mxu0 0.0
    %1887 = vmatprep.subr.mxu0 0.0
    %1888 = vmatpush1.msra.mxu0 0.0
    %1889 = vmatprep.subr.mxu0 0.0
    %1890 = vmatpush1.msra.mxu0 0.0
    %1891 = vmatprep.subr.mxu0 0.0
    %1892 = vmatpush1.msra.mxu0 0.0
    %1893 = vmatprep.mubr.f32.mxu0 0.0
    %v1894 = vand.u32 %v1452, 4294901760
    %1895 = vmatmul.mubr.f32.gmra.mrb[0].mxu0 %v1894
    %v1896 = vpop.f32.mrb[0].mxu0
    %v1897 = vadd.f32 %v1825, %v1896
    %v1898 = vpop.f32.mrb[0].mxu0
    %1899 = vdwg.mxu0
    %v1901 = vsel %vm83, %v1445, 0
    %1903 = vmatprep.subr.mxu0 0.0
    %v1904 = vand.u32 %v1444, 4294901760
    %1905 = vmatpush1.msra.mxu0 %v1904
    %1906 = vmatprep.subr.mxu0 0.0
    %1907 = vmatpush1.msra.mxu0 0.0
    %1908 = vmatprep.subr.mxu0 0.0
    %1909 = vmatpush1.msra.mxu0 0.0
    %1910 = vmatprep.subr.mxu0 0.0
    %1911 = vmatpush1.msra.mxu0 0.0
    %1912 = vmatprep.subr.mxu0 0.0
    %1913 = vmatpush1.msra.mxu0 0.0
    %1914 = vmatprep.subr.mxu0 0.0
    %1915 = vmatpush1.msra.mxu0 0.0
    %1916 = vmatprep.subr.mxu0 0.0
    %1917 = vmatpush1.msra.mxu0 0.0
    %1918 = vmatprep.subr.mxu0 0.0
    %1919 = vmatpush1.msra.mxu0 0.0
    %1920 = vmatprep.subr.mxu0 0.0
    %1921 = vmatpush1.msra.mxu0 0.0
    %1922 = vmatprep.subr.mxu0 0.0
    %1923 = vmatpush1.msra.mxu0 0.0
    %1924 = vmatprep.subr.mxu0 0.0
    %1925 = vmatpush1.msra.mxu0 0.0
    %1926 = vmatprep.subr.mxu0 0.0
    %1927 = vmatpush1.msra.mxu0 0.0
    %1928 = vmatprep.subr.mxu0 0.0
    %1929 = vmatpush1.msra.mxu0 0.0
    %1930 = vmatprep.subr.mxu0 0.0
    %1931 = vmatpush1.msra.mxu0 0.0
    %1932 = vmatprep.subr.mxu0 0.0
    %1933 = vmatpush1.msra.mxu0 0.0
    %1934 = vmatprep.subr.mxu0 0.0
    %1935 = vmatpush1.msra.mxu0 0.0
    %1936 = vmatprep.subr.mxu0 0.0
    %1937 = vmatpush1.msra.mxu0 0.0
    %1938 = vmatprep.subr.mxu0 0.0
    %1939 = vmatpush1.msra.mxu0 0.0
    %1940 = vmatprep.subr.mxu0 0.0
    %1941 = vmatpush1.msra.mxu0 0.0
    %1942 = vmatprep.subr.mxu0 0.0
    %1943 = vmatpush1.msra.mxu0 0.0
    %1944 = vmatprep.subr.mxu0 0.0
    %1945 = vmatpush1.msra.mxu0 0.0
    %1946 = vmatprep.subr.mxu0 0.0
    %1947 = vmatpush1.msra.mxu0 0.0
    %1948 = vmatprep.subr.mxu0 0.0
    %1949 = vmatpush1.msra.mxu0 0.0
    %1950 = vmatprep.subr.mxu0 0.0
    %1951 = vmatpush1.msra.mxu0 0.0
    %1952 = vmatprep.subr.mxu0 0.0
    %1953 = vmatpush1.msra.mxu0 0.0
    %1954 = vmatprep.subr.mxu0 0.0
    %1955 = vmatpush1.msra.mxu0 0.0
    %1956 = vmatprep.subr.mxu0 0.0
    %1957 = vmatpush1.msra.mxu0 0.0
    %1958 = vmatprep.subr.mxu0 0.0
    %1959 = vmatpush1.msra.mxu0 0.0
    %1960 = vmatprep.subr.mxu0 0.0
    %1961 = vmatpush1.msra.mxu0 0.0
    %1962 = vmatprep.subr.mxu0 0.0
    %1963 = vmatpush1.msra.mxu0 0.0
    %1964 = vmatprep.subr.mxu0 0.0
    %1965 = vmatpush1.msra.mxu0 0.0
    %1966 = vmatprep.subr.mxu0 0.0
    %1967 = vmatpush1.msra.mxu0 0.0
    %1968 = vmatprep.mubr.f32.mxu0 0.0
    %v1969 = vand.u32 %v1901, 4294901760
    %v1970 = vsub.f32 %v1901, %v1969
    %v1971 = vand.u32 %v1970, 4294901760
    %v1972 = vsub.f32 %v1970, %v1971
    %v1973 = vand.u32 %v1972, 4294901760
    %1974 = vmatmul.mubr.f32.gmra.mrb[0].mxu0 %v1973
    %v1975 = vpop.f32.mrb[0].mxu0
    %v1976 = vadd.f32 %v1897, %v1975
    %v1977 = vpop.f32.mrb[0].mxu0
    %1978 = vdwg.mxu0
    %1979 = vmatprep.subr.mxu0 0.0
    %v1980 = vand.u32 %v1444, 4294901760
    %v1981 = vsub.f32 %v1444, %v1980
    %v1982 = vand.u32 %v1981, 4294901760
    %v1983 = vsub.f32 %v1981, %v1982
    %v1984 = vand.u32 %v1983, 4294901760
    %1985 = vmatpush1.msra.mxu0 %v1984
    %1986 = vmatprep.subr.mxu0 0.0
    %1987 = vmatpush1.msra.mxu0 0.0
    %1988 = vmatprep.subr.mxu0 0.0
    %1989 = vmatpush1.msra.mxu0 0.0
    %1990 = vmatprep.subr.mxu0 0.0
    %1991 = vmatpush1.msra.mxu0 0.0
    %1992 = vmatprep.subr.mxu0 0.0
    %1993 = vmatpush1.msra.mxu0 0.0
    %1994 = vmatprep.subr.mxu0 0.0
    %1995 = vmatpush1.msra.mxu0 0.0
    %1996 = vmatprep.subr.mxu0 0.0
    %1997 = vmatpush1.msra.mxu0 0.0
    %1998 = vmatprep.subr.mxu0 0.0
    %1999 = vmatpush1.msra.mxu0 0.0
    %2000 = vmatprep.subr.mxu0 0.0
    %2001 = vmatpush1.msra.mxu0 0.0
    %2002 = vmatprep.subr.mxu0 0.0
    %2003 = vmatpush1.msra.mxu0 0.0
    %2004 = vmatprep.subr.mxu0 0.0
    %2005 = vmatpush1.msra.mxu0 0.0
    %2006 = vmatprep.subr.mxu0 0.0
    %2007 = vmatpush1.msra.mxu0 0.0
    %2008 = vmatprep.subr.mxu0 0.0
    %2009 = vmatpush1.msra.mxu0 0.0
    %2010 = vmatprep.subr.mxu0 0.0
    %2011 = vmatpush1.msra.mxu0 0.0
    %2012 = vmatprep.subr.mxu0 0.0
    %2013 = vmatpush1.msra.mxu0 0.0
    %2014 = vmatprep.subr.mxu0 0.0
    %2015 = vmatpush1.msra.mxu0 0.0
    %2016 = vmatprep.subr.mxu0 0.0
    %2017 = vmatpush1.msra.mxu0 0.0
    %2018 = vmatprep.subr.mxu0 0.0
    %2019 = vmatpush1.msra.mxu0 0.0
    %2020 = vmatprep.subr.mxu0 0.0
    %2021 = vmatpush1.msra.mxu0 0.0
    %2022 = vmatprep.subr.mxu0 0.0
    %2023 = vmatpush1.msra.mxu0 0.0
    %2024 = vmatprep.subr.mxu0 0.0
    %2025 = vmatpush1.msra.mxu0 0.0
    %2026 = vmatprep.subr.mxu0 0.0
    %2027 = vmatpush1.msra.mxu0 0.0
    %2028 = vmatprep.subr.mxu0 0.0
    %2029 = vmatpush1.msra.mxu0 0.0
    %2030 = vmatprep.subr.mxu0 0.0
    %2031 = vmatpush1.msra.mxu0 0.0
    %2032 = vmatprep.subr.mxu0 0.0
    %2033 = vmatpush1.msra.mxu0 0.0
    %2034 = vmatprep.subr.mxu0 0.0
    %2035 = vmatpush1.msra.mxu0 0.0
    %2036 = vmatprep.subr.mxu0 0.0
    %2037 = vmatpush1.msra.mxu0 0.0
    %2038 = vmatprep.subr.mxu0 0.0
    %2039 = vmatpush1.msra.mxu0 0.0
    %2040 = vmatprep.subr.mxu0 0.0
    %2041 = vmatpush1.msra.mxu0 0.0
    %2042 = vmatprep.subr.mxu0 0.0
    %2043 = vmatpush1.msra.mxu0 0.0
    %2044 = vmatprep.subr.mxu0 0.0
    %2045 = vmatpush1.msra.mxu0 0.0
    %2046 = vmatprep.subr.mxu0 0.0
    %2047 = vmatpush1.msra.mxu0 0.0
    %2048 = vmatprep.mubr.f32.mxu0 0.0
    %v2049 = vand.u32 %v1901, 4294901760
    %2050 = vmatmul.mubr.f32.gmra.mrb[0].mxu0 %v2049
    %v2051 = vpop.f32.mrb[0].mxu0
    %v2052 = vadd.f32 %v1976, %v2051
    %v2053 = vpop.f32.mrb[0].mxu0
    %2054 = vdwg.mxu0
    %2055 = vmatprep.subr.mxu0 0.0
    %v2056 = vand.u32 %v1444, 4294901760
    %v2057 = vsub.f32 %v1444, %v2056
    %2058 = vmatpush1.msra.mxu0 %v2057
    %2059 = vmatprep.subr.mxu0 0.0
    %2060 = vmatpush1.msra.mxu0 0.0
    %2061 = vmatprep.subr.mxu0 0.0
    %2062 = vmatpush1.msra.mxu0 0.0
    %2063 = vmatprep.subr.mxu0 0.0
    %2064 = vmatpush1.msra.mxu0 0.0
    %2065 = vmatprep.subr.mxu0 0.0
    %2066 = vmatpush1.msra.mxu0 0.0
    %2067 = vmatprep.subr.mxu0 0.0
    %2068 = vmatpush1.msra.mxu0 0.0
    %2069 = vmatprep.subr.mxu0 0.0
    %2070 = vmatpush1.msra.mxu0 0.0
    %2071 = vmatprep.subr.mxu0 0.0
    %2072 = vmatpush1.msra.mxu0 0.0
    %2073 = vmatprep.subr.mxu0 0.0
    %2074 = vmatpush1.msra.mxu0 0.0
    %2075 = vmatprep.subr.mxu0 0.0
    %2076 = vmatpush1.msra.mxu0 0.0
    %2077 = vmatprep.subr.mxu0 0.0
    %2078 = vmatpush1.msra.mxu0 0.0
    %2079 = vmatprep.subr.mxu0 0.0
    %2080 = vmatpush1.msra.mxu0 0.0
    %2081 = vmatprep.subr.mxu0 0.0
    %2082 = vmatpush1.msra.mxu0 0.0
    %2083 = vmatprep.subr.mxu0 0.0
    %2084 = vmatpush1.msra.mxu0 0.0
    %2085 = vmatprep.subr.mxu0 0.0
    %2086 = vmatpush1.msra.mxu0 0.0
    %2087 = vmatprep.subr.mxu0 0.0
    %2088 = vmatpush1.msra.mxu0 0.0
    %2089 = vmatprep.subr.mxu0 0.0
    %2090 = vmatpush1.msra.mxu0 0.0
    %2091 = vmatprep.subr.mxu0 0.0
    %2092 = vmatpush1.msra.mxu0 0.0
    %2093 = vmatprep.subr.mxu0 0.0
    %2094 = vmatpush1.msra.mxu0 0.0
    %2095 = vmatprep.subr.mxu0 0.0
    %2096 = vmatpush1.msra.mxu0 0.0
    %2097 = vmatprep.subr.mxu0 0.0
    %2098 = vmatpush1.msra.mxu0 0.0
    %2099 = vmatprep.subr.mxu0 0.0
    %2100 = vmatpush1.msra.mxu0 0.0
    %2101 = vmatprep.subr.mxu0 0.0
    %2102 = vmatpush1.msra.mxu0 0.0
    %2103 = vmatprep.subr.mxu0 0.0
    %2104 = vmatpush1.msra.mxu0 0.0
    %2105 = vmatprep.subr.mxu0 0.0
    %2106 = vmatpush1.msra.mxu0 0.0
    %2107 = vmatprep.subr.mxu0 0.0
    %2108 = vmatpush1.msra.mxu0 0.0
    %2109 = vmatprep.subr.mxu0 0.0
    %2110 = vmatpush1.msra.mxu0 0.0
    %2111 = vmatprep.subr.mxu0 0.0
    %2112 = vmatpush1.msra.mxu0 0.0
    %2113 = vmatprep.subr.mxu0 0.0
    %2114 = vmatpush1.msra.mxu0 0.0
    %2115 = vmatprep.subr.mxu0 0.0
    %2116 = vmatpush1.msra.mxu0 0.0
    %2117 = vmatprep.subr.mxu0 0.0
    %2118 = vmatpush1.msra.mxu0 0.0
    %2119 = vmatprep.subr.mxu0 0.0
    %2120 = vmatpush1.msra.mxu0 0.0
    %2121 = vmatprep.mubr.f32.mxu0 0.0
    %v2122 = vand.u32 %v1901, 4294901760
    %v2123 = vsub.f32 %v1901, %v2122
    %2124 = vmatmul.mubr.f32.gmra.mrb[0].mxu0 %v2123
    %v2125 = vpop.f32.mrb[0].mxu0
    %v2126 = vadd.f32 %v2052, %v2125
    %v2127 = vpop.f32.mrb[0].mxu0
    %2128 = vdwg.mxu0
    %2129 = vmatprep.subr.mxu0 0.0
    %v2130 = vand.u32 %v1444, 4294901760
    %2131 = vmatpush1.msra.mxu0 %v2130
    %2132 = vmatprep.subr.mxu0 0.0
    %2133 = vmatpush1.msra.mxu0 0.0
    %2134 = vmatprep.subr.mxu0 0.0
    %2135 = vmatpush1.msra.mxu0 0.0
    %2136 = vmatprep.subr.mxu0 0.0
    %2137 = vmatpush1.msra.mxu0 0.0
    %2138 = vmatprep.subr.mxu0 0.0
    %2139 = vmatpush1.msra.mxu0 0.0
    %2140 = vmatprep.subr.mxu0 0.0
    %2141 = vmatpush1.msra.mxu0 0.0
    %2142 = vmatprep.subr.mxu0 0.0
    %2143 = vmatpush1.msra.mxu0 0.0
    %2144 = vmatprep.subr.mxu0 0.0
    %2145 = vmatpush1.msra.mxu0 0.0
    %2146 = vmatprep.subr.mxu0 0.0
    %2147 = vmatpush1.msra.mxu0 0.0
    %2148 = vmatprep.subr.mxu0 0.0
    %2149 = vmatpush1.msra.mxu0 0.0
    %2150 = vmatprep.subr.mxu0 0.0
    %2151 = vmatpush1.msra.mxu0 0.0
    %2152 = vmatprep.subr.mxu0 0.0
    %2153 = vmatpush1.msra.mxu0 0.0
    %2154 = vmatprep.subr.mxu0 0.0
    %2155 = vmatpush1.msra.mxu0 0.0
    %2156 = vmatprep.subr.mxu0 0.0
    %2157 = vmatpush1.msra.mxu0 0.0
    %2158 = vmatprep.subr.mxu0 0.0
    %2159 = vmatpush1.msra.mxu0 0.0
    %2160 = vmatprep.subr.mxu0 0.0
    %2161 = vmatpush1.msra.mxu0 0.0
    %2162 = vmatprep.subr.mxu0 0.0
    %2163 = vmatpush1.msra.mxu0 0.0
    %2164 = vmatprep.subr.mxu0 0.0
    %2165 = vmatpush1.msra.mxu0 0.0
    %2166 = vmatprep.subr.mxu0 0.0
    %2167 = vmatpush1.msra.mxu0 0.0
    %2168 = vmatprep.subr.mxu0 0.0
    %2169 = vmatpush1.msra.mxu0 0.0
    %2170 = vmatprep.subr.mxu0 0.0
    %2171 = vmatpush1.msra.mxu0 0.0
    %2172 = vmatprep.subr.mxu0 0.0
    %2173 = vmatpush1.msra.mxu0 0.0
    %2174 = vmatprep.subr.mxu0 0.0
    %2175 = vmatpush1.msra.mxu0 0.0
    %2176 = vmatprep.subr.mxu0 0.0
    %2177 = vmatpush1.msra.mxu0 0.0
    %2178 = vmatprep.subr.mxu0 0.0
    %2179 = vmatpush1.msra.mxu0 0.0
    %2180 = vmatprep.subr.mxu0 0.0
    %2181 = vmatpush1.msra.mxu0 0.0
    %2182 = vmatprep.subr.mxu0 0.0
    %2183 = vmatpush1.msra.mxu0 0.0
    %2184 = vmatprep.subr.mxu0 0.0
    %2185 = vmatpush1.msra.mxu0 0.0
    %2186 = vmatprep.subr.mxu0 0.0
    %2187 = vmatpush1.msra.mxu0 0.0
    %2188 = vmatprep.subr.mxu0 0.0
    %2189 = vmatpush1.msra.mxu0 0.0
    %2190 = vmatprep.subr.mxu0 0.0
    %2191 = vmatpush1.msra.mxu0 0.0
    %2192 = vmatprep.subr.mxu0 0.0
    %2193 = vmatpush1.msra.mxu0 0.0
    %2194 = vmatprep.mubr.f32.mxu0 0.0
    %v2195 = vand.u32 %v1901, 4294901760
    %v2196 = vsub.f32 %v1901, %v2195
    %v2197 = vand.u32 %v2196, 4294901760
    %2198 = vmatmul.mubr.f32.gmra.mrb[0].mxu0 %v2197
    %v2199 = vpop.f32.mrb[0].mxu0
    %v2200 = vadd.f32 %v2126, %v2199
    %v2201 = vpop.f32.mrb[0].mxu0
    %2202 = vdwg.mxu0
    %2203 = vmatprep.subr.mxu0 0.0
    %v2204 = vand.u32 %v1444, 4294901760
    %v2205 = vsub.f32 %v1444, %v2204
    %v2206 = vand.u32 %v2205, 4294901760
    %2207 = vmatpush1.msra.mxu0 %v2206
    %2208 = vmatprep.subr.mxu0 0.0
    %2209 = vmatpush1.msra.mxu0 0.0
    %2210 = vmatprep.subr.mxu0 0.0
    %2211 = vmatpush1.msra.mxu0 0.0
    %2212 = vmatprep.subr.mxu0 0.0
    %2213 = vmatpush1.msra.mxu0 0.0
    %2214 = vmatprep.subr.mxu0 0.0
    %2215 = vmatpush1.msra.mxu0 0.0
    %2216 = vmatprep.subr.mxu0 0.0
    %2217 = vmatpush1.msra.mxu0 0.0
    %2218 = vmatprep.subr.mxu0 0.0
    %2219 = vmatpush1.msra.mxu0 0.0
    %2220 = vmatprep.subr.mxu0 0.0
    %2221 = vmatpush1.msra.mxu0 0.0
    %2222 = vmatprep.subr.mxu0 0.0
    %2223 = vmatpush1.msra.mxu0 0.0
    %2224 = vmatprep.subr.mxu0 0.0
    %2225 = vmatpush1.msra.mxu0 0.0
    %2226 = vmatprep.subr.mxu0 0.0
    %2227 = vmatpush1.msra.mxu0 0.0
    %2228 = vmatprep.subr.mxu0 0.0
    %2229 = vmatpush1.msra.mxu0 0.0
    %2230 = vmatprep.subr.mxu0 0.0
    %2231 = vmatpush1.msra.mxu0 0.0
    %2232 = vmatprep.subr.mxu0 0.0
    %2233 = vmatpush1.msra.mxu0 0.0
    %2234 = vmatprep.subr.mxu0 0.0
    %2235 = vmatpush1.msra.mxu0 0.0
    %2236 = vmatprep.subr.mxu0 0.0
    %2237 = vmatpush1.msra.mxu0 0.0
    %2238 = vmatprep.subr.mxu0 0.0
    %2239 = vmatpush1.msra.mxu0 0.0
    %2240 = vmatprep.subr.mxu0 0.0
    %2241 = vmatpush1.msra.mxu0 0.0
    %2242 = vmatprep.subr.mxu0 0.0
    %2243 = vmatpush1.msra.mxu0 0.0
    %2244 = vmatprep.subr.mxu0 0.0
    %2245 = vmatpush1.msra.mxu0 0.0
    %2246 = vmatprep.subr.mxu0 0.0
    %2247 = vmatpush1.msra.mxu0 0.0
    %2248 = vmatprep.subr.mxu0 0.0
    %2249 = vmatpush1.msra.mxu0 0.0
    %2250 = vmatprep.subr.mxu0 0.0
    %2251 = vmatpush1.msra.mxu0 0.0
    %2252 = vmatprep.subr.mxu0 0.0
    %2253 = vmatpush1.msra.mxu0 0.0
    %2254 = vmatprep.subr.mxu0 0.0
    %2255 = vmatpush1.msra.mxu0 0.0
    %2256 = vmatprep.subr.mxu0 0.0
    %2257 = vmatpush1.msra.mxu0 0.0
    %2258 = vmatprep.subr.mxu0 0.0
    %2259 = vmatpush1.msra.mxu0 0.0
    %2260 = vmatprep.subr.mxu0 0.0
    %2261 = vmatpush1.msra.mxu0 0.0
    %2262 = vmatprep.subr.mxu0 0.0
    %2263 = vmatpush1.msra.mxu0 0.0
    %2264 = vmatprep.subr.mxu0 0.0
    %2265 = vmatpush1.msra.mxu0 0.0
    %2266 = vmatprep.subr.mxu0 0.0
    %2267 = vmatpush1.msra.mxu0 0.0
    %2268 = vmatprep.subr.mxu0 0.0
    %2269 = vmatpush1.msra.mxu0 0.0
    %2270 = vmatprep.mubr.f32.mxu0 0.0
    %v2271 = vand.u32 %v1901, 4294901760
    %2272 = vmatmul.mubr.f32.gmra.mrb[0].mxu0 %v2271
    %v2273 = vpop.f32.mrb[0].mxu0
    %v2274 = vadd.f32 %v2200, %v2273
    %v2275 = vpop.f32.mrb[0].mxu0
    %2276 = vdwg.mxu0
    %2277 = vmatprep.subr.mxu0 0.0
    %v2278 = vand.u32 %v1444, 4294901760
    %2279 = vmatpush1.msra.mxu0 %v2278
    %2280 = vmatprep.subr.mxu0 0.0
    %2281 = vmatpush1.msra.mxu0 0.0
    %2282 = vmatprep.subr.mxu0 0.0
    %2283 = vmatpush1.msra.mxu0 0.0
    %2284 = vmatprep.subr.mxu0 0.0
    %2285 = vmatpush1.msra.mxu0 0.0
    %2286 = vmatprep.subr.mxu0 0.0
    %2287 = vmatpush1.msra.mxu0 0.0
    %2288 = vmatprep.subr.mxu0 0.0
    %2289 = vmatpush1.msra.mxu0 0.0
    %2290 = vmatprep.subr.mxu0 0.0
    %2291 = vmatpush1.msra.mxu0 0.0
    %2292 = vmatprep.subr.mxu0 0.0
    %2293 = vmatpush1.msra.mxu0 0.0
    %2294 = vmatprep.subr.mxu0 0.0
    %2295 = vmatpush1.msra.mxu0 0.0
    %2296 = vmatprep.subr.mxu0 0.0
    %2297 = vmatpush1.msra.mxu0 0.0
    %2298 = vmatprep.subr.mxu0 0.0
    %2299 = vmatpush1.msra.mxu0 0.0
    %2300 = vmatprep.subr.mxu0 0.0
    %2301 = vmatpush1.msra.mxu0 0.0
    %2302 = vmatprep.subr.mxu0 0.0
    %2303 = vmatpush1.msra.mxu0 0.0
    %2304 = vmatprep.subr.mxu0 0.0
    %2305 = vmatpush1.msra.mxu0 0.0
    %2306 = vmatprep.subr.mxu0 0.0
    %2307 = vmatpush1.msra.mxu0 0.0
    %2308 = vmatprep.subr.mxu0 0.0
    %2309 = vmatpush1.msra.mxu0 0.0
    %2310 = vmatprep.subr.mxu0 0.0
    %2311 = vmatpush1.msra.mxu0 0.0
    %2312 = vmatprep.subr.mxu0 0.0
    %2313 = vmatpush1.msra.mxu0 0.0
    %2314 = vmatprep.subr.mxu0 0.0
    %2315 = vmatpush1.msra.mxu0 0.0
    %2316 = vmatprep.subr.mxu0 0.0
    %2317 = vmatpush1.msra.mxu0 0.0
    %2318 = vmatprep.subr.mxu0 0.0
    %2319 = vmatpush1.msra.mxu0 0.0
    %2320 = vmatprep.subr.mxu0 0.0
    %2321 = vmatpush1.msra.mxu0 0.0
    %2322 = vmatprep.subr.mxu0 0.0
    %2323 = vmatpush1.msra.mxu0 0.0
    %2324 = vmatprep.subr.mxu0 0.0
    %2325 = vmatpush1.msra.mxu0 0.0
    %2326 = vmatprep.subr.mxu0 0.0
    %2327 = vmatpush1.msra.mxu0 0.0
    %2328 = vmatprep.subr.mxu0 0.0
    %2329 = vmatpush1.msra.mxu0 0.0
    %2330 = vmatprep.subr.mxu0 0.0
    %2331 = vmatpush1.msra.mxu0 0.0
    %2332 = vmatprep.subr.mxu0 0.0
    %2333 = vmatpush1.msra.mxu0 0.0
    %2334 = vmatprep.subr.mxu0 0.0
    %2335 = vmatpush1.msra.mxu0 0.0
    %2336 = vmatprep.subr.mxu0 0.0
    %2337 = vmatpush1.msra.mxu0 0.0
    %2338 = vmatprep.subr.mxu0 0.0
    %2339 = vmatpush1.msra.mxu0 0.0
    %2340 = vmatprep.subr.mxu0 0.0
    %2341 = vmatpush1.msra.mxu0 0.0
    %2342 = vmatprep.mubr.f32.mxu0 0.0
    %v2343 = vand.u32 %v1901, 4294901760
    %2344 = vmatmul.mubr.f32.gmra.mrb[0].mxu0 %v2343
    %v2345 = vpop.f32.mrb[0].mxu0
    %v2346 = vadd.f32 %v2274, %v2345
    %v2347 = vpop.f32.mrb[0].mxu0
    %2348 = vdwg.mxu0
    %s2349 = scalar_lea.vmem [#allocation5], 16
    %v2350 = vld [vmem:[%s2349] sm:$0xff]
    %v2352 = vsel %vm83, %v2350, 0
    %2354 = vmatprep.subr.mxu0 0.0
    %v2355 = vand.u32 %v1441, 4294901760
    %2356 = vmatpush1.msra.mxu0 %v2355
    %2357 = vmatprep.subr.mxu0 0.0
    %2358 = vmatpush1.msra.mxu0 0.0
    %2359 = vmatprep.subr.mxu0 0.0
    %2360 = vmatpush1.msra.mxu0 0.0
    %2361 = vmatprep.subr.mxu0 0.0
    %2362 = vmatpush1.msra.mxu0 0.0
    %2363 = vmatprep.subr.mxu0 0.0
    %2364 = vmatpush1.msra.mxu0 0.0
    %2365 = vmatprep.subr.mxu0 0.0
    %2366 = vmatpush1.msra.mxu0 0.0
    %2367 = vmatprep.subr.mxu0 0.0
    %2368 = vmatpush1.msra.mxu0 0.0
    %2369 = vmatprep.subr.mxu0 0.0
    %2370 = vmatpush1.msra.mxu0 0.0
    %2371 = vmatprep.subr.mxu0 0.0
    %2372 = vmatpush1.msra.mxu0 0.0
    %2373 = vmatprep.subr.mxu0 0.0
    %2374 = vmatpush1.msra.mxu0 0.0
    %2375 = vmatprep.subr.mxu0 0.0
    %2376 = vmatpush1.msra.mxu0 0.0
    %2377 = vmatprep.subr.mxu0 0.0
    %2378 = vmatpush1.msra.mxu0 0.0
    %2379 = vmatprep.subr.mxu0 0.0
    %2380 = vmatpush1.msra.mxu0 0.0
    %2381 = vmatprep.subr.mxu0 0.0
    %2382 = vmatpush1.msra.mxu0 0.0
    %2383 = vmatprep.subr.mxu0 0.0
    %2384 = vmatpush1.msra.mxu0 0.0
    %2385 = vmatprep.subr.mxu0 0.0
    %2386 = vmatpush1.msra.mxu0 0.0
    %2387 = vmatprep.subr.mxu0 0.0
    %2388 = vmatpush1.msra.mxu0 0.0
    %2389 = vmatprep.subr.mxu0 0.0
    %2390 = vmatpush1.msra.mxu0 0.0
    %2391 = vmatprep.subr.mxu0 0.0
    %2392 = vmatpush1.msra.mxu0 0.0
    %2393 = vmatprep.subr.mxu0 0.0
    %2394 = vmatpush1.msra.mxu0 0.0
    %2395 = vmatprep.subr.mxu0 0.0
    %2396 = vmatpush1.msra.mxu0 0.0
    %2397 = vmatprep.subr.mxu0 0.0
    %2398 = vmatpush1.msra.mxu0 0.0
    %2399 = vmatprep.subr.mxu0 0.0
    %2400 = vmatpush1.msra.mxu0 0.0
    %2401 = vmatprep.subr.mxu0 0.0
    %2402 = vmatpush1.msra.mxu0 0.0
    %2403 = vmatprep.subr.mxu0 0.0
    %2404 = vmatpush1.msra.mxu0 0.0
    %2405 = vmatprep.subr.mxu0 0.0
    %2406 = vmatpush1.msra.mxu0 0.0
    %2407 = vmatprep.subr.mxu0 0.0
    %2408 = vmatpush1.msra.mxu0 0.0
    %2409 = vmatprep.subr.mxu0 0.0
    %2410 = vmatpush1.msra.mxu0 0.0
    %2411 = vmatprep.subr.mxu0 0.0
    %2412 = vmatpush1.msra.mxu0 0.0
    %2413 = vmatprep.subr.mxu0 0.0
    %2414 = vmatpush1.msra.mxu0 0.0
    %2415 = vmatprep.subr.mxu0 0.0
    %2416 = vmatpush1.msra.mxu0 0.0
    %2417 = vmatprep.subr.mxu0 0.0
    %2418 = vmatpush1.msra.mxu0 0.0
    %2419 = vmatprep.mubr.f32.mxu0 0.0
    %v2420 = vand.u32 %v2352, 4294901760
    %v2421 = vsub.f32 %v2352, %v2420
    %v2422 = vand.u32 %v2421, 4294901760
    %v2423 = vsub.f32 %v2421, %v2422
    %v2424 = vand.u32 %v2423, 4294901760
    %2425 = vmatmul.mubr.f32.gmra.mrb[0].mxu0 %v2424
    %v2426 = vpop.f32.mrb[0].mxu0
    %v2427 = vadd.f32 0.0, %v2426
    %v2428 = vpop.f32.mrb[0].mxu0
    %2429 = vdwg.mxu0
    %2430 = vmatprep.subr.mxu0 0.0
    %v2431 = vand.u32 %v1441, 4294901760
    %v2432 = vsub.f32 %v1441, %v2431
    %v2433 = vand.u32 %v2432, 4294901760
    %v2434 = vsub.f32 %v2432, %v2433
    %v2435 = vand.u32 %v2434, 4294901760
    %2436 = vmatpush1.msra.mxu0 %v2435
    %2437 = vmatprep.subr.mxu0 0.0
    %2438 = vmatpush1.msra.mxu0 0.0
    %2439 = vmatprep.subr.mxu0 0.0
    %2440 = vmatpush1.msra.mxu0 0.0
    %2441 = vmatprep.subr.mxu0 0.0
    %2442 = vmatpush1.msra.mxu0 0.0
    %2443 = vmatprep.subr.mxu0 0.0
    %2444 = vmatpush1.msra.mxu0 0.0
    %2445 = vmatprep.subr.mxu0 0.0
    %2446 = vmatpush1.msra.mxu0 0.0
    %2447 = vmatprep.subr.mxu0 0.0
    %2448 = vmatpush1.msra.mxu0 0.0
    %2449 = vmatprep.subr.mxu0 0.0
    %2450 = vmatpush1.msra.mxu0 0.0
    %2451 = vmatprep.subr.mxu0 0.0
    %2452 = vmatpush1.msra.mxu0 0.0
    %2453 = vmatprep.subr.mxu0 0.0
    %2454 = vmatpush1.msra.mxu0 0.0
    %2455 = vmatprep.subr.mxu0 0.0
    %2456 = vmatpush1.msra.mxu0 0.0
    %2457 = vmatprep.subr.mxu0 0.0
    %2458 = vmatpush1.msra.mxu0 0.0
    %2459 = vmatprep.subr.mxu0 0.0
    %2460 = vmatpush1.msra.mxu0 0.0
    %2461 = vmatprep.subr.mxu0 0.0
    %2462 = vmatpush1.msra.mxu0 0.0
    %2463 = vmatprep.subr.mxu0 0.0
    %2464 = vmatpush1.msra.mxu0 0.0
    %2465 = vmatprep.subr.mxu0 0.0
    %2466 = vmatpush1.msra.mxu0 0.0
    %2467 = vmatprep.subr.mxu0 0.0
    %2468 = vmatpush1.msra.mxu0 0.0
    %2469 = vmatprep.subr.mxu0 0.0
    %2470 = vmatpush1.msra.mxu0 0.0
    %2471 = vmatprep.subr.mxu0 0.0
    %2472 = vmatpush1.msra.mxu0 0.0
    %2473 = vmatprep.subr.mxu0 0.0
    %2474 = vmatpush1.msra.mxu0 0.0
    %2475 = vmatprep.subr.mxu0 0.0
    %2476 = vmatpush1.msra.mxu0 0.0
    %2477 = vmatprep.subr.mxu0 0.0
    %2478 = vmatpush1.msra.mxu0 0.0
    %2479 = vmatprep.subr.mxu0 0.0
    %2480 = vmatpush1.msra.mxu0 0.0
    %2481 = vmatprep.subr.mxu0 0.0
    %2482 = vmatpush1.msra.mxu0 0.0
    %2483 = vmatprep.subr.mxu0 0.0
    %2484 = vmatpush1.msra.mxu0 0.0
    %2485 = vmatprep.subr.mxu0 0.0
    %2486 = vmatpush1.msra.mxu0 0.0
    %2487 = vmatprep.subr.mxu0 0.0
    %2488 = vmatpush1.msra.mxu0 0.0
    %2489 = vmatprep.subr.mxu0 0.0
    %2490 = vmatpush1.msra.mxu0 0.0
    %2491 = vmatprep.subr.mxu0 0.0
    %2492 = vmatpush1.msra.mxu0 0.0
    %2493 = vmatprep.subr.mxu0 0.0
    %2494 = vmatpush1.msra.mxu0 0.0
    %2495 = vmatprep.subr.mxu0 0.0
    %2496 = vmatpush1.msra.mxu0 0.0
    %2497 = vmatprep.subr.mxu0 0.0
    %2498 = vmatpush1.msra.mxu0 0.0
    %2499 = vmatprep.mubr.f32.mxu0 0.0
    %v2500 = vand.u32 %v2352, 4294901760
    %2501 = vmatmul.mubr.f32.gmra.mrb[0].mxu0 %v2500
    %v2502 = vpop.f32.mrb[0].mxu0
    %v2503 = vadd.f32 %v2427, %v2502
    %v2504 = vpop.f32.mrb[0].mxu0
    %2505 = vdwg.mxu0
    %2506 = vmatprep.subr.mxu0 0.0
    %v2507 = vand.u32 %v1441, 4294901760
    %v2508 = vsub.f32 %v1441, %v2507
    %2509 = vmatpush1.msra.mxu0 %v2508
    %2510 = vmatprep.subr.mxu0 0.0
    %2511 = vmatpush1.msra.mxu0 0.0
    %2512 = vmatprep.subr.mxu0 0.0
    %2513 = vmatpush1.msra.mxu0 0.0
    %2514 = vmatprep.subr.mxu0 0.0
    %2515 = vmatpush1.msra.mxu0 0.0
    %2516 = vmatprep.subr.mxu0 0.0
    %2517 = vmatpush1.msra.mxu0 0.0
    %2518 = vmatprep.subr.mxu0 0.0
    %2519 = vmatpush1.msra.mxu0 0.0
    %2520 = vmatprep.subr.mxu0 0.0
    %2521 = vmatpush1.msra.mxu0 0.0
    %2522 = vmatprep.subr.mxu0 0.0
    %2523 = vmatpush1.msra.mxu0 0.0
    %2524 = vmatprep.subr.mxu0 0.0
    %2525 = vmatpush1.msra.mxu0 0.0
    %2526 = vmatprep.subr.mxu0 0.0
    %2527 = vmatpush1.msra.mxu0 0.0
    %2528 = vmatprep.subr.mxu0 0.0
    %2529 = vmatpush1.msra.mxu0 0.0
    %2530 = vmatprep.subr.mxu0 0.0
    %2531 = vmatpush1.msra.mxu0 0.0
    %2532 = vmatprep.subr.mxu0 0.0
    %2533 = vmatpush1.msra.mxu0 0.0
    %2534 = vmatprep.subr.mxu0 0.0
    %2535 = vmatpush1.msra.mxu0 0.0
    %2536 = vmatprep.subr.mxu0 0.0
    %2537 = vmatpush1.msra.mxu0 0.0
    %2538 = vmatprep.subr.mxu0 0.0
    %2539 = vmatpush1.msra.mxu0 0.0
    %2540 = vmatprep.subr.mxu0 0.0
    %2541 = vmatpush1.msra.mxu0 0.0
    %2542 = vmatprep.subr.mxu0 0.0
    %2543 = vmatpush1.msra.mxu0 0.0
    %2544 = vmatprep.subr.mxu0 0.0
    %2545 = vmatpush1.msra.mxu0 0.0
    %2546 = vmatprep.subr.mxu0 0.0
    %2547 = vmatpush1.msra.mxu0 0.0
    %2548 = vmatprep.subr.mxu0 0.0
    %2549 = vmatpush1.msra.mxu0 0.0
    %2550 = vmatprep.subr.mxu0 0.0
    %2551 = vmatpush1.msra.mxu0 0.0
    %2552 = vmatprep.subr.mxu0 0.0
    %2553 = vmatpush1.msra.mxu0 0.0
    %2554 = vmatprep.subr.mxu0 0.0
    %2555 = vmatpush1.msra.mxu0 0.0
    %2556 = vmatprep.subr.mxu0 0.0
    %2557 = vmatpush1.msra.mxu0 0.0
    %2558 = vmatprep.subr.mxu0 0.0
    %2559 = vmatpush1.msra.mxu0 0.0
    %2560 = vmatprep.subr.mxu0 0.0
    %2561 = vmatpush1.msra.mxu0 0.0
    %2562 = vmatprep.subr.mxu0 0.0
    %2563 = vmatpush1.msra.mxu0 0.0
    %2564 = vmatprep.subr.mxu0 0.0
    %2565 = vmatpush1.msra.mxu0 0.0
    %2566 = vmatprep.subr.mxu0 0.0
    %2567 = vmatpush1.msra.mxu0 0.0
    %2568 = vmatprep.subr.mxu0 0.0
    %2569 = vmatpush1.msra.mxu0 0.0
    %2570 = vmatprep.subr.mxu0 0.0
    %2571 = vmatpush1.msra.mxu0 0.0
    %2572 = vmatprep.mubr.f32.mxu0 0.0
    %v2573 = vand.u32 %v2352, 4294901760
    %v2574 = vsub.f32 %v2352, %v2573
    %2575 = vmatmul.mubr.f32.gmra.mrb[0].mxu0 %v2574
    %v2576 = vpop.f32.mrb[0].mxu0
    %v2577 = vadd.f32 %v2503, %v2576
    %v2578 = vpop.f32.mrb[0].mxu0
    %2579 = vdwg.mxu0
    %2580 = vmatprep.subr.mxu0 0.0
    %v2581 = vand.u32 %v1441, 4294901760
    %2582 = vmatpush1.msra.mxu0 %v2581
    %2583 = vmatprep.subr.mxu0 0.0
    %2584 = vmatpush1.msra.mxu0 0.0
    %2585 = vmatprep.subr.mxu0 0.0
    %2586 = vmatpush1.msra.mxu0 0.0
    %2587 = vmatprep.subr.mxu0 0.0
    %2588 = vmatpush1.msra.mxu0 0.0
    %2589 = vmatprep.subr.mxu0 0.0
    %2590 = vmatpush1.msra.mxu0 0.0
    %2591 = vmatprep.subr.mxu0 0.0
    %2592 = vmatpush1.msra.mxu0 0.0
    %2593 = vmatprep.subr.mxu0 0.0
    %2594 = vmatpush1.msra.mxu0 0.0
    %2595 = vmatprep.subr.mxu0 0.0
    %2596 = vmatpush1.msra.mxu0 0.0
    %2597 = vmatprep.subr.mxu0 0.0
    %2598 = vmatpush1.msra.mxu0 0.0
    %2599 = vmatprep.subr.mxu0 0.0
    %2600 = vmatpush1.msra.mxu0 0.0
    %2601 = vmatprep.subr.mxu0 0.0
    %2602 = vmatpush1.msra.mxu0 0.0
    %2603 = vmatprep.subr.mxu0 0.0
    %2604 = vmatpush1.msra.mxu0 0.0
    %2605 = vmatprep.subr.mxu0 0.0
    %2606 = vmatpush1.msra.mxu0 0.0
    %2607 = vmatprep.subr.mxu0 0.0
    %2608 = vmatpush1.msra.mxu0 0.0
    %2609 = vmatprep.subr.mxu0 0.0
    %2610 = vmatpush1.msra.mxu0 0.0
    %2611 = vmatprep.subr.mxu0 0.0
    %2612 = vmatpush1.msra.mxu0 0.0
    %2613 = vmatprep.subr.mxu0 0.0
    %2614 = vmatpush1.msra.mxu0 0.0
    %2615 = vmatprep.subr.mxu0 0.0
    %2616 = vmatpush1.msra.mxu0 0.0
    %2617 = vmatprep.subr.mxu0 0.0
    %2618 = vmatpush1.msra.mxu0 0.0
    %2619 = vmatprep.subr.mxu0 0.0
    %2620 = vmatpush1.msra.mxu0 0.0
    %2621 = vmatprep.subr.mxu0 0.0
    %2622 = vmatpush1.msra.mxu0 0.0
    %2623 = vmatprep.subr.mxu0 0.0
    %2624 = vmatpush1.msra.mxu0 0.0
    %2625 = vmatprep.subr.mxu0 0.0
    %2626 = vmatpush1.msra.mxu0 0.0
    %2627 = vmatprep.subr.mxu0 0.0
    %2628 = vmatpush1.msra.mxu0 0.0
    %2629 = vmatprep.subr.mxu0 0.0
    %2630 = vmatpush1.msra.mxu0 0.0
    %2631 = vmatprep.subr.mxu0 0.0
    %2632 = vmatpush1.msra.mxu0 0.0
    %2633 = vmatprep.subr.mxu0 0.0
    %2634 = vmatpush1.msra.mxu0 0.0
    %2635 = vmatprep.subr.mxu0 0.0
    %2636 = vmatpush1.msra.mxu0 0.0
    %2637 = vmatprep.subr.mxu0 0.0
    %2638 = vmatpush1.msra.mxu0 0.0
    %2639 = vmatprep.subr.mxu0 0.0
    %2640 = vmatpush1.msra.mxu0 0.0
    %2641 = vmatprep.subr.mxu0 0.0
    %2642 = vmatpush1.msra.mxu0 0.0
    %2643 = vmatprep.subr.mxu0 0.0
    %2644 = vmatpush1.msra.mxu0 0.0
    %2645 = vmatprep.mubr.f32.mxu0 0.0
    %v2646 = vand.u32 %v2352, 4294901760
    %v2647 = vsub.f32 %v2352, %v2646
    %v2648 = vand.u32 %v2647, 4294901760
    %2649 = vmatmul.mubr.f32.gmra.mrb[0].mxu0 %v2648
    %v2650 = vpop.f32.mrb[0].mxu0
    %v2651 = vadd.f32 %v2577, %v2650
    %v2652 = vpop.f32.mrb[0].mxu0
    %2653 = vdwg.mxu0
    %2654 = vmatprep.subr.mxu0 0.0
    %v2655 = vand.u32 %v1441, 4294901760
    %v2656 = vsub.f32 %v1441, %v2655
    %v2657 = vand.u32 %v2656, 4294901760
    %2658 = vmatpush1.msra.mxu0 %v2657
    %2659 = vmatprep.subr.mxu0 0.0
    %2660 = vmatpush1.msra.mxu0 0.0
    %2661 = vmatprep.subr.mxu0 0.0
    %2662 = vmatpush1.msra.mxu0 0.0
    %2663 = vmatprep.subr.mxu0 0.0
    %2664 = vmatpush1.msra.mxu0 0.0
    %2665 = vmatprep.subr.mxu0 0.0
    %2666 = vmatpush1.msra.mxu0 0.0
    %2667 = vmatprep.subr.mxu0 0.0
    %2668 = vmatpush1.msra.mxu0 0.0
    %2669 = vmatprep.subr.mxu0 0.0
    %2670 = vmatpush1.msra.mxu0 0.0
    %2671 = vmatprep.subr.mxu0 0.0
    %2672 = vmatpush1.msra.mxu0 0.0
    %2673 = vmatprep.subr.mxu0 0.0
    %2674 = vmatpush1.msra.mxu0 0.0
    %2675 = vmatprep.subr.mxu0 0.0
    %2676 = vmatpush1.msra.mxu0 0.0
    %2677 = vmatprep.subr.mxu0 0.0
    %2678 = vmatpush1.msra.mxu0 0.0
    %2679 = vmatprep.subr.mxu0 0.0
    %2680 = vmatpush1.msra.mxu0 0.0
    %2681 = vmatprep.subr.mxu0 0.0
    %2682 = vmatpush1.msra.mxu0 0.0
    %2683 = vmatprep.subr.mxu0 0.0
    %2684 = vmatpush1.msra.mxu0 0.0
    %2685 = vmatprep.subr.mxu0 0.0
    %2686 = vmatpush1.msra.mxu0 0.0
    %2687 = vmatprep.subr.mxu0 0.0
    %2688 = vmatpush1.msra.mxu0 0.0
    %2689 = vmatprep.subr.mxu0 0.0
    %2690 = vmatpush1.msra.mxu0 0.0
    %2691 = vmatprep.subr.mxu0 0.0
    %2692 = vmatpush1.msra.mxu0 0.0
    %2693 = vmatprep.subr.mxu0 0.0
    %2694 = vmatpush1.msra.mxu0 0.0
    %2695 = vmatprep.subr.mxu0 0.0
    %2696 = vmatpush1.msra.mxu0 0.0
    %2697 = vmatprep.subr.mxu0 0.0
    %2698 = vmatpush1.msra.mxu0 0.0
    %2699 = vmatprep.subr.mxu0 0.0
    %2700 = vmatpush1.msra.mxu0 0.0
    %2701 = vmatprep.subr.mxu0 0.0
    %2702 = vmatpush1.msra.mxu0 0.0
    %2703 = vmatprep.subr.mxu0 0.0
    %2704 = vmatpush1.msra.mxu0 0.0
    %2705 = vmatprep.subr.mxu0 0.0
    %2706 = vmatpush1.msra.mxu0 0.0
    %2707 = vmatprep.subr.mxu0 0.0
    %2708 = vmatpush1.msra.mxu0 0.0
    %2709 = vmatprep.subr.mxu0 0.0
    %2710 = vmatpush1.msra.mxu0 0.0
    %2711 = vmatprep.subr.mxu0 0.0
    %2712 = vmatpush1.msra.mxu0 0.0
    %2713 = vmatprep.subr.mxu0 0.0
    %2714 = vmatpush1.msra.mxu0 0.0
    %2715 = vmatprep.subr.mxu0 0.0
    %2716 = vmatpush1.msra.mxu0 0.0
    %2717 = vmatprep.subr.mxu0 0.0
    %2718 = vmatpush1.msra.mxu0 0.0
    %2719 = vmatprep.subr.mxu0 0.0
    %2720 = vmatpush1.msra.mxu0 0.0
    %2721 = vmatprep.mubr.f32.mxu0 0.0
    %v2722 = vand.u32 %v2352, 4294901760
    %2723 = vmatmul.mubr.f32.gmra.mrb[0].mxu0 %v2722
    %v2724 = vpop.f32.mrb[0].mxu0
    %v2725 = vadd.f32 %v2651, %v2724
    %v2726 = vpop.f32.mrb[0].mxu0
    %2727 = vdwg.mxu0
    %2728 = vmatprep.subr.mxu0 0.0
    %v2729 = vand.u32 %v1441, 4294901760
    %2730 = vmatpush1.msra.mxu0 %v2729
    %2731 = vmatprep.subr.mxu0 0.0
    %2732 = vmatpush1.msra.mxu0 0.0
    %2733 = vmatprep.subr.mxu0 0.0
    %2734 = vmatpush1.msra.mxu0 0.0
    %2735 = vmatprep.subr.mxu0 0.0
    %2736 = vmatpush1.msra.mxu0 0.0
    %2737 = vmatprep.subr.mxu0 0.0
    %2738 = vmatpush1.msra.mxu0 0.0
    %2739 = vmatprep.subr.mxu0 0.0
    %2740 = vmatpush1.msra.mxu0 0.0
    %2741 = vmatprep.subr.mxu0 0.0
    %2742 = vmatpush1.msra.mxu0 0.0
    %2743 = vmatprep.subr.mxu0 0.0
    %2744 = vmatpush1.msra.mxu0 0.0
    %2745 = vmatprep.subr.mxu0 0.0
    %2746 = vmatpush1.msra.mxu0 0.0
    %2747 = vmatprep.subr.mxu0 0.0
    %2748 = vmatpush1.msra.mxu0 0.0
    %2749 = vmatprep.subr.mxu0 0.0
    %2750 = vmatpush1.msra.mxu0 0.0
    %2751 = vmatprep.subr.mxu0 0.0
    %2752 = vmatpush1.msra.mxu0 0.0
    %2753 = vmatprep.subr.mxu0 0.0
    %2754 = vmatpush1.msra.mxu0 0.0
    %2755 = vmatprep.subr.mxu0 0.0
    %2756 = vmatpush1.msra.mxu0 0.0
    %2757 = vmatprep.subr.mxu0 0.0
    %2758 = vmatpush1.msra.mxu0 0.0
    %2759 = vmatprep.subr.mxu0 0.0
    %2760 = vmatpush1.msra.mxu0 0.0
    %2761 = vmatprep.subr.mxu0 0.0
    %2762 = vmatpush1.msra.mxu0 0.0
    %2763 = vmatprep.subr.mxu0 0.0
    %2764 = vmatpush1.msra.mxu0 0.0
    %2765 = vmatprep.subr.mxu0 0.0
    %2766 = vmatpush1.msra.mxu0 0.0
    %2767 = vmatprep.subr.mxu0 0.0
    %2768 = vmatpush1.msra.mxu0 0.0
    %2769 = vmatprep.subr.mxu0 0.0
    %2770 = vmatpush1.msra.mxu0 0.0
    %2771 = vmatprep.subr.mxu0 0.0
    %2772 = vmatpush1.msra.mxu0 0.0
    %2773 = vmatprep.subr.mxu0 0.0
    %2774 = vmatpush1.msra.mxu0 0.0
    %2775 = vmatprep.subr.mxu0 0.0
    %2776 = vmatpush1.msra.mxu0 0.0
    %2777 = vmatprep.subr.mxu0 0.0
    %2778 = vmatpush1.msra.mxu0 0.0
    %2779 = vmatprep.subr.mxu0 0.0
    %2780 = vmatpush1.msra.mxu0 0.0
    %2781 = vmatprep.subr.mxu0 0.0
    %2782 = vmatpush1.msra.mxu0 0.0
    %2783 = vmatprep.subr.mxu0 0.0
    %2784 = vmatpush1.msra.mxu0 0.0
    %2785 = vmatprep.subr.mxu0 0.0
    %2786 = vmatpush1.msra.mxu0 0.0
    %2787 = vmatprep.subr.mxu0 0.0
    %2788 = vmatpush1.msra.mxu0 0.0
    %2789 = vmatprep.subr.mxu0 0.0
    %2790 = vmatpush1.msra.mxu0 0.0
    %2791 = vmatprep.subr.mxu0 0.0
    %2792 = vmatpush1.msra.mxu0 0.0
    %2793 = vmatprep.mubr.f32.mxu0 0.0
    %v2794 = vand.u32 %v2352, 4294901760
    %2795 = vmatmul.mubr.f32.gmra.mrb[0].mxu0 %v2794
    %v2796 = vpop.f32.mrb[0].mxu0
    %v2797 = vadd.f32 %v2725, %v2796
    %v2798 = vpop.f32.mrb[0].mxu0
    %2799 = vdwg.mxu0
    %v2800 = vadd.f32 %v2346, %v2797
    %v2801 = vld [vmem:[%s4] sm:$0xff]
    %2803 = vset.pattern.permute.xlu0 0
    %2804 = vperm.xlu0 %2803, %v2801
    %v2805 = vpop.permute.xlu0 %2804
    %v2807 = vadd.f32 %v2800, %v2805
    %v2808 = vld [vmem:[%s5] sm:$0xff]
    %v2809 = vld [vmem:[%s6] sm:$0xff]
    %2811 = vset.pattern.permute.xlu0 0
    %2812 = vperm.xlu0 %2811, %v2809
    %v2813 = vpop.permute.xlu0 %2812
    %v2816 = vsel %vm83, %v2808, 0
    %2818 = vmatprep.subr.mxu0 0.0
    %v2819 = vand.u32 %v67, 4294901760
    %2820 = vmatpush1.msra.mxu0 %v2819
    %2821 = vmatprep.subr.mxu0 0.0
    %2822 = vmatpush1.msra.mxu0 0.0
    %2823 = vmatprep.subr.mxu0 0.0
    %2824 = vmatpush1.msra.mxu0 0.0
    %2825 = vmatprep.subr.mxu0 0.0
    %2826 = vmatpush1.msra.mxu0 0.0
    %2827 = vmatprep.subr.mxu0 0.0
    %2828 = vmatpush1.msra.mxu0 0.0
    %2829 = vmatprep.subr.mxu0 0.0
    %2830 = vmatpush1.msra.mxu0 0.0
    %2831 = vmatprep.subr.mxu0 0.0
    %2832 = vmatpush1.msra.mxu0 0.0
    %2833 = vmatprep.subr.mxu0 0.0
    %2834 = vmatpush1.msra.mxu0 0.0
    %2835 = vmatprep.subr.mxu0 0.0
    %2836 = vmatpush1.msra.mxu0 0.0
    %2837 = vmatprep.subr.mxu0 0.0
    %2838 = vmatpush1.msra.mxu0 0.0
    %2839 = vmatprep.subr.mxu0 0.0
    %2840 = vmatpush1.msra.mxu0 0.0
    %2841 = vmatprep.subr.mxu0 0.0
    %2842 = vmatpush1.msra.mxu0 0.0
    %2843 = vmatprep.subr.mxu0 0.0
    %2844 = vmatpush1.msra.mxu0 0.0
    %2845 = vmatprep.subr.mxu0 0.0
    %2846 = vmatpush1.msra.mxu0 0.0
    %2847 = vmatprep.subr.mxu0 0.0
    %2848 = vmatpush1.msra.mxu0 0.0
    %2849 = vmatprep.subr.mxu0 0.0
    %2850 = vmatpush1.msra.mxu0 0.0
    %2851 = vmatprep.subr.mxu0 0.0
    %2852 = vmatpush1.msra.mxu0 0.0
    %2853 = vmatprep.subr.mxu0 0.0
    %2854 = vmatpush1.msra.mxu0 0.0
    %2855 = vmatprep.subr.mxu0 0.0
    %2856 = vmatpush1.msra.mxu0 0.0
    %2857 = vmatprep.subr.mxu0 0.0
    %2858 = vmatpush1.msra.mxu0 0.0
    %2859 = vmatprep.subr.mxu0 0.0
    %2860 = vmatpush1.msra.mxu0 0.0
    %2861 = vmatprep.subr.mxu0 0.0
    %2862 = vmatpush1.msra.mxu0 0.0
    %2863 = vmatprep.subr.mxu0 0.0
    %2864 = vmatpush1.msra.mxu0 0.0
    %2865 = vmatprep.subr.mxu0 0.0
    %2866 = vmatpush1.msra.mxu0 0.0
    %2867 = vmatprep.subr.mxu0 0.0
    %2868 = vmatpush1.msra.mxu0 0.0
    %2869 = vmatprep.subr.mxu0 0.0
    %2870 = vmatpush1.msra.mxu0 0.0
    %2871 = vmatprep.subr.mxu0 0.0
    %2872 = vmatpush1.msra.mxu0 0.0
    %2873 = vmatprep.subr.mxu0 0.0
    %2874 = vmatpush1.msra.mxu0 0.0
    %2875 = vmatprep.subr.mxu0 0.0
    %2876 = vmatpush1.msra.mxu0 0.0
    %2877 = vmatprep.subr.mxu0 0.0
    %2878 = vmatpush1.msra.mxu0 0.0
    %2879 = vmatprep.subr.mxu0 0.0
    %2880 = vmatpush1.msra.mxu0 0.0
    %2881 = vmatprep.subr.mxu0 0.0
    %2882 = vmatpush1.msra.mxu0 0.0
    %2883 = vmatprep.mubr.f32.mxu0 0.0
    %v2884 = vand.u32 %v2816, 4294901760
    %v2885 = vsub.f32 %v2816, %v2884
    %v2886 = vand.u32 %v2885, 4294901760
    %v2887 = vsub.f32 %v2885, %v2886
    %v2888 = vand.u32 %v2887, 4294901760
    %2889 = vmatmul.mubr.f32.gmra.mrb[0].mxu0 %v2888
    %v2890 = vpop.f32.mrb[0].mxu0
    %v2891 = vadd.f32 %v2813, %v2890
    %v2892 = vpop.f32.mrb[0].mxu0
    %2893 = vdwg.mxu0
    %2894 = vmatprep.subr.mxu0 0.0
    %v2895 = vand.u32 %v67, 4294901760
    %v2896 = vsub.f32 %v67, %v2895
    %v2897 = vand.u32 %v2896, 4294901760
    %v2898 = vsub.f32 %v2896, %v2897
    %v2899 = vand.u32 %v2898, 4294901760
    %2900 = vmatpush1.msra.mxu0 %v2899
    %2901 = vmatprep.subr.mxu0 0.0
    %2902 = vmatpush1.msra.mxu0 0.0
    %2903 = vmatprep.subr.mxu0 0.0
    %2904 = vmatpush1.msra.mxu0 0.0
    %2905 = vmatprep.subr.mxu0 0.0
    %2906 = vmatpush1.msra.mxu0 0.0
    %2907 = vmatprep.subr.mxu0 0.0
    %2908 = vmatpush1.msra.mxu0 0.0
    %2909 = vmatprep.subr.mxu0 0.0
    %2910 = vmatpush1.msra.mxu0 0.0
    %2911 = vmatprep.subr.mxu0 0.0
    %2912 = vmatpush1.msra.mxu0 0.0
    %2913 = vmatprep.subr.mxu0 0.0
    %2914 = vmatpush1.msra.mxu0 0.0
    %2915 = vmatprep.subr.mxu0 0.0
    %2916 = vmatpush1.msra.mxu0 0.0
    %2917 = vmatprep.subr.mxu0 0.0
    %2918 = vmatpush1.msra.mxu0 0.0
    %2919 = vmatprep.subr.mxu0 0.0
    %2920 = vmatpush1.msra.mxu0 0.0
    %2921 = vmatprep.subr.mxu0 0.0
    %2922 = vmatpush1.msra.mxu0 0.0
    %2923 = vmatprep.subr.mxu0 0.0
    %2924 = vmatpush1.msra.mxu0 0.0
    %2925 = vmatprep.subr.mxu0 0.0
    %2926 = vmatpush1.msra.mxu0 0.0
    %2927 = vmatprep.subr.mxu0 0.0
    %2928 = vmatpush1.msra.mxu0 0.0
    %2929 = vmatprep.subr.mxu0 0.0
    %2930 = vmatpush1.msra.mxu0 0.0
    %2931 = vmatprep.subr.mxu0 0.0
    %2932 = vmatpush1.msra.mxu0 0.0
    %2933 = vmatprep.subr.mxu0 0.0
    %2934 = vmatpush1.msra.mxu0 0.0
    %2935 = vmatprep.subr.mxu0 0.0
    %2936 = vmatpush1.msra.mxu0 0.0
    %2937 = vmatprep.subr.mxu0 0.0
    %2938 = vmatpush1.msra.mxu0 0.0
    %2939 = vmatprep.subr.mxu0 0.0
    %2940 = vmatpush1.msra.mxu0 0.0
    %2941 = vmatprep.subr.mxu0 0.0
    %2942 = vmatpush1.msra.mxu0 0.0
    %2943 = vmatprep.subr.mxu0 0.0
    %2944 = vmatpush1.msra.mxu0 0.0
    %2945 = vmatprep.subr.mxu0 0.0
    %2946 = vmatpush1.msra.mxu0 0.0
    %2947 = vmatprep.subr.mxu0 0.0
    %2948 = vmatpush1.msra.mxu0 0.0
    %2949 = vmatprep.subr.mxu0 0.0
    %2950 = vmatpush1.msra.mxu0 0.0
    %2951 = vmatprep.subr.mxu0 0.0
    %2952 = vmatpush1.msra.mxu0 0.0
    %2953 = vmatprep.subr.mxu0 0.0
    %2954 = vmatpush1.msra.mxu0 0.0
    %2955 = vmatprep.subr.mxu0 0.0
    %2956 = vmatpush1.msra.mxu0 0.0
    %2957 = vmatprep.subr.mxu0 0.0
    %2958 = vmatpush1.msra.mxu0 0.0
    %2959 = vmatprep.subr.mxu0 0.0
    %2960 = vmatpush1.msra.mxu0 0.0
    %2961 = vmatprep.subr.mxu0 0.0
    %2962 = vmatpush1.msra.mxu0 0.0
    %2963 = vmatprep.mubr.f32.mxu0 0.0
    %v2964 = vand.u32 %v2816, 4294901760
    %2965 = vmatmul.mubr.f32.gmra.mrb[0].mxu0 %v2964
    %v2966 = vpop.f32.mrb[0].mxu0
    %v2967 = vadd.f32 %v2891, %v2966
    %v2968 = vpop.f32.mrb[0].mxu0
    %2969 = vdwg.mxu0
    %2970 = vmatprep.subr.mxu0 0.0
    %v2971 = vand.u32 %v67, 4294901760
    %v2972 = vsub.f32 %v67, %v2971
    %2973 = vmatpush1.msra.mxu0 %v2972
    %2974 = vmatprep.subr.mxu0 0.0
    %2975 = vmatpush1.msra.mxu0 0.0
    %2976 = vmatprep.subr.mxu0 0.0
    %2977 = vmatpush1.msra.mxu0 0.0
    %2978 = vmatprep.subr.mxu0 0.0
    %2979 = vmatpush1.msra.mxu0 0.0
    %2980 = vmatprep.subr.mxu0 0.0
    %2981 = vmatpush1.msra.mxu0 0.0
    %2982 = vmatprep.subr.mxu0 0.0
    %2983 = vmatpush1.msra.mxu0 0.0
    %2984 = vmatprep.subr.mxu0 0.0
    %2985 = vmatpush1.msra.mxu0 0.0
    %2986 = vmatprep.subr.mxu0 0.0
    %2987 = vmatpush1.msra.mxu0 0.0
    %2988 = vmatprep.subr.mxu0 0.0
    %2989 = vmatpush1.msra.mxu0 0.0
    %2990 = vmatprep.subr.mxu0 0.0
    %2991 = vmatpush1.msra.mxu0 0.0
    %2992 = vmatprep.subr.mxu0 0.0
    %2993 = vmatpush1.msra.mxu0 0.0
    %2994 = vmatprep.subr.mxu0 0.0
    %2995 = vmatpush1.msra.mxu0 0.0
    %2996 = vmatprep.subr.mxu0 0.0
    %2997 = vmatpush1.msra.mxu0 0.0
    %2998 = vmatprep.subr.mxu0 0.0
    %2999 = vmatpush1.msra.mxu0 0.0
    %3000 = vmatprep.subr.mxu0 0.0
    %3001 = vmatpush1.msra.mxu0 0.0
    %3002 = vmatprep.subr.mxu0 0.0
    %3003 = vmatpush1.msra.mxu0 0.0
    %3004 = vmatprep.subr.mxu0 0.0
    %3005 = vmatpush1.msra.mxu0 0.0
    %3006 = vmatprep.subr.mxu0 0.0
    %3007 = vmatpush1.msra.mxu0 0.0
    %3008 = vmatprep.subr.mxu0 0.0
    %3009 = vmatpush1.msra.mxu0 0.0
    %3010 = vmatprep.subr.mxu0 0.0
    %3011 = vmatpush1.msra.mxu0 0.0
    %3012 = vmatprep.subr.mxu0 0.0
    %3013 = vmatpush1.msra.mxu0 0.0
    %3014 = vmatprep.subr.mxu0 0.0
    %3015 = vmatpush1.msra.mxu0 0.0
    %3016 = vmatprep.subr.mxu0 0.0
    %3017 = vmatpush1.msra.mxu0 0.0
    %3018 = vmatprep.subr.mxu0 0.0
    %3019 = vmatpush1.msra.mxu0 0.0
    %3020 = vmatprep.subr.mxu0 0.0
    %3021 = vmatpush1.msra.mxu0 0.0
    %3022 = vmatprep.subr.mxu0 0.0
    %3023 = vmatpush1.msra.mxu0 0.0
    %3024 = vmatprep.subr.mxu0 0.0
    %3025 = vmatpush1.msra.mxu0 0.0
    %3026 = vmatprep.subr.mxu0 0.0
    %3027 = vmatpush1.msra.mxu0 0.0
    %3028 = vmatprep.subr.mxu0 0.0
    %3029 = vmatpush1.msra.mxu0 0.0
    %3030 = vmatprep.subr.mxu0 0.0
    %3031 = vmatpush1.msra.mxu0 0.0
    %3032 = vmatprep.subr.mxu0 0.0
    %3033 = vmatpush1.msra.mxu0 0.0
    %3034 = vmatprep.subr.mxu0 0.0
    %3035 = vmatpush1.msra.mxu0 0.0
    %3036 = vmatprep.mubr.f32.mxu0 0.0
    %v3037 = vand.u32 %v2816, 4294901760
    %v3038 = vsub.f32 %v2816, %v3037
    %3039 = vmatmul.mubr.f32.gmra.mrb[0].mxu0 %v3038
    %v3040 = vpop.f32.mrb[0].mxu0
    %v3041 = vadd.f32 %v2967, %v3040
    %v3042 = vpop.f32.mrb[0].mxu0
    %3043 = vdwg.mxu0
    %3044 = vmatprep.subr.mxu0 0.0
    %v3045 = vand.u32 %v67, 4294901760
    %3046 = vmatpush1.msra.mxu0 %v3045
    %3047 = vmatprep.subr.mxu0 0.0
    %3048 = vmatpush1.msra.mxu0 0.0
    %3049 = vmatprep.subr.mxu0 0.0
    %3050 = vmatpush1.msra.mxu0 0.0
    %3051 = vmatprep.subr.mxu0 0.0
    %3052 = vmatpush1.msra.mxu0 0.0
    %3053 = vmatprep.subr.mxu0 0.0
    %3054 = vmatpush1.msra.mxu0 0.0
    %3055 = vmatprep.subr.mxu0 0.0
    %3056 = vmatpush1.msra.mxu0 0.0
    %3057 = vmatprep.subr.mxu0 0.0
    %3058 = vmatpush1.msra.mxu0 0.0
    %3059 = vmatprep.subr.mxu0 0.0
    %3060 = vmatpush1.msra.mxu0 0.0
    %3061 = vmatprep.subr.mxu0 0.0
    %3062 = vmatpush1.msra.mxu0 0.0
    %3063 = vmatprep.subr.mxu0 0.0
    %3064 = vmatpush1.msra.mxu0 0.0
    %3065 = vmatprep.subr.mxu0 0.0
    %3066 = vmatpush1.msra.mxu0 0.0
    %3067 = vmatprep.subr.mxu0 0.0
    %3068 = vmatpush1.msra.mxu0 0.0
    %3069 = vmatprep.subr.mxu0 0.0
    %3070 = vmatpush1.msra.mxu0 0.0
    %3071 = vmatprep.subr.mxu0 0.0
    %3072 = vmatpush1.msra.mxu0 0.0
    %3073 = vmatprep.subr.mxu0 0.0
    %3074 = vmatpush1.msra.mxu0 0.0
    %3075 = vmatprep.subr.mxu0 0.0
    %3076 = vmatpush1.msra.mxu0 0.0
    %3077 = vmatprep.subr.mxu0 0.0
    %3078 = vmatpush1.msra.mxu0 0.0
    %3079 = vmatprep.subr.mxu0 0.0
    %3080 = vmatpush1.msra.mxu0 0.0
    %3081 = vmatprep.subr.mxu0 0.0
    %3082 = vmatpush1.msra.mxu0 0.0
    %3083 = vmatprep.subr.mxu0 0.0
    %3084 = vmatpush1.msra.mxu0 0.0
    %3085 = vmatprep.subr.mxu0 0.0
    %3086 = vmatpush1.msra.mxu0 0.0
    %3087 = vmatprep.subr.mxu0 0.0
    %3088 = vmatpush1.msra.mxu0 0.0
    %3089 = vmatprep.subr.mxu0 0.0
    %3090 = vmatpush1.msra.mxu0 0.0
    %3091 = vmatprep.subr.mxu0 0.0
    %3092 = vmatpush1.msra.mxu0 0.0
    %3093 = vmatprep.subr.mxu0 0.0
    %3094 = vmatpush1.msra.mxu0 0.0
    %3095 = vmatprep.subr.mxu0 0.0
    %3096 = vmatpush1.msra.mxu0 0.0
    %3097 = vmatprep.subr.mxu0 0.0
    %3098 = vmatpush1.msra.mxu0 0.0
    %3099 = vmatprep.subr.mxu0 0.0
    %3100 = vmatpush1.msra.mxu0 0.0
    %3101 = vmatprep.subr.mxu0 0.0
    %3102 = vmatpush1.msra.mxu0 0.0
    %3103 = vmatprep.subr.mxu0 0.0
    %3104 = vmatpush1.msra.mxu0 0.0
    %3105 = vmatprep.subr.mxu0 0.0
    %3106 = vmatpush1.msra.mxu0 0.0
    %3107 = vmatprep.subr.mxu0 0.0
    %3108 = vmatpush1.msra.mxu0 0.0
    %3109 = vmatprep.mubr.f32.mxu0 0.0
    %v3110 = vand.u32 %v2816, 4294901760
    %v3111 = vsub.f32 %v2816, %v3110
    %v3112 = vand.u32 %v3111, 4294901760
    %3113 = vmatmul.mubr.f32.gmra.mrb[0].mxu0 %v3112
    %v3114 = vpop.f32.mrb[0].mxu0
    %v3115 = vadd.f32 %v3041, %v3114
    %v3116 = vpop.f32.mrb[0].mxu0
    %3117 = vdwg.mxu0
    %3118 = vmatprep.subr.mxu0 0.0
    %v3119 = vand.u32 %v67, 4294901760
    %v3120 = vsub.f32 %v67, %v3119
    %v3121 = vand.u32 %v3120, 4294901760
    %3122 = vmatpush1.msra.mxu0 %v3121
    %3123 = vmatprep.subr.mxu0 0.0
    %3124 = vmatpush1.msra.mxu0 0.0
    %3125 = vmatprep.subr.mxu0 0.0
    %3126 = vmatpush1.msra.mxu0 0.0
    %3127 = vmatprep.subr.mxu0 0.0
    %3128 = vmatpush1.msra.mxu0 0.0
    %3129 = vmatprep.subr.mxu0 0.0
    %3130 = vmatpush1.msra.mxu0 0.0
    %3131 = vmatprep.subr.mxu0 0.0
    %3132 = vmatpush1.msra.mxu0 0.0
    %3133 = vmatprep.subr.mxu0 0.0
    %3134 = vmatpush1.msra.mxu0 0.0
    %3135 = vmatprep.subr.mxu0 0.0
    %3136 = vmatpush1.msra.mxu0 0.0
    %3137 = vmatprep.subr.mxu0 0.0
    %3138 = vmatpush1.msra.mxu0 0.0
    %3139 = vmatprep.subr.mxu0 0.0
    %3140 = vmatpush1.msra.mxu0 0.0
    %3141 = vmatprep.subr.mxu0 0.0
    %3142 = vmatpush1.msra.mxu0 0.0
    %3143 = vmatprep.subr.mxu0 0.0
    %3144 = vmatpush1.msra.mxu0 0.0
    %3145 = vmatprep.subr.mxu0 0.0
    %3146 = vmatpush1.msra.mxu0 0.0
    %3147 = vmatprep.subr.mxu0 0.0
    %3148 = vmatpush1.msra.mxu0 0.0
    %3149 = vmatprep.subr.mxu0 0.0
    %3150 = vmatpush1.msra.mxu0 0.0
    %3151 = vmatprep.subr.mxu0 0.0
    %3152 = vmatpush1.msra.mxu0 0.0
    %3153 = vmatprep.subr.mxu0 0.0
    %3154 = vmatpush1.msra.mxu0 0.0
    %3155 = vmatprep.subr.mxu0 0.0
    %3156 = vmatpush1.msra.mxu0 0.0
    %3157 = vmatprep.subr.mxu0 0.0
    %3158 = vmatpush1.msra.mxu0 0.0
    %3159 = vmatprep.subr.mxu0 0.0
    %3160 = vmatpush1.msra.mxu0 0.0
    %3161 = vmatprep.subr.mxu0 0.0
    %3162 = vmatpush1.msra.mxu0 0.0
    %3163 = vmatprep.subr.mxu0 0.0
    %3164 = vmatpush1.msra.mxu0 0.0
    %3165 = vmatprep.subr.mxu0 0.0
    %3166 = vmatpush1.msra.mxu0 0.0
    %3167 = vmatprep.subr.mxu0 0.0
    %3168 = vmatpush1.msra.mxu0 0.0
    %3169 = vmatprep.subr.mxu0 0.0
    %3170 = vmatpush1.msra.mxu0 0.0
    %3171 = vmatprep.subr.mxu0 0.0
    %3172 = vmatpush1.msra.mxu0 0.0
    %3173 = vmatprep.subr.mxu0 0.0
    %3174 = vmatpush1.msra.mxu0 0.0
    %3175 = vmatprep.subr.mxu0 0.0
    %3176 = vmatpush1.msra.mxu0 0.0
    %3177 = vmatprep.subr.mxu0 0.0
    %3178 = vmatpush1.msra.mxu0 0.0
    %3179 = vmatprep.subr.mxu0 0.0
    %3180 = vmatpush1.msra.mxu0 0.0
    %3181 = vmatprep.subr.mxu0 0.0
    %3182 = vmatpush1.msra.mxu0 0.0
    %3183 = vmatprep.subr.mxu0 0.0
    %3184 = vmatpush1.msra.mxu0 0.0
    %3185 = vmatprep.mubr.f32.mxu0 0.0
    %v3186 = vand.u32 %v2816, 4294901760
    %3187 = vmatmul.mubr.f32.gmra.mrb[0].mxu0 %v3186
    %v3188 = vpop.f32.mrb[0].mxu0
    %v3189 = vadd.f32 %v3115, %v3188
    %v3190 = vpop.f32.mrb[0].mxu0
    %3191 = vdwg.mxu0
    %3192 = vmatprep.subr.mxu0 0.0
    %v3193 = vand.u32 %v67, 4294901760
    %3194 = vmatpush1.msra.mxu0 %v3193
    %3195 = vmatprep.subr.mxu0 0.0
    %3196 = vmatpush1.msra.mxu0 0.0
    %3197 = vmatprep.subr.mxu0 0.0
    %3198 = vmatpush1.msra.mxu0 0.0
    %3199 = vmatprep.subr.mxu0 0.0
    %3200 = vmatpush1.msra.mxu0 0.0
    %3201 = vmatprep.subr.mxu0 0.0
    %3202 = vmatpush1.msra.mxu0 0.0
    %3203 = vmatprep.subr.mxu0 0.0
    %3204 = vmatpush1.msra.mxu0 0.0
    %3205 = vmatprep.subr.mxu0 0.0
    %3206 = vmatpush1.msra.mxu0 0.0
    %3207 = vmatprep.subr.mxu0 0.0
    %3208 = vmatpush1.msra.mxu0 0.0
    %3209 = vmatprep.subr.mxu0 0.0
    %3210 = vmatpush1.msra.mxu0 0.0
    %3211 = vmatprep.subr.mxu0 0.0
    %3212 = vmatpush1.msra.mxu0 0.0
    %3213 = vmatprep.subr.mxu0 0.0
    %3214 = vmatpush1.msra.mxu0 0.0
    %3215 = vmatprep.subr.mxu0 0.0
    %3216 = vmatpush1.msra.mxu0 0.0
    %3217 = vmatprep.subr.mxu0 0.0
    %3218 = vmatpush1.msra.mxu0 0.0
    %3219 = vmatprep.subr.mxu0 0.0
    %3220 = vmatpush1.msra.mxu0 0.0
    %3221 = vmatprep.subr.mxu0 0.0
    %3222 = vmatpush1.msra.mxu0 0.0
    %3223 = vmatprep.subr.mxu0 0.0
    %3224 = vmatpush1.msra.mxu0 0.0
    %3225 = vmatprep.subr.mxu0 0.0
    %3226 = vmatpush1.msra.mxu0 0.0
    %3227 = vmatprep.subr.mxu0 0.0
    %3228 = vmatpush1.msra.mxu0 0.0
    %3229 = vmatprep.subr.mxu0 0.0
    %3230 = vmatpush1.msra.mxu0 0.0
    %3231 = vmatprep.subr.mxu0 0.0
    %3232 = vmatpush1.msra.mxu0 0.0
    %3233 = vmatprep.subr.mxu0 0.0
    %3234 = vmatpush1.msra.mxu0 0.0
    %3235 = vmatprep.subr.mxu0 0.0
    %3236 = vmatpush1.msra.mxu0 0.0
    %3237 = vmatprep.subr.mxu0 0.0
    %3238 = vmatpush1.msra.mxu0 0.0
    %3239 = vmatprep.subr.mxu0 0.0
    %3240 = vmatpush1.msra.mxu0 0.0
    %3241 = vmatprep.subr.mxu0 0.0
    %3242 = vmatpush1.msra.mxu0 0.0
    %3243 = vmatprep.subr.mxu0 0.0
    %3244 = vmatpush1.msra.mxu0 0.0
    %3245 = vmatprep.subr.mxu0 0.0
    %3246 = vmatpush1.msra.mxu0 0.0
    %3247 = vmatprep.subr.mxu0 0.0
    %3248 = vmatpush1.msra.mxu0 0.0
    %3249 = vmatprep.subr.mxu0 0.0
    %3250 = vmatpush1.msra.mxu0 0.0
    %3251 = vmatprep.subr.mxu0 0.0
    %3252 = vmatpush1.msra.mxu0 0.0
    %3253 = vmatprep.subr.mxu0 0.0
    %3254 = vmatpush1.msra.mxu0 0.0
    %3255 = vmatprep.subr.mxu0 0.0
    %3256 = vmatpush1.msra.mxu0 0.0
    %3257 = vmatprep.mubr.f32.mxu0 0.0
    %v3258 = vand.u32 %v2816, 4294901760
    %3259 = vmatmul.mubr.f32.gmra.mrb[0].mxu0 %v3258
    %v3260 = vpop.f32.mrb[0].mxu0
    %v3261 = vadd.f32 %v3189, %v3260
    %v3262 = vpop.f32.mrb[0].mxu0
    %3263 = vdwg.mxu0
    %v3264 = vadd.f32 %v2807, %v3261
    %3265 = vst [vmem:[#allocation7] sm:$0xff] %v3264
    // Predicated region
    $region38: #{tpu_custom_call.1} parent=1 // pred_check
      _
    $region39: #{tpu_custom_call.1} parent=1 // pred_check_branch
      %3267 = sbr.rel (0) target = $region41
    $region40: #{tpu_custom_call.1} parent=1 // pred_region
      %s3269 = ssub.s32 128, 128
      %3270 = vsyncadd [#allocation4], %s3269
      %s3272 = sshll.u32 [#allocation7], 4
      %s3273 = int_to_ptr.vmem [resolvable:$true] %s3272
      %3275 = dma.vmem_to_hbm [thread:$0]  %s3273, 128, %s7, [#allocation4]
    $region41: #{tpu_custom_call.1} parent=1 // pred_fallthru
      _
    // Predicated region
    $region42: #{tpu_custom_call.1} parent=1 // pred_check
      _
    $region43: #{tpu_custom_call.1} parent=1 // pred_check_branch
      %3277 = sbr.rel (0) target = $region45
    $region44: #{tpu_custom_call.1} parent=1 // pred_region
      %3278 = dma.done [#allocation4], 128
    $region45: #{tpu_custom_call.1} parent=1 // pred_fallthru
      _
    %3279 = vsyncpa [#allocation3], 1
    %3280 = vsyncpa [#allocation6], 1
    %3281 = vsyncpa [#allocation4], 1

</llo_original>
